<compile_context>
chip_gen: v7x
topology: tpu7x:2x2x1
jax: 0.10.0
libtpu: 0.0.40
codegen_flags: <defaults>
</compile_context>

<pallas_src>
import numpy as np
import jax
import jax.numpy as jnp
from jax.experimental import pallas as pl
from jax.experimental.pallas import tpu as pltpu


def _round_up(x, m):
    return (x + m - 1) // m * m


def _layout(num_mod, in_dim, proj_dim, out_dim):
    """Static column/offset layout shared by the host-side packer and the kernel."""
    M, D, P, O = num_mod, in_dim, proj_dim, out_dim
    Q = P + 1
    MP = M * P
    KW = Q ** (M - 1)                     # width of kron(e_1 .. e_{M-1})
    K1 = _round_up(2 * M * D + 1, 8)      # [x | x_pair | 1 | 0-pad] operand width
    # stage-1 output segments (compact MP-wide chunks keep MXU column count low)
    OFF_H, OFF_Z = 0, MP
    OFF_T = 2 * MP                        # D chunks: t_j[m*P+p] = x_m @ Wbil_m[:, j, p]
    OFF_XP = (2 + D) * MP                 # D chunks: broadcast of x_pair_m[:, j]
    N1 = (2 + 2 * D) * MP
    # stage-2 output segments (128-aligned so k is built from aligned slices)
    S_G = _round_up(MP, 128)
    S_R = _round_up(KW, 128)
    N2 = S_G + (M - 1) * S_R
    # packed f32 bias vector
    OUT_PAD = _round_up(max(O, 128), 128)
    B_B2 = 0
    B_BPF = N2
    B_BSK = N2 + _round_up(O, 128)
    BX = B_BSK + OUT_PAD
    return dict(M=M, D=D, P=P, O=O, Q=Q, MP=MP, KW=KW, K1=K1,
                OFF_H=OFF_H, OFF_Z=OFF_Z, OFF_T=OFF_T, OFF_XP=OFF_XP, N1=N1,
                S_G=S_G, S_R=S_R, N2=N2,
                OUT_PAD=OUT_PAD, B_B2=B_B2, B_BPF=B_BPF, B_BSK=B_BSK, BX=BX)


def pack_tensor_fusion_params(params, num_mod, in_dim, proj_dim, out_dim):
    """One-time packing of TensorFusion weights into fused kernel operands.

    Keep this OUT of the per-call path (review: wrapper work must not dominate).
    """
    assert proj_dim == in_dim, "TensorFusion requires projected_dim == input_dim"
    L = _layout(num_mod, in_dim, proj_dim, out_dim)
    M, D, P, O, Q = L["M"], L["D"], L["P"], L["O"], L["Q"]
    MP, KW = L["MP"], L["KW"]

    wlin = np.asarray(params["wlin"], np.float32)               # (M, D, P)
    blin = np.asarray(params["blin"], np.float32).reshape(M, P)
    wbil = np.asarray(params["wbil3"], np.float32)              # (M, D, D, P)
    bbil = np.asarray(params["bbil"], np.float32).reshape(M, P)
    wlast = np.asarray(params["wlast"], np.float32)             # (M, P, P)
    blast = np.asarray(params["blast"], np.float32).reshape(M, P)
    wpf = np.asarray(params["wpf"], np.float32)                 # (Q**M, O)
    bpf = np.asarray(params["bpf"], np.float32).reshape(O)
    wsk = np.asarray(params["wsk"], np.float32)                 # (O + M*Q, O)
    bsk = np.asarray(params["bsk"], np.float32).reshape(O)

    # ---- stage 1: single matmul on [x | x_pair | 1] -> h_pre, z_init, t_j, xpe_j ----
    W1 = np.zeros((L["K1"], L["N1"]), np.float32)
    bias_row = 2 * M * D                                        # the "ones" operand column
    for m in range(M):
        W1[m * D:(m + 1) * D, L["OFF_H"] + m * P:L["OFF_H"] + (m + 1) * P] = wlin[m]
        for j in range(D):
            c = L["OFF_T"] + j * MP + m * P
            W1[m * D:(m + 1) * D, c:c + P] = wbil[m, :, j, :]
            W1[M * D + m * D + j,
               L["OFF_XP"] + j * MP + m * P:L["OFF_XP"] + j * MP + (m + 1) * P] = 1.0
    W1[bias_row, L["OFF_H"]:L["OFF_H"] + MP] = blin.reshape(-1)
    W1[bias_row, L["OFF_Z"]:L["OFF_Z"] + MP] = bbil.reshape(-1)

    # ---- stage 2: g plus selection-extended replicas used to build kron(e_1..e_{M-1}) ----
    W2 = np.zeros((MP, L["N2"]), np.float32)
    b2 = np.zeros(L["N2"], np.float32)
    for m in range(M):
        W2[m * P:(m + 1) * P, m * P:(m + 1) * P] = wlast[m]
    b2[:MP] = blast.reshape(-1)
    for m in range(1, M):
        off = L["S_G"] + (m - 1) * L["S_R"]
        pw = Q ** (M - 1 - m)
        for c in range(KW):
            d = (c // pw) % Q
            if d < P:                         # replica of g_m[:, d] (relu commutes)
                W2[m * P:(m + 1) * P, off + c] = wlast[m][:, d]
                b2[off + c] = blast[m, d]
            else:                             # "ones" lane of e_m: relu(0 + 1) = 1
                b2[off + c] = 1.0

    # ---- stage 3: Wpf reordered so kron(e_1..e_{M-1}) is the K axis (K = Q^(M-1)) ----
    Wpf_r = wpf.reshape(Q, KW, O).transpose(1, 0, 2).reshape(KW, Q * O)

    # ---- skip: [pf | g] @ Wsk, modality "ones" rows folded into the bias ----
    Wsk_c = np.zeros((O + MP, L["OUT_PAD"]), np.float32)
    Wsk_c[:O, :O] = wsk[:O]
    bsk_eff = np.zeros(L["OUT_PAD"], np.float32)
    bsk_eff[:O] = bsk
    for m in range(M):
        Wsk_c[O + m * P:O + (m + 1) * P, :O] = wsk[O + m * Q:O + m * Q + P]
        bsk_eff[:O] += wsk[O + m * Q + P]

    # ---- single packed f32 bias input ----
    bias_pack = np.zeros((1, L["BX"]), np.float32)
    bias_pack[0, L["B_B2"]:L["B_B2"] + L["N2"]] = b2
    bias_pack[0, L["B_BPF"]:L["B_BPF"] + O] = bpf
    bias_pack[0, L["B_BSK"]:L["B_BSK"] + L["OUT_PAD"]] = bsk_eff

    bf16 = jnp.bfloat16
    packed = dict(w1=jnp.asarray(W1, bf16), w2=jnp.asarray(W2, bf16),
                  wpf=jnp.asarray(Wpf_r, bf16), wsk=jnp.asarray(Wsk_c, bf16),
                  bias=jnp.asarray(bias_pack, jnp.float32))
    return packed, L


def _make_kernel(L):
    M, D, P, O = L["M"], L["D"], L["P"], L["O"]
    MP, KW = L["MP"], L["KW"]
    OFF_H, OFF_Z, OFF_T, OFF_XP = L["OFF_H"], L["OFF_Z"], L["OFF_T"], L["OFF_XP"]
    S_G, S_R, N2 = L["S_G"], L["S_R"], L["N2"]
    B_B2, B_BPF, B_BSK = L["B_B2"], L["B_BPF"], L["B_BSK"]
    OUT_PAD = L["OUT_PAD"]
    bf16, f32 = jnp.bfloat16, jnp.float32

    def mm(a, w_ref):
        # bf16 operands, f32 accumulation on the MXU.
        return jnp.dot(a, w_ref[...], preferred_element_type=f32)

    def kernel(xx_ref, w1_ref, w2_ref, wpf_ref, wsk_ref, bias_ref, out_ref):
        # ---- stage 1: h_pre / z_init / t_j / x_pair broadcasts from ONE matmul ----
        s1 = mm(xx_ref[...], w1_ref)                              # (bB, N1) f32
        h = jnp.maximum(s1[:, OFF_H:OFF_H + MP], 0.0)             # relu(x @ Wlin + blin)
        z = s1[:, OFF_Z:OFF_Z + MP]                               # = bbil
        for j in range(D):                                        # static unroll: D VPU fmas
            z = z + (s1[:, OFF_XP + j * MP:OFF_XP + (j + 1) * MP]
                     * s1[:, OFF_T + j * MP:OFF_T + (j + 1) * MP])
        # TODO(synk): nn.Dropout layers are treated as identity (eval-mode semantics).
        gin = (jax.nn.sigmoid(z) * h).astype(bf16)

        # ---- stage 2: g and the replicated e_m factors (selection folded into W2) ----
        s2 = jnp.maximum(mm(gin, w2_ref) + bias_ref[:, B_B2:B_B2 + N2], 0.0)
        g = s2[:, 0:MP]                                           # all modalities' g
        k = s2[:, S_G:S_G + KW]                                   # e_1 replicated
        for m in range(2, M):                                     # k = kron(e_1..e_{M-1})
            off = S_G + (m - 1) * S_R
            k = k * s2[:, off:off + KW]

        # ---- stage 3: K=Q^(M-1) MXU matmul, then Q fmas for modality 0 ----
        a = mm(k.astype(bf16), wpf_ref)                           # (bB, Q*O)
        pf = a[:, P * O:(P + 1) * O] + bias_ref[:, B_BPF:B_BPF + O]   # "ones" lane of e_0
        for i0 in range(P):
            pf = pf + g[:, i0:i0 + 1] * a[:, i0 * O:(i0 + 1) * O]
        pf = jnp.maximum(pf, 0.0)

        # ---- skip: relu([pf | g] @ Wsk + bsk_eff), single fused matmul ----
        cat = jnp.concatenate([pf, g], axis=-1).astype(bf16)      # (bB, O + M*P)
        s = mm(cat, wsk_ref) + bias_ref[:, B_BSK:B_BSK + OUT_PAD]
        out_ref[...] = jnp.maximum(s, 0.0)                        # lane-dense store

    return kernel


def tensor_fusion_forward(x_stacked, packed, *, pair_idx, L, block_b=None):
    """x_stacked: (M, B, D) f32, modalities in sorted order.
    pair_idx[m]: index of the modality paired with m in the bilinear gate."""
    M, D, O = L["M"], L["D"], L["O"]
    Mx, B, Dx = x_stacked.shape
    assert Mx == M and Dx == D

    # Per-call prep only (weights pre-packed): [x | x_pair | 1 | 0-pad] shipped as bf16.
    x_flat = jnp.transpose(x_stacked, (1, 0, 2)).reshape(B, M * D)
    xp_flat = jnp.transpose(x_stacked[jnp.asarray(pair_idx)], (1, 0, 2)).reshape(B, M * D)
    pieces = [x_flat, xp_flat, jnp.ones((B, 1), x_flat.dtype)]
    pad_w = L["K1"] - 2 * M * D - 1
    if pad_w > 0:
        pieces.append(jnp.zeros((B, pad_w), x_flat.dtype))
    xx = jnp.concatenate(pieces, axis=-1).astype(jnp.bfloat16)

    # block_b: 256-row tiles when B is large (v5e/v6e, fewer serial steps); keep >= 2
    # parallel steps for B <= 256 so v7x's two TensorCores both get work.
    if block_b is None:
        if B > 256 and B % 256 == 0:
            block_b = 256
        elif B % 128 == 0:
            block_b = 128
        else:
            block_b = B
    assert B % block_b == 0

    grid = (B // block_b,)

    def full2d(a):
        return pl.BlockSpec(a.shape, lambda i: (0, 0))

    kernel = _make_kernel(L)
    out = pl.pallas_call(
        kernel,
        out_shape=jax.ShapeDtypeStruct((B, L["OUT_PAD"]), jnp.float32),
        grid=grid,
        in_specs=[pl.BlockSpec((block_b, L["K1"]), lambda i: (i, 0)),
                  full2d(packed["w1"]), full2d(packed["w2"]),
                  full2d(packed["wpf"]), full2d(packed["wsk"]),
                  full2d(packed["bias"])],
        out_specs=pl.BlockSpec((block_b, L["OUT_PAD"]), lambda i: (i, 0)),
        compiler_params=pltpu.CompilerParams(dimension_semantics=("parallel",)),
    )(xx, packed["w1"], packed["w2"], packed["wpf"], packed["wsk"], packed["bias"])
    return out[:, :O]


if __name__ == "__main__":
    # modalities sorted; deterministic cyclic pairing (stand-in for random.randint pairs)
    modalities = sorted(["clinical", "genomic", "imaging"])
    M = len(modalities)
    B = 256
    D = 8          # input_dim
    P = D          # projected_dim == input_dim (required by the torch module's shapes)
    O = 16         # output_dim
    Q = P + 1
    pair_idx = tuple((i + 1) % M for i in range(M))

    key = jax.random.PRNGKey(0)
    ks = jax.random.split(key, 12)
    xs = jax.random.normal(ks[0], (M, B, D), jnp.float32)

    wlin = 0.2 * jax.random.normal(ks[1], (M, D, P), jnp.float32)
    blin = 0.1 * jax.random.normal(ks[2], (M, 1, P), jnp.float32)
    # wbil3[m, i, j, p] corresponds to torch Bilinear weight W[p, i, j]
    wbil3 = 0.2 * jax.random.normal(ks[3], (M, D, D, P), jnp.float32)
    bbil = 0.1 * jax.random.normal(ks[4], (M, 1, P), jnp.float32)
    wlast = 0.2 * jax.random.normal(ks[5], (M, P, P), jnp.float32)
    blast = 0.1 * jax.random.normal(ks[6], (M, 1, P), jnp.float32)
    wpf = 0.05 * jax.random.normal(ks[7], (Q ** M, O), jnp.float32)
    bpf = 0.1 * jax.random.normal(ks[8], (1, O), jnp.float32)
    wsk = 0.1 * jax.random.normal(ks[9], (O + Q * M, O), jnp.float32)
    bsk = 0.1 * jax.random.normal(ks[10], (1, O), jnp.float32)

    params = dict(wlin=wlin, blin=blin, wbil3=wbil3, bbil=bbil,
                  wlast=wlast, blast=blast, wpf=wpf, bpf=bpf, wsk=wsk, bsk=bsk)

    # one-time packing, out of the hot path
    packed, L = pack_tensor_fusion_params(params, M, D, P, O)
    fwd = jax.jit(lambda x, p: tensor_fusion_forward(x, p, pair_idx=pair_idx, L=L))
    out = jax.block_until_ready(fwd(xs, packed))

    # pure-JAX f32 reference (eval mode: dropout = identity)
    def reference():
        gs = []
        for m in range(M):
            x1, x2 = xs[m], xs[pair_idx[m]]
            h = jax.nn.relu(x1 @ wlin[m] + blin[m])
            z = jnp.einsum("bi,bj,ijp->bp", x1, x2, wbil3[m]) + bbil[m]
            g = jax.nn.relu((jax.nn.sigmoid(z) * h) @ wlast[m] + blast[m])
            gs.append(g)
        es = [jnp.concatenate([g, jnp.ones((B, 1), jnp.float32)], axis=1) for g in gs]
        fused = (es[0][:, :, None] * es[1][:, None, :]).reshape(B, -1)
        for m in range(2, M):
            fused = (fused[:, :, None] * es[m][:, None, :]).reshape(B, -1)
        pf = jax.nn.relu(fused @ wpf + bpf)
        cat = jnp.concatenate([pf] + es, axis=1)
        return jax.nn.relu(cat @ wsk + bsk)

    ref = jax.block_until_ready(reference())
    assert out.shape == (B, O)
    err = float(jnp.max(jnp.abs(out - ref)))
    # bf16 matmul operands / bf16-shipped activations vs f32 reference -> small slack
    assert jnp.allclose(out, ref, rtol=5e-2, atol=5e-2), f"max abs err = {err}"
    print("KERNEL_OK")
</pallas_src>

<mosaic_0001>
module attributes {stable_mosaic.version = 11 : i64} {
  func.func @kernel(%arg0: i32, %arg1: memref<128x56xbf16, #tpu.memory_space<vmem>>, %arg2: memref<56x432xbf16, #tpu.memory_space<vmem>>, %arg3: memref<24x384xbf16, #tpu.memory_space<vmem>>, %arg4: memref<81x144xbf16, #tpu.memory_space<vmem>>, %arg5: memref<40x128xbf16, #tpu.memory_space<vmem>>, %arg6: memref<1x640xf32, #tpu.memory_space<vmem>>, %arg7: memref<128x128xf32, #tpu.memory_space<vmem>>) attributes {dimension_semantics = [#tpu.dimension_semantics<parallel>], iteration_bounds = array<i64: 2>, scalar_prefetch = 0 : i64, scratch_operands = 0 : i64, tpu.core_type = #tpu.core_type<tc>, window_params = [{transform_indices = @transform_0, window_bounds = array<i64: 128, 56>}, {pipeline_mode = #tpu.pipeline_mode<synchronous>, transform_indices = @transform_1, window_bounds = array<i64: 56, 432>}, {pipeline_mode = #tpu.pipeline_mode<synchronous>, transform_indices = @transform_2, window_bounds = array<i64: 24, 384>}, {pipeline_mode = #tpu.pipeline_mode<synchronous>, transform_indices = @transform_3, window_bounds = array<i64: 81, 144>}, {pipeline_mode = #tpu.pipeline_mode<synchronous>, transform_indices = @transform_4, window_bounds = array<i64: 40, 128>}, {pipeline_mode = #tpu.pipeline_mode<synchronous>, transform_indices = @transform_5, window_bounds = array<i64: 1, 640>}, {transform_indices = @transform_6, window_bounds = array<i64: 128, 128>}]} {
    %c0 = arith.constant 0 : index
    %c0_0 = arith.constant 0 : index
    %0 = vector.load %arg1[%c0, %c0_0] : memref<128x56xbf16, #tpu.memory_space<vmem>>, vector<128x56xbf16>
    %c0_1 = arith.constant 0 : index
    %c0_2 = arith.constant 0 : index
    %1 = vector.load %arg2[%c0_1, %c0_2] : memref<56x432xbf16, #tpu.memory_space<vmem>>, vector<56x432xbf16>
    %cst = arith.constant dense<0.000000e+00> : vector<128x432xf32>
    %2 = tpu.matmul %0, %1, %cst {dimension_numbers = #tpu.dot_dimension_numbers<[1], [0], [0], [1], [0, 0, 1, 1], [], []>} : vector<128x56xbf16>, vector<56x432xbf16>, vector<128x432xf32> -> vector<128x432xf32>
    %3 = vector.extract_strided_slice %2 {offsets = [0, 0], sizes = [128, 24], strides = [1, 1]} : vector<128x432xf32> to vector<128x24xf32>
    %cst_3 = arith.constant 0.000000e+00 : f32
    %4 = vector.broadcast %cst_3 : f32 to vector<128x24xf32>
    %5 = arith.maximumf %3, %4 : vector<128x24xf32>
    %6 = vector.extract_strided_slice %2 {offsets = [0, 24], sizes = [128, 24], strides = [1, 1]} : vector<128x432xf32> to vector<128x24xf32>
    %7 = vector.extract_strided_slice %2 {offsets = [0, 240], sizes = [128, 24], strides = [1, 1]} : vector<128x432xf32> to vector<128x24xf32>
    %8 = vector.extract_strided_slice %2 {offsets = [0, 48], sizes = [128, 24], strides = [1, 1]} : vector<128x432xf32> to vector<128x24xf32>
    %9 = arith.mulf %7, %8 : vector<128x24xf32>
    %10 = arith.addf %6, %9 : vector<128x24xf32>
    %11 = vector.extract_strided_slice %2 {offsets = [0, 264], sizes = [128, 24], strides = [1, 1]} : vector<128x432xf32> to vector<128x24xf32>
    %12 = vector.extract_strided_slice %2 {offsets = [0, 72], sizes = [128, 24], strides = [1, 1]} : vector<128x432xf32> to vector<128x24xf32>
    %13 = arith.mulf %11, %12 : vector<128x24xf32>
    %14 = arith.addf %10, %13 : vector<128x24xf32>
    %15 = vector.extract_strided_slice %2 {offsets = [0, 288], sizes = [128, 24], strides = [1, 1]} : vector<128x432xf32> to vector<128x24xf32>
    %16 = vector.extract_strided_slice %2 {offsets = [0, 96], sizes = [128, 24], strides = [1, 1]} : vector<128x432xf32> to vector<128x24xf32>
    %17 = arith.mulf %15, %16 : vector<128x24xf32>
    %18 = arith.addf %14, %17 : vector<128x24xf32>
    %19 = vector.extract_strided_slice %2 {offsets = [0, 312], sizes = [128, 24], strides = [1, 1]} : vector<128x432xf32> to vector<128x24xf32>
    %20 = vector.extract_strided_slice %2 {offsets = [0, 120], sizes = [128, 24], strides = [1, 1]} : vector<128x432xf32> to vector<128x24xf32>
    %21 = arith.mulf %19, %20 : vector<128x24xf32>
    %22 = arith.addf %18, %21 : vector<128x24xf32>
    %23 = vector.extract_strided_slice %2 {offsets = [0, 336], sizes = [128, 24], strides = [1, 1]} : vector<128x432xf32> to vector<128x24xf32>
    %24 = vector.extract_strided_slice %2 {offsets = [0, 144], sizes = [128, 24], strides = [1, 1]} : vector<128x432xf32> to vector<128x24xf32>
    %25 = arith.mulf %23, %24 : vector<128x24xf32>
    %26 = arith.addf %22, %25 : vector<128x24xf32>
    %27 = vector.extract_strided_slice %2 {offsets = [0, 360], sizes = [128, 24], strides = [1, 1]} : vector<128x432xf32> to vector<128x24xf32>
    %28 = vector.extract_strided_slice %2 {offsets = [0, 168], sizes = [128, 24], strides = [1, 1]} : vector<128x432xf32> to vector<128x24xf32>
    %29 = arith.mulf %27, %28 : vector<128x24xf32>
    %30 = arith.addf %26, %29 : vector<128x24xf32>
    %31 = vector.extract_strided_slice %2 {offsets = [0, 384], sizes = [128, 24], strides = [1, 1]} : vector<128x432xf32> to vector<128x24xf32>
    %32 = vector.extract_strided_slice %2 {offsets = [0, 192], sizes = [128, 24], strides = [1, 1]} : vector<128x432xf32> to vector<128x24xf32>
    %33 = arith.mulf %31, %32 : vector<128x24xf32>
    %34 = arith.addf %30, %33 : vector<128x24xf32>
    %35 = vector.extract_strided_slice %2 {offsets = [0, 408], sizes = [128, 24], strides = [1, 1]} : vector<128x432xf32> to vector<128x24xf32>
    %36 = vector.extract_strided_slice %2 {offsets = [0, 216], sizes = [128, 24], strides = [1, 1]} : vector<128x432xf32> to vector<128x24xf32>
    %37 = arith.mulf %35, %36 : vector<128x24xf32>
    %38 = arith.addf %34, %37 : vector<128x24xf32>
    %39 = arith.negf %38 : vector<128x24xf32>
    %40 = math.exp %39 : vector<128x24xf32>
    %cst_4 = arith.constant 1.000000e+00 : f32
    %41 = vector.broadcast %cst_4 : f32 to vector<128x24xf32>
    %42 = arith.addf %41, %40 : vector<128x24xf32>
    %43 = arith.divf %41, %42 : vector<128x24xf32>
    %44 = arith.mulf %43, %5 : vector<128x24xf32>
    %45 = arith.truncf %44 : vector<128x24xf32> to vector<128x24xbf16>
    %c0_5 = arith.constant 0 : index
    %c0_6 = arith.constant 0 : index
    %46 = vector.load %arg3[%c0_5, %c0_6] : memref<24x384xbf16, #tpu.memory_space<vmem>>, vector<24x384xbf16>
    %cst_7 = arith.constant dense<0.000000e+00> : vector<128x384xf32>
    %47 = tpu.matmul %45, %46, %cst_7 {dimension_numbers = #tpu.dot_dimension_numbers<[1], [0], [0], [1], [0, 0, 1, 1], [], []>} : vector<128x24xbf16>, vector<24x384xbf16>, vector<128x384xf32> -> vector<128x384xf32>
    %c0_8 = arith.constant 0 : index
    %c0_9 = arith.constant 0 : index
    %48 = vector.load %arg6[%c0_8, %c0_9] : memref<1x640xf32, #tpu.memory_space<vmem>>, vector<1x384xf32>
    %49 = vector.broadcast %48 : vector<1x384xf32> to vector<128x384xf32>
    %50 = arith.addf %47, %49 : vector<128x384xf32>
    %cst_10 = arith.constant 0.000000e+00 : f32
    %51 = vector.broadcast %cst_10 : f32 to vector<128x384xf32>
    %52 = arith.maximumf %50, %51 : vector<128x384xf32>
    %53 = vector.extract_strided_slice %52 {offsets = [0, 0], sizes = [128, 24], strides = [1, 1]} : vector<128x384xf32> to vector<128x24xf32>
    %54 = vector.extract_strided_slice %52 {offsets = [0, 128], sizes = [128, 81], strides = [1, 1]} : vector<128x384xf32> to vector<128x81xf32>
    %55 = vector.extract_strided_slice %52 {offsets = [0, 256], sizes = [128, 81], strides = [1, 1]} : vector<128x384xf32> to vector<128x81xf32>
    %56 = arith.mulf %54, %55 : vector<128x81xf32>
    %57 = arith.truncf %56 : vector<128x81xf32> to vector<128x81xbf16>
    %c0_11 = arith.constant 0 : index
    %c0_12 = arith.constant 0 : index
    %58 = vector.load %arg4[%c0_11, %c0_12] : memref<81x144xbf16, #tpu.memory_space<vmem>>, vector<81x144xbf16>
    %cst_13 = arith.constant dense<0.000000e+00> : vector<128x144xf32>
    %59 = tpu.matmul %57, %58, %cst_13 {dimension_numbers = #tpu.dot_dimension_numbers<[1], [0], [0], [1], [0, 0, 1, 1], [], []>} : vector<128x81xbf16>, vector<81x144xbf16>, vector<128x144xf32> -> vector<128x144xf32>
    %60 = vector.extract_strided_slice %59 {offsets = [0, 128], sizes = [128, 16], strides = [1, 1]} : vector<128x144xf32> to vector<128x16xf32>
    %c0_14 = arith.constant 0 : index
    %c384 = arith.constant 384 : index
    %61 = vector.load %arg6[%c0_14, %c384] : memref<1x640xf32, #tpu.memory_space<vmem>>, vector<1x16xf32>
    %62 = vector.broadcast %61 : vector<1x16xf32> to vector<128x16xf32>
    %63 = arith.addf %60, %62 : vector<128x16xf32>
    %64 = vector.extract_strided_slice %53 {offsets = [0, 0], sizes = [128, 1], strides = [1, 1]} : vector<128x24xf32> to vector<128x1xf32>
    %65 = vector.extract_strided_slice %59 {offsets = [0, 0], sizes = [128, 16], strides = [1, 1]} : vector<128x144xf32> to vector<128x16xf32>
    %66 = vector.broadcast %64 : vector<128x1xf32> to vector<128x16xf32>
    %67 = arith.mulf %66, %65 : vector<128x16xf32>
    %68 = arith.addf %63, %67 : vector<128x16xf32>
    %69 = vector.extract_strided_slice %53 {offsets = [0, 1], sizes = [128, 1], strides = [1, 1]} : vector<128x24xf32> to vector<128x1xf32>
    %70 = vector.extract_strided_slice %59 {offsets = [0, 16], sizes = [128, 16], strides = [1, 1]} : vector<128x144xf32> to vector<128x16xf32>
    %71 = vector.broadcast %69 : vector<128x1xf32> to vector<128x16xf32>
    %72 = arith.mulf %71, %70 : vector<128x16xf32>
    %73 = arith.addf %68, %72 : vector<128x16xf32>
    %74 = vector.extract_strided_slice %53 {offsets = [0, 2], sizes = [128, 1], strides = [1, 1]} : vector<128x24xf32> to vector<128x1xf32>
    %75 = vector.extract_strided_slice %59 {offsets = [0, 32], sizes = [128, 16], strides = [1, 1]} : vector<128x144xf32> to vector<128x16xf32>
    %76 = vector.broadcast %74 : vector<128x1xf32> to vector<128x16xf32>
    %77 = arith.mulf %76, %75 : vector<128x16xf32>
    %78 = arith.addf %73, %77 : vector<128x16xf32>
    %79 = vector.extract_strided_slice %53 {offsets = [0, 3], sizes = [128, 1], strides = [1, 1]} : vector<128x24xf32> to vector<128x1xf32>
    %80 = vector.extract_strided_slice %59 {offsets = [0, 48], sizes = [128, 16], strides = [1, 1]} : vector<128x144xf32> to vector<128x16xf32>
    %81 = vector.broadcast %79 : vector<128x1xf32> to vector<128x16xf32>
    %82 = arith.mulf %81, %80 : vector<128x16xf32>
    %83 = arith.addf %78, %82 : vector<128x16xf32>
    %84 = vector.extract_strided_slice %53 {offsets = [0, 4], sizes = [128, 1], strides = [1, 1]} : vector<128x24xf32> to vector<128x1xf32>
    %85 = vector.extract_strided_slice %59 {offsets = [0, 64], sizes = [128, 16], strides = [1, 1]} : vector<128x144xf32> to vector<128x16xf32>
    %86 = vector.broadcast %84 : vector<128x1xf32> to vector<128x16xf32>
    %87 = arith.mulf %86, %85 : vector<128x16xf32>
    %88 = arith.addf %83, %87 : vector<128x16xf32>
    %89 = vector.extract_strided_slice %53 {offsets = [0, 5], sizes = [128, 1], strides = [1, 1]} : vector<128x24xf32> to vector<128x1xf32>
    %90 = vector.extract_strided_slice %59 {offsets = [0, 80], sizes = [128, 16], strides = [1, 1]} : vector<128x144xf32> to vector<128x16xf32>
    %91 = vector.broadcast %89 : vector<128x1xf32> to vector<128x16xf32>
    %92 = arith.mulf %91, %90 : vector<128x16xf32>
    %93 = arith.addf %88, %92 : vector<128x16xf32>
    %94 = vector.extract_strided_slice %53 {offsets = [0, 6], sizes = [128, 1], strides = [1, 1]} : vector<128x24xf32> to vector<128x1xf32>
    %95 = vector.extract_strided_slice %59 {offsets = [0, 96], sizes = [128, 16], strides = [1, 1]} : vector<128x144xf32> to vector<128x16xf32>
    %96 = vector.broadcast %94 : vector<128x1xf32> to vector<128x16xf32>
    %97 = arith.mulf %96, %95 : vector<128x16xf32>
    %98 = arith.addf %93, %97 : vector<128x16xf32>
    %99 = vector.extract_strided_slice %53 {offsets = [0, 7], sizes = [128, 1], strides = [1, 1]} : vector<128x24xf32> to vector<128x1xf32>
    %100 = vector.extract_strided_slice %59 {offsets = [0, 112], sizes = [128, 16], strides = [1, 1]} : vector<128x144xf32> to vector<128x16xf32>
    %101 = vector.broadcast %99 : vector<128x1xf32> to vector<128x16xf32>
    %102 = arith.mulf %101, %100 : vector<128x16xf32>
    %103 = arith.addf %98, %102 : vector<128x16xf32>
    %cst_15 = arith.constant 0.000000e+00 : f32
    %104 = vector.broadcast %cst_15 : f32 to vector<128x16xf32>
    %105 = arith.maximumf %103, %104 : vector<128x16xf32>
    %106 = tpu.concatenate %105, %53 in 1 : vector<128x16xf32>, vector<128x24xf32> -> vector<128x40xf32>
    %107 = arith.truncf %106 : vector<128x40xf32> to vector<128x40xbf16>
    %c0_16 = arith.constant 0 : index
    %c0_17 = arith.constant 0 : index
    %108 = vector.load %arg5[%c0_16, %c0_17] : memref<40x128xbf16, #tpu.memory_space<vmem>>, vector<40x128xbf16>
    %cst_18 = arith.constant dense<0.000000e+00> : vector<128x128xf32>
    %109 = tpu.matmul %107, %108, %cst_18 {dimension_numbers = #tpu.dot_dimension_numbers<[1], [0], [0], [1], [0, 0, 1, 1], [], []>} : vector<128x40xbf16>, vector<40x128xbf16>, vector<128x128xf32> -> vector<128x128xf32>
    %c0_19 = arith.constant 0 : index
    %c512 = arith.constant 512 : index
    %110 = vector.load %arg6[%c0_19, %c512] : memref<1x640xf32, #tpu.memory_space<vmem>>, vector<1x128xf32>
    %111 = vector.broadcast %110 : vector<1x128xf32> to vector<128x128xf32>
    %112 = arith.addf %109, %111 : vector<128x128xf32>
    %cst_20 = arith.constant 0.000000e+00 : f32
    %113 = vector.broadcast %cst_20 : f32 to vector<128x128xf32>
    %114 = arith.maximumf %112, %113 : vector<128x128xf32>
    %c0_21 = arith.constant 0 : index
    %c0_22 = arith.constant 0 : index
    %115 = vector.load %arg7[%c0_21, %c0_22] : memref<128x128xf32, #tpu.memory_space<vmem>>, vector<128x128xf32>
    tpu.vector_store %arg7[%c0_21, %c0_22], %114 {strides = array<i32>} : memref<128x128xf32, #tpu.memory_space<vmem>>, vector<128x128xf32>,
    return
  }
  func.func @transform_0(%arg0: i32) -> (i32, i32) {
    %c0_i32 = arith.constant 0 : i32
    %c0_i32_0 = arith.constant 0 : i32
    return %arg0, %c0_i32 : i32, i32
  }
  func.func @transform_1(%arg0: i32) -> (i32, i32) {
    %c0_i32 = arith.constant 0 : i32
    %c0_i32_0 = arith.constant 0 : i32
    %c0_i32_1 = arith.constant 0 : i32
    return %c0_i32, %c0_i32_0 : i32, i32
  }
  func.func @transform_2(%arg0: i32) -> (i32, i32) {
    %c0_i32 = arith.constant 0 : i32
    %c0_i32_0 = arith.constant 0 : i32
    %c0_i32_1 = arith.constant 0 : i32
    return %c0_i32, %c0_i32_0 : i32, i32
  }
  func.func @transform_3(%arg0: i32) -> (i32, i32) {
    %c0_i32 = arith.constant 0 : i32
    %c0_i32_0 = arith.constant 0 : i32
    %c0_i32_1 = arith.constant 0 : i32
    return %c0_i32, %c0_i32_0 : i32, i32
  }
  func.func @transform_4(%arg0: i32) -> (i32, i32) {
    %c0_i32 = arith.constant 0 : i32
    %c0_i32_0 = arith.constant 0 : i32
    %c0_i32_1 = arith.constant 0 : i32
    return %c0_i32, %c0_i32_0 : i32, i32
  }
  func.func @transform_5(%arg0: i32) -> (i32, i32) {
    %c0_i32 = arith.constant 0 : i32
    %c0_i32_0 = arith.constant 0 : i32
    %c0_i32_1 = arith.constant 0 : i32
    return %c0_i32, %c0_i32_0 : i32, i32
  }
  func.func @transform_6(%arg0: i32) -> (i32, i32) {
    %c0_i32 = arith.constant 0 : i32
    %c0_i32_0 = arith.constant 0 : i32
    return %arg0, %c0_i32 : i32, i32
  }
}

</mosaic_0001>

<llo_original>
// kernel: _lambda_.1
$region0: #{_lambda_.1}
  #allocation0 [shape = 'u32[]', space=smem, size = 0x4, offset = 0x4, fixed_abs, tag = 'smem constant byte address 0x4 - core index']
  #allocation1 [shape = 'u32[144,128]{1,0:T(1,128)}', space=vmem, size = 0x12000, scoped, tag = 'internal scratch']
  %s0 = inlined_call_operand.vmem [shape: bf16[256,56], index: 0, kind: input, shape index: {}]
  %s1 = inlined_call_operand.vmem [shape: bf16[56,432], index: 1, kind: input, shape index: {}]
  %s2 = inlined_call_operand.vmem [shape: bf16[24,384], index: 2, kind: input, shape index: {}]
  %s3 = inlined_call_operand.vmem [shape: bf16[81,144], index: 3, kind: input, shape index: {}]
  %s4 = inlined_call_operand.vmem [shape: bf16[40,128], index: 4, kind: input, shape index: {}]
  %s5 = inlined_call_operand.vmem [shape: f32[1,640], index: 5, kind: input, shape index: {}]
  %s6 = inlined_call_operand.vmem [shape: f32[256,128], index: 6, kind: output, shape index: {}]
  %s7 = sld [smem:[#allocation0]]
  $region57: #{_lambda_.1} parent=0
    _
  %s9 = ssub.s32 1, %s7
  %s10 = scalar_select 0, %s9, %s7
  loop: start=0, step=1, limit=4
  $region2: #{_lambda_.1} parent=0 // loop_pre_header
    _
  $region3: #{_lambda_.1} parent=0 // loop_header
    %s12 = sphi 0, %s16
    %p13 = scmp.ge.s32.totalorder %s12, 4
    %s22 = sphi 0, %s24
    %s25 = sphi 0, %s22
    %s26 = sphi 0, %s25
    %s42 = sphi 0, %s26
    %s46 = sphi 0, %s46
    %s48 = sphi 0, %s46
    %s49 = sphi 0, %s48
    %s63 = sphi 0, %s49
    %s67 = sphi 0, %s67
    %s69 = sphi 0, %s67
    %s70 = sphi 0, %s69
    %s84 = sphi 0, %s70
    %s88 = sphi 0, %s88
    %s90 = sphi 0, %s88
    %s91 = sphi 0, %s90
    %s105 = sphi 0, %s91
    %s109 = sphi 0, %s109
    %s111 = sphi 0, %s109
    %s112 = sphi 0, %s111
    %s126 = sphi 0, %s112
    %s130 = sphi 0, %s130
    %s132 = sphi 0, %s130
    %s133 = sphi 0, %s132
    %s147 = sphi 0, %s133
    %s153 = sphi 0, %s155
    %s156 = sphi 0, %s153
    %s157 = sphi 0, %s156
    %s173 = sphi 0, %s157
  $region4: #{_lambda_.1} parent=0 // loop_header_branch
    %15 = sbr.rel (%p13) target = $region8
  $region5: #{_lambda_.1} parent=0 // loop_body
    %s17 = ssub.s32 %s12, 1
    %s18 = ssub.s32 %s12, 2
    %s19 = sadd.s32 %s12, 1
    %s20 = ssub.s32 %s12, %s19
    %p21 = scmp.eq.s32.totalorder %s20, 0
    %s23 = sadd.s32 %s22, 1
    %s24 = scalar_select %p21, %s22, %s23
    %p27 = pneg %p21
    %p28 = scmp.eq.s32.totalorder %s12, 1
    %p29 = por %p27, %p28
    %p30 = scmp.ne.s32.totalorder %s22, %s25
    %p31 = scmp.eq.s32.totalorder %s12, 0
    %p32 = por %p30, %p31
    %p33 = scmp.ne.s32.totalorder %s22, %s25
    %p34 = scmp.eq.s32.totalorder %s17, 1
    %p35 = por %p33, %p34
    %p36 = scmp.ne.s32.totalorder %s25, %s26
    %p37 = scmp.eq.s32.totalorder %s17, 0
    %p38 = por %p36, %p37
    %p39 = scmp.ne.s32.totalorder %s25, %s26
    %p40 = scmp.eq.s32.totalorder %s18, 1
    %p41 = por %p39, %p40
    %p43 = scmp.ne.s32.totalorder %s26, %s42
    %p44 = scmp.eq.s32.totalorder %s18, 0
    %p45 = por %p43, %p44
    %s47 = sadd.s32 %s46, 1
    %p50 = scmp.eq.s32.totalorder %s12, 1
    %p51 = scmp.ne.s32.totalorder %s46, %s48
    %p52 = scmp.eq.s32.totalorder %s12, 0
    %p53 = por %p51, %p52
    %p54 = scmp.ne.s32.totalorder %s46, %s48
    %p55 = scmp.eq.s32.totalorder %s17, 1
    %p56 = por %p54, %p55
    %p57 = scmp.ne.s32.totalorder %s48, %s49
    %p58 = scmp.eq.s32.totalorder %s17, 0
    %p59 = por %p57, %p58
    %p60 = scmp.ne.s32.totalorder %s48, %s49
    %p61 = scmp.eq.s32.totalorder %s18, 1
    %p62 = por %p60, %p61
    %p64 = scmp.ne.s32.totalorder %s49, %s63
    %p65 = scmp.eq.s32.totalorder %s18, 0
    %p66 = por %p64, %p65
    %s68 = sadd.s32 %s67, 1
    %p71 = scmp.eq.s32.totalorder %s12, 1
    %p72 = scmp.ne.s32.totalorder %s67, %s69
    %p73 = scmp.eq.s32.totalorder %s12, 0
    %p74 = por %p72, %p73
    %p75 = scmp.ne.s32.totalorder %s67, %s69
    %p76 = scmp.eq.s32.totalorder %s17, 1
    %p77 = por %p75, %p76
    %p78 = scmp.ne.s32.totalorder %s69, %s70
    %p79 = scmp.eq.s32.totalorder %s17, 0
    %p80 = por %p78, %p79
    %p81 = scmp.ne.s32.totalorder %s69, %s70
    %p82 = scmp.eq.s32.totalorder %s18, 1
    %p83 = por %p81, %p82
    %p85 = scmp.ne.s32.totalorder %s70, %s84
    %p86 = scmp.eq.s32.totalorder %s18, 0
    %p87 = por %p85, %p86
    %s89 = sadd.s32 %s88, 1
    %p92 = scmp.eq.s32.totalorder %s12, 1
    %p93 = scmp.ne.s32.totalorder %s88, %s90
    %p94 = scmp.eq.s32.totalorder %s12, 0
    %p95 = por %p93, %p94
    %p96 = scmp.ne.s32.totalorder %s88, %s90
    %p97 = scmp.eq.s32.totalorder %s17, 1
    %p98 = por %p96, %p97
    %p99 = scmp.ne.s32.totalorder %s90, %s91
    %p100 = scmp.eq.s32.totalorder %s17, 0
    %p101 = por %p99, %p100
    %p102 = scmp.ne.s32.totalorder %s90, %s91
    %p103 = scmp.eq.s32.totalorder %s18, 1
    %p104 = por %p102, %p103
    %p106 = scmp.ne.s32.totalorder %s91, %s105
    %p107 = scmp.eq.s32.totalorder %s18, 0
    %p108 = por %p106, %p107
    %s110 = sadd.s32 %s109, 1
    %p113 = scmp.eq.s32.totalorder %s12, 1
    %p114 = scmp.ne.s32.totalorder %s109, %s111
    %p115 = scmp.eq.s32.totalorder %s12, 0
    %p116 = por %p114, %p115
    %p117 = scmp.ne.s32.totalorder %s109, %s111
    %p118 = scmp.eq.s32.totalorder %s17, 1
    %p119 = por %p117, %p118
    %p120 = scmp.ne.s32.totalorder %s111, %s112
    %p121 = scmp.eq.s32.totalorder %s17, 0
    %p122 = por %p120, %p121
    %p123 = scmp.ne.s32.totalorder %s111, %s112
    %p124 = scmp.eq.s32.totalorder %s18, 1
    %p125 = por %p123, %p124
    %p127 = scmp.ne.s32.totalorder %s112, %s126
    %p128 = scmp.eq.s32.totalorder %s18, 0
    %p129 = por %p127, %p128
    %s131 = sadd.s32 %s130, 1
    %p134 = scmp.eq.s32.totalorder %s12, 1
    %p135 = scmp.ne.s32.totalorder %s130, %s132
    %p136 = scmp.eq.s32.totalorder %s12, 0
    %p137 = por %p135, %p136
    %p138 = scmp.ne.s32.totalorder %s130, %s132
    %p139 = scmp.eq.s32.totalorder %s17, 1
    %p140 = por %p138, %p139
    %p141 = scmp.ne.s32.totalorder %s132, %s133
    %p142 = scmp.eq.s32.totalorder %s17, 0
    %p143 = por %p141, %p142
    %p144 = scmp.ne.s32.totalorder %s132, %s133
    %p145 = scmp.eq.s32.totalorder %s18, 1
    %p146 = por %p144, %p145
    %p148 = scmp.ne.s32.totalorder %s133, %s147
    %p149 = scmp.eq.s32.totalorder %s18, 0
    %p150 = por %p148, %p149
    %s151 = ssub.s32 %s12, %s19
    %p152 = scmp.eq.s32.totalorder %s151, 0
    %s154 = sadd.s32 %s153, 1
    %s155 = scalar_select %p152, %s153, %s154
    %p158 = pneg %p152
    %p159 = scmp.eq.s32.totalorder %s12, 1
    %p160 = por %p158, %p159
    %p161 = scmp.ne.s32.totalorder %s153, %s156
    %p162 = scmp.eq.s32.totalorder %s12, 0
    %p163 = por %p161, %p162
    %p164 = scmp.ne.s32.totalorder %s153, %s156
    %p165 = scmp.eq.s32.totalorder %s17, 1
    %p166 = por %p164, %p165
    %p167 = scmp.ne.s32.totalorder %s156, %s157
    %p168 = scmp.eq.s32.totalorder %s17, 0
    %p169 = por %p167, %p168
    %p170 = scmp.ne.s32.totalorder %s156, %s157
    %p171 = scmp.eq.s32.totalorder %s18, 1
    %p172 = por %p170, %p171
    %p174 = scmp.ne.s32.totalorder %s157, %s173
    %p175 = scmp.eq.s32.totalorder %s18, 0
    %p176 = por %p174, %p175
    %p177 = scmp.le.s32.totalorder 1, %s12
    %p178 = scmp.lt.s32.totalorder %s12, 3
    %p179 = pnand %p177, %p178
    %p180 = pneg %p179
    // Predicated region
    $region9: #{_lambda_.1} parent=5 // pred_check
      _
    $region10: #{_lambda_.1} parent=5 // pred_check_branch
      %182 = sbr.rel (%p179) target = $region12
    $region11: #{_lambda_.1} parent=5 // pred_region
      %s183 = ssub.s32 %s12, 1
      // Predicated region
      $region13: #{_lambda_.1} parent=11 // pred_check
        %p184 = pneg %p59
      $region14: #{_lambda_.1} parent=11 // pred_check_branch
        %186 = sbr.rel (%p184) target = $region16
      $region15: #{_lambda_.1} parent=11 // pred_region
        _
      $region16: #{_lambda_.1} parent=11 // pred_fallthru
        _
      // Predicated region
      $region17: #{_lambda_.1} parent=11 // pred_check
        %p187 = pneg %p80
      $region18: #{_lambda_.1} parent=11 // pred_check_branch
        %189 = sbr.rel (%p187) target = $region20
      $region19: #{_lambda_.1} parent=11 // pred_region
        _
      $region20: #{_lambda_.1} parent=11 // pred_fallthru
        _
      // Predicated region
      $region21: #{_lambda_.1} parent=11 // pred_check
        %p190 = pneg %p101
      $region22: #{_lambda_.1} parent=11 // pred_check_branch
        %192 = sbr.rel (%p190) target = $region24
      $region23: #{_lambda_.1} parent=11 // pred_region
        _
      $region24: #{_lambda_.1} parent=11 // pred_fallthru
        _
      // Predicated region
      $region25: #{_lambda_.1} parent=11 // pred_check
        %p193 = pneg %p122
      $region26: #{_lambda_.1} parent=11 // pred_check_branch
        %195 = sbr.rel (%p193) target = $region28
      $region27: #{_lambda_.1} parent=11 // pred_region
        _
      $region28: #{_lambda_.1} parent=11 // pred_fallthru
        _
      // Predicated region
      $region29: #{_lambda_.1} parent=11 // pred_check
        %p196 = pneg %p143
      $region30: #{_lambda_.1} parent=11 // pred_check_branch
        %198 = sbr.rel (%p196) target = $region32
      $region31: #{_lambda_.1} parent=11 // pred_region
        _
      $region32: #{_lambda_.1} parent=11 // pred_fallthru
        _
    $region12: #{_lambda_.1} parent=5 // pred_fallthru
      _
    %p199 = scmp.lt.s32.totalorder %s12, 2
    // Predicated region
    $region33: #{_lambda_.1} parent=5 // pred_check
      %p200 = pneg %p199
    $region34: #{_lambda_.1} parent=5 // pred_check_branch
      %202 = sbr.rel (%p200) target = $region36
    $region35: #{_lambda_.1} parent=5 // pred_region
      // Predicated region
      $region37: #{_lambda_.1} parent=35 // pred_check
        %p203 = pneg %p32
      $region38: #{_lambda_.1} parent=35 // pred_check_branch
        %205 = sbr.rel (%p203) target = $region40
      $region39: #{_lambda_.1} parent=35 // pred_region
        %s206 = smul.u32 16, %s12
        %p207 = scmp.lt.s32.totalorder %s206, 31
        %s208 = scalar_select %p207, %s206, 31
        %s209 = smul.addr %s208, 4
        %s210 = scalar_lea.vmem %s0, %s209
        %s211 = smul.u32 16, %s12
      $region40: #{_lambda_.1} parent=35 // pred_fallthru
        _
    $region36: #{_lambda_.1} parent=5 // pred_fallthru
      _
    %p212 = scmp.le.s32.totalorder 1, %s12
    %p213 = scmp.lt.s32.totalorder %s12, 3
    %p214 = pnand %p212, %p213
    %p215 = pneg %p214
    // Predicated region
    $region41: #{_lambda_.1} parent=5 // pred_check
      _
    $region42: #{_lambda_.1} parent=5 // pred_check_branch
      %217 = sbr.rel (%p214) target = $region44
    $region43: #{_lambda_.1} parent=5 // pred_region
      %s218 = ssub.s32 %s12, 1
      %s219 = smul.u32 16, %s17
      %p220 = scmp.lt.s32.totalorder %s219, 31
      %s221 = scalar_select %p220, %s219, 31
      %s222 = smul.addr %s221, 4
      %s223 = scalar_lea.vmem %s0, %s222
      %p224 = pneg %p38
      %p225 = pneg %p35
      %p226 = pneg %p59
      %p227 = pneg %p56
      %p228 = pneg %p80
      %p229 = pneg %p77
      %p230 = pneg %p101
      %p231 = pneg %p98
      %p232 = pneg %p122
      %p233 = pneg %p119
      %p234 = pneg %p143
      %p235 = pneg %p140
      %p236 = pneg %p169
      %p237 = pneg %p166
      %s238 = smul.u32 16, %s17
      %p239 = scmp.lt.s32.totalorder %s238, 31
      %s240 = scalar_select %p239, %s238, 31
      %s241 = smul.addr %s240, 8
      %s242 = scalar_lea.vmem %s6, %s241
      %s243 = smul.u32 16, %s17
      %p244 = scmp.lt.s32.totalorder %s243, 31
      %s245 = scalar_select %p244, %s243, 31
      %s246 = smul.addr %s245, 4
      %s247 = scalar_lea.vmem %s0, %s246
      %s248 = smul.u32 16, %s17
      %s249 = smul.u32 16, %s17
      %p250 = scmp.lt.s32.totalorder %s249, 31
      %s251 = scalar_select %p250, %s249, 31
      %s252 = smul.addr %s251, 8
      %s253 = scalar_lea.vmem %s6, %s252
      %s254 = smul.u32 16, %s17
      %v256 = vld [vmem:[%s247] sm:$0xf]
      %v257 = vld [vmem:[%s247 + $0x4] sm:$0xf]
      %v258 = vld [vmem:[%s247 + $0x8] sm:$0xf]
      %v259 = vld [vmem:[%s247 + $0xc] sm:$0xf]
      %v260 = vld [vmem:[%s247 + $0x10] sm:$0xf]
      %v261 = vld [vmem:[%s247 + $0x14] sm:$0xf]
      %v262 = vld [vmem:[%s247 + $0x18] sm:$0xf]
      %v263 = vld [vmem:[%s247 + $0x1c] sm:$0xf]
      %v264 = vld [vmem:[%s247 + $0x20] sm:$0xf]
      %v265 = vld [vmem:[%s247 + $0x24] sm:$0xf]
      %v266 = vld [vmem:[%s247 + $0x28] sm:$0xf]
      %v267 = vld [vmem:[%s247 + $0x2c] sm:$0xf]
      %v268 = vld [vmem:[%s247 + $0x30] sm:$0xf]
      %v269 = vld [vmem:[%s247 + $0x34] sm:$0xf]
      %v270 = vld [vmem:[%s247 + $0x38] sm:$0xf]
      %v271 = vld [vmem:[%s247 + $0x3c] sm:$0xf]
      %v272 = vld [vmem:[%s1] sm:$0xff]
      %v273 = vld [vmem:[%s1 + $0x8] sm:$0xff]
      %v274 = vld [vmem:[%s1 + $0x10] sm:$0xff]
      %v275 = vld [vmem:[%s1 + $0x18] sm:$0xff]
      %v276 = vld [vmem:[%s1 + $0x20] sm:$0xff]
      %v277 = vld [vmem:[%s1 + $0x28] sm:$0xff]
      %v278 = vld [vmem:[%s1 + $0x30] sm:$0xff]
      %v279 = vld [vmem:[%s1 + $0x38] sm:$0xff]
      %v280 = vld [vmem:[%s1 + $0x40] sm:$0xff]
      %v281 = vld [vmem:[%s1 + $0x48] sm:$0xff]
      %v282 = vld [vmem:[%s1 + $0x50] sm:$0xff]
      %v283 = vld [vmem:[%s1 + $0x58] sm:$0xff]
      %v284 = vld [vmem:[%s1 + $0x60] sm:$0xff]
      %v285 = vld [vmem:[%s1 + $0x68] sm:$0xff]
      %v302 = vunpack.c.l.b16 %v256
      %v303 = vunpack.c.l.b16 %v257
      %v304 = vunpack.c.l.b16 %v258
      %v305 = vunpack.c.l.b16 %v259
      %v306 = vunpack.c.l.b16 %v260
      %v307 = vunpack.c.l.b16 %v261
      %v308 = vunpack.c.l.b16 %v262
      %v309 = vunpack.c.l.b16 %v263
      %v310 = vunpack.c.l.b16 %v264
      %v311 = vunpack.c.l.b16 %v265
      %v312 = vunpack.c.l.b16 %v266
      %v313 = vunpack.c.l.b16 %v267
      %v314 = vunpack.c.l.b16 %v268
      %v315 = vunpack.c.l.b16 %v269
      %v316 = vunpack.c.l.b16 %v270
      %v317 = vunpack.c.l.b16 %v271
      %v318 = vpack.c.b16 %v303, %v302
      %v319 = vpack.c.b16 %v305, %v304
      %v320 = vpack.c.b16 %v307, %v306
      %v321 = vpack.c.b16 %v309, %v308
      %v322 = vpack.c.b16 %v311, %v310
      %v323 = vpack.c.b16 %v313, %v312
      %v324 = vpack.c.b16 %v315, %v314
      %v325 = vpack.c.b16 %v317, %v316
      %v340 = vunpack.c.l.b16 %v272
      %v341 = vunpack.c.h.b16 %v272
      %v342 = vunpack.c.l.b16 %v273
      %v343 = vunpack.c.h.b16 %v273
      %v344 = vunpack.c.l.b16 %v274
      %v345 = vunpack.c.h.b16 %v274
      %v346 = vunpack.c.l.b16 %v275
      %v347 = vunpack.c.h.b16 %v275
      %v348 = vunpack.c.l.b16 %v276
      %v349 = vunpack.c.h.b16 %v276
      %v350 = vunpack.c.l.b16 %v277
      %v351 = vunpack.c.h.b16 %v277
      %v352 = vunpack.c.l.b16 %v278
      %v353 = vunpack.c.h.b16 %v278
      %v354 = vunpack.c.l.b16 %v279
      %v355 = vunpack.c.h.b16 %v279
      %v356 = vunpack.c.l.b16 %v280
      %v357 = vunpack.c.h.b16 %v280
      %v358 = vunpack.c.l.b16 %v281
      %v359 = vunpack.c.h.b16 %v281
      %v360 = vunpack.c.l.b16 %v282
      %v361 = vunpack.c.h.b16 %v282
      %v362 = vunpack.c.l.b16 %v283
      %v363 = vunpack.c.h.b16 %v283
      %v364 = vunpack.c.l.b16 %v284
      %v365 = vunpack.c.h.b16 %v284
      %v366 = vunpack.c.l.b16 %v285
      %v367 = vunpack.c.h.b16 %v285
      %v368 = vpack.c.b16 %v344, %v340
      %v369 = vpack.c.b16 %v345, %v341
      %v370 = vpack.c.b16 %v346, %v342
      %v371 = vpack.c.b16 %v347, %v343
      %v372 = vpack.c.b16 %v352, %v348
      %v373 = vpack.c.b16 %v353, %v349
      %v374 = vpack.c.b16 %v354, %v350
      %v375 = vpack.c.b16 %v355, %v351
      %v376 = vpack.c.b16 %v360, %v356
      %v377 = vpack.c.b16 %v361, %v357
      %v378 = vpack.c.b16 %v362, %v358
      %v379 = vpack.c.b16 %v363, %v359
      %v380 = vpack.c.b16 %v364, %v364
      %v381 = vpack.c.b16 %v365, %v365
      %v382 = vpack.c.b16 %v366, %v366
      %v383 = vpack.c.b16 %v367, %v367
      %vm396 = vcmask 457728
      %v398 = vsel %vm396, %v318, 0
      %v401 = vsel %vm396, %v319, 0
      %v404 = vsel %vm396, %v320, 0
      %v407 = vsel %vm396, %v321, 0
      %v410 = vsel %vm396, %v322, 0
      %v413 = vsel %vm396, %v323, 0
      %v416 = vsel %vm396, %v324, 0
      %v419 = vsel %vm396, %v325, 0
      %vm421 = vcmask 1043456
      %v423 = vsel %vm421, %v380, 0
      %v426 = vsel %vm421, %v381, 0
      %v429 = vsel %vm421, %v382, 0
      %v432 = vsel %vm421, %v383, 0
      %434 = vmatprep.subr.bf16.mxu0 %v369
      %435 = vmatpush1.bf16.msra.mxu0 %v368
      %436 = vmatprep.subr.bf16.mxu0 %v373
      %437 = vmatpush1.bf16.msra.mxu0 %v372
      %438 = vmatprep.subr.bf16.mxu0 %v377
      %439 = vmatpush1.bf16.msra.mxu0 %v376
      %440 = vmatprep.subr.bf16.mxu0 %v426
      %441 = vmatpush1.bf16.msra.mxu0 %v423
      %442 = vmatprep.subr.bf16.mxu0 0
      %443 = vmatpush1.bf16.msra.mxu0 0
      %444 = vmatprep.subr.bf16.mxu0 0
      %445 = vmatpush1.bf16.msra.mxu0 0
      %446 = vmatprep.subr.bf16.mxu0 0
      %447 = vmatpush1.bf16.msra.mxu0 0
      %448 = vmatprep.subr.bf16.mxu0 0
      %449 = vmatpush1.bf16.msra.mxu0 0
      %450 = vmatprep.subr.bf16.mxu0 0
      %451 = vmatpush1.bf16.msra.mxu0 0
      %452 = vmatprep.subr.bf16.mxu0 0
      %453 = vmatpush1.bf16.msra.mxu0 0
      %454 = vmatprep.subr.bf16.mxu0 0
      %455 = vmatpush1.bf16.msra.mxu0 0
      %456 = vmatprep.subr.bf16.mxu0 0
      %457 = vmatpush1.bf16.msra.mxu0 0
      %458 = vmatprep.subr.bf16.mxu0 0
      %459 = vmatpush1.bf16.msra.mxu0 0
      %460 = vmatprep.subr.bf16.mxu0 0
      %461 = vmatpush1.bf16.msra.mxu0 0
      %462 = vmatprep.subr.bf16.mxu0 0
      %463 = vmatpush1.bf16.msra.mxu0 0
      %464 = vmatprep.subr.bf16.mxu0 0
      %465 = vmatpush1.bf16.msra.mxu0 0
      %466 = vmatprep.mubr.bf16.mxu0 0
      %467 = vmatmul.mubr.bf16.gmra.mrb[0].mxu0 %v398
      %v468 = vpop.f32.mrb[0].mxu0
      %v469 = vadd.f32 0.0, %v468
      %v470 = vpop.f32.mrb[0].mxu0
      %v471 = vadd.f32 0.0, %v470
      %v472 = vpop.f32.mrb[0].mxu0
      %v473 = vadd.f32 0.0, %v472
      %v474 = vpop.f32.mrb[0].mxu0
      %v475 = vadd.f32 0.0, %v474
      %476 = vmatprep.mubr.bf16.mxu0 0
      %477 = vmatmul.mubr.bf16.gmra.mrb[0].mxu0 %v401
      %v478 = vpop.f32.mrb[0].mxu0
      %v479 = vadd.f32 0.0, %v478
      %v480 = vpop.f32.mrb[0].mxu0
      %v481 = vadd.f32 0.0, %v480
      %v482 = vpop.f32.mrb[0].mxu0
      %v483 = vadd.f32 0.0, %v482
      %v484 = vpop.f32.mrb[0].mxu0
      %v485 = vadd.f32 0.0, %v484
      %486 = vmatprep.mubr.bf16.mxu0 0
      %487 = vmatmul.mubr.bf16.gmra.mrb[0].mxu0 %v404
      %v488 = vpop.f32.mrb[0].mxu0
      %v489 = vadd.f32 0.0, %v488
      %v490 = vpop.f32.mrb[0].mxu0
      %v491 = vadd.f32 0.0, %v490
      %v492 = vpop.f32.mrb[0].mxu0
      %v493 = vadd.f32 0.0, %v492
      %v494 = vpop.f32.mrb[0].mxu0
      %v495 = vadd.f32 0.0, %v494
      %496 = vmatprep.mubr.bf16.mxu0 0
      %497 = vmatmul.mubr.bf16.gmra.mrb[0].mxu0 %v407
      %v498 = vpop.f32.mrb[0].mxu0
      %v499 = vadd.f32 0.0, %v498
      %v500 = vpop.f32.mrb[0].mxu0
      %v501 = vadd.f32 0.0, %v500
      %v502 = vpop.f32.mrb[0].mxu0
      %v503 = vadd.f32 0.0, %v502
      %v504 = vpop.f32.mrb[0].mxu0
      %v505 = vadd.f32 0.0, %v504
      %506 = vmatprep.mubr.bf16.mxu0 0
      %507 = vmatmul.mubr.bf16.gmra.mrb[0].mxu0 %v410
      %v508 = vpop.f32.mrb[0].mxu0
      %v509 = vadd.f32 0.0, %v508
      %v510 = vpop.f32.mrb[0].mxu0
      %v511 = vadd.f32 0.0, %v510
      %v512 = vpop.f32.mrb[0].mxu0
      %v513 = vadd.f32 0.0, %v512
      %v514 = vpop.f32.mrb[0].mxu0
      %v515 = vadd.f32 0.0, %v514
      %516 = vmatprep.mubr.bf16.mxu0 0
      %517 = vmatmul.mubr.bf16.gmra.mrb[0].mxu0 %v413
      %v518 = vpop.f32.mrb[0].mxu0
      %v519 = vadd.f32 0.0, %v518
      %v520 = vpop.f32.mrb[0].mxu0
      %v521 = vadd.f32 0.0, %v520
      %v522 = vpop.f32.mrb[0].mxu0
      %v523 = vadd.f32 0.0, %v522
      %v524 = vpop.f32.mrb[0].mxu0
      %v525 = vadd.f32 0.0, %v524
      %526 = vmatprep.mubr.bf16.mxu0 0
      %527 = vmatmul.mubr.bf16.gmra.mrb[0].mxu0 %v416
      %v528 = vpop.f32.mrb[0].mxu0
      %v529 = vadd.f32 0.0, %v528
      %v530 = vpop.f32.mrb[0].mxu0
      %v531 = vadd.f32 0.0, %v530
      %v532 = vpop.f32.mrb[0].mxu0
      %v533 = vadd.f32 0.0, %v532
      %v534 = vpop.f32.mrb[0].mxu0
      %v535 = vadd.f32 0.0, %v534
      %536 = vmatprep.mubr.bf16.mxu0 0
      %537 = vmatmul.mubr.bf16.gmra.mrb[0].mxu0 %v419
      %v538 = vpop.f32.mrb[0].mxu0
      %v539 = vadd.f32 0.0, %v538
      %v540 = vpop.f32.mrb[0].mxu0
      %v541 = vadd.f32 0.0, %v540
      %v542 = vpop.f32.mrb[0].mxu0
      %v543 = vadd.f32 0.0, %v542
      %v544 = vpop.f32.mrb[0].mxu0
      %v545 = vadd.f32 0.0, %v544
      %546 = vdwg.mxu0
      %547 = vmatprep.subr.bf16.mxu0 %v371
      %548 = vmatpush1.bf16.msra.mxu0 %v370
      %549 = vmatprep.subr.bf16.mxu0 %v375
      %550 = vmatpush1.bf16.msra.mxu0 %v374
      %551 = vmatprep.subr.bf16.mxu0 %v379
      %552 = vmatpush1.bf16.msra.mxu0 %v378
      %553 = vmatprep.subr.bf16.mxu0 %v432
      %554 = vmatpush1.bf16.msra.mxu0 %v429
      %555 = vmatprep.subr.bf16.mxu0 0
      %556 = vmatpush1.bf16.msra.mxu0 0
      %557 = vmatprep.subr.bf16.mxu0 0
      %558 = vmatpush1.bf16.msra.mxu0 0
      %559 = vmatprep.subr.bf16.mxu0 0
      %560 = vmatpush1.bf16.msra.mxu0 0
      %561 = vmatprep.subr.bf16.mxu0 0
      %562 = vmatpush1.bf16.msra.mxu0 0
      %563 = vmatprep.subr.bf16.mxu0 0
      %564 = vmatpush1.bf16.msra.mxu0 0
      %565 = vmatprep.subr.bf16.mxu0 0
      %566 = vmatpush1.bf16.msra.mxu0 0
      %567 = vmatprep.subr.bf16.mxu0 0
      %568 = vmatpush1.bf16.msra.mxu0 0
      %569 = vmatprep.subr.bf16.mxu0 0
      %570 = vmatpush1.bf16.msra.mxu0 0
      %571 = vmatprep.subr.bf16.mxu0 0
      %572 = vmatpush1.bf16.msra.mxu0 0
      %573 = vmatprep.subr.bf16.mxu0 0
      %574 = vmatpush1.bf16.msra.mxu0 0
      %575 = vmatprep.subr.bf16.mxu0 0
      %576 = vmatpush1.bf16.msra.mxu0 0
      %577 = vmatprep.subr.bf16.mxu0 0
      %578 = vmatpush1.bf16.msra.mxu0 0
      %579 = vmatprep.mubr.bf16.mxu0 0
      %580 = vmatmul.mubr.bf16.gmra.mrb[0].mxu0 %v398
      %v581 = vpop.f32.mrb[0].mxu0
      %v582 = vadd.f32 0.0, %v581
      %v583 = vpop.f32.mrb[0].mxu0
      %v584 = vadd.f32 0.0, %v583
      %v585 = vpop.f32.mrb[0].mxu0
      %v586 = vadd.f32 0.0, %v585
      %v587 = vpop.f32.mrb[0].mxu0
      %v588 = vadd.f32 0.0, %v587
      %589 = vmatprep.mubr.bf16.mxu0 0
      %590 = vmatmul.mubr.bf16.gmra.mrb[0].mxu0 %v401
      %v591 = vpop.f32.mrb[0].mxu0
      %v592 = vadd.f32 0.0, %v591
      %v593 = vpop.f32.mrb[0].mxu0
      %v594 = vadd.f32 0.0, %v593
      %v595 = vpop.f32.mrb[0].mxu0
      %v596 = vadd.f32 0.0, %v595
      %v597 = vpop.f32.mrb[0].mxu0
      %v598 = vadd.f32 0.0, %v597
      %599 = vmatprep.mubr.bf16.mxu0 0
      %600 = vmatmul.mubr.bf16.gmra.mrb[0].mxu0 %v404
      %v601 = vpop.f32.mrb[0].mxu0
      %v602 = vadd.f32 0.0, %v601
      %v603 = vpop.f32.mrb[0].mxu0
      %v604 = vadd.f32 0.0, %v603
      %v605 = vpop.f32.mrb[0].mxu0
      %v606 = vadd.f32 0.0, %v605
      %v607 = vpop.f32.mrb[0].mxu0
      %v608 = vadd.f32 0.0, %v607
      %609 = vmatprep.mubr.bf16.mxu0 0
      %610 = vmatmul.mubr.bf16.gmra.mrb[0].mxu0 %v407
      %v611 = vpop.f32.mrb[0].mxu0
      %v612 = vadd.f32 0.0, %v611
      %v613 = vpop.f32.mrb[0].mxu0
      %v614 = vadd.f32 0.0, %v613
      %v615 = vpop.f32.mrb[0].mxu0
      %v616 = vadd.f32 0.0, %v615
      %v617 = vpop.f32.mrb[0].mxu0
      %v618 = vadd.f32 0.0, %v617
      %619 = vmatprep.mubr.bf16.mxu0 0
      %620 = vmatmul.mubr.bf16.gmra.mrb[0].mxu0 %v410
      %v621 = vpop.f32.mrb[0].mxu0
      %v622 = vadd.f32 0.0, %v621
      %v623 = vpop.f32.mrb[0].mxu0
      %v624 = vadd.f32 0.0, %v623
      %v625 = vpop.f32.mrb[0].mxu0
      %v626 = vadd.f32 0.0, %v625
      %v627 = vpop.f32.mrb[0].mxu0
      %v628 = vadd.f32 0.0, %v627
      %629 = vmatprep.mubr.bf16.mxu0 0
      %630 = vmatmul.mubr.bf16.gmra.mrb[0].mxu0 %v413
      %v631 = vpop.f32.mrb[0].mxu0
      %v632 = vadd.f32 0.0, %v631
      %v633 = vpop.f32.mrb[0].mxu0
      %v634 = vadd.f32 0.0, %v633
      %v635 = vpop.f32.mrb[0].mxu0
      %v636 = vadd.f32 0.0, %v635
      %v637 = vpop.f32.mrb[0].mxu0
      %v638 = vadd.f32 0.0, %v637
      %639 = vmatprep.mubr.bf16.mxu0 0
      %640 = vmatmul.mubr.bf16.gmra.mrb[0].mxu0 %v416
      %v641 = vpop.f32.mrb[0].mxu0
      %v642 = vadd.f32 0.0, %v641
      %v643 = vpop.f32.mrb[0].mxu0
      %v644 = vadd.f32 0.0, %v643
      %v645 = vpop.f32.mrb[0].mxu0
      %v646 = vadd.f32 0.0, %v645
      %v647 = vpop.f32.mrb[0].mxu0
      %v648 = vadd.f32 0.0, %v647
      %649 = vmatprep.mubr.bf16.mxu0 0
      %650 = vmatmul.mubr.bf16.gmra.mrb[0].mxu0 %v419
      %v651 = vpop.f32.mrb[0].mxu0
      %v652 = vadd.f32 0.0, %v651
      %v653 = vpop.f32.mrb[0].mxu0
      %v654 = vadd.f32 0.0, %v653
      %v655 = vpop.f32.mrb[0].mxu0
      %v656 = vadd.f32 0.0, %v655
      %v657 = vpop.f32.mrb[0].mxu0
      %v658 = vadd.f32 0.0, %v657
      %659 = vdwg.mxu0
      %v660 = vmax.f32 %v469, 0.0
      %v661 = vmax.f32 %v473, 0.0
      %v662 = vmax.f32 %v479, 0.0
      %v663 = vmax.f32 %v483, 0.0
      %v664 = vmax.f32 %v489, 0.0
      %v665 = vmax.f32 %v493, 0.0
      %v666 = vmax.f32 %v499, 0.0
      %v667 = vmax.f32 %v503, 0.0
      %v668 = vmax.f32 %v509, 0.0
      %v669 = vmax.f32 %v513, 0.0
      %v670 = vmax.f32 %v519, 0.0
      %v671 = vmax.f32 %v523, 0.0
      %v672 = vmax.f32 %v529, 0.0
      %v673 = vmax.f32 %v533, 0.0
      %v674 = vmax.f32 %v539, 0.0
      %v675 = vmax.f32 %v543, 0.0
      %692 = vrot.lane.b32.xlu0 %v469, 64
      %v693 = vpop.permute.xlu0 %692
      %694 = vrot.lane.b32.xlu0 %v473, 64
      %v695 = vpop.permute.xlu0 %694
      %696 = vrot.lane.b32.xlu0 %v479, 64
      %v697 = vpop.permute.xlu0 %696
      %698 = vrot.lane.b32.xlu0 %v483, 64
      %v699 = vpop.permute.xlu0 %698
      %700 = vrot.lane.b32.xlu0 %v489, 64
      %v701 = vpop.permute.xlu0 %700
      %702 = vrot.lane.b32.xlu0 %v493, 64
      %v703 = vpop.permute.xlu0 %702
      %704 = vrot.lane.b32.xlu0 %v499, 64
      %v705 = vpop.permute.xlu0 %704
      %706 = vrot.lane.b32.xlu0 %v503, 64
      %v707 = vpop.permute.xlu0 %706
      %708 = vrot.lane.b32.xlu0 %v509, 64
      %v709 = vpop.permute.xlu0 %708
      %710 = vrot.lane.b32.xlu0 %v513, 64
      %v711 = vpop.permute.xlu0 %710
      %712 = vrot.lane.b32.xlu0 %v519, 64
      %v713 = vpop.permute.xlu0 %712
      %714 = vrot.lane.b32.xlu0 %v523, 64
      %v715 = vpop.permute.xlu0 %714
      %716 = vrot.lane.b32.xlu0 %v529, 64
      %v717 = vpop.permute.xlu0 %716
      %718 = vrot.lane.b32.xlu0 %v533, 64
      %v719 = vpop.permute.xlu0 %718
      %720 = vrot.lane.b32.xlu0 %v539, 64
      %v721 = vpop.permute.xlu0 %720
      %722 = vrot.lane.b32.xlu0 %v543, 64
      %v723 = vpop.permute.xlu0 %722
      %v740 = vmul.f32 %v471, %v693
      %v741 = vmul.f32 %v582, %v693
      %v742 = vmul.f32 %v475, %v695
      %v743 = vmul.f32 %v586, %v695
      %v744 = vmul.f32 %v481, %v697
      %v745 = vmul.f32 %v592, %v697
      %v746 = vmul.f32 %v485, %v699
      %v747 = vmul.f32 %v596, %v699
      %v748 = vmul.f32 %v491, %v701
      %v749 = vmul.f32 %v602, %v701
      %v750 = vmul.f32 %v495, %v703
      %v751 = vmul.f32 %v606, %v703
      %v752 = vmul.f32 %v501, %v705
      %v753 = vmul.f32 %v612, %v705
      %v754 = vmul.f32 %v505, %v707
      %v755 = vmul.f32 %v616, %v707
      %v756 = vmul.f32 %v511, %v709
      %v757 = vmul.f32 %v622, %v709
      %v758 = vmul.f32 %v515, %v711
      %v759 = vmul.f32 %v626, %v711
      %v760 = vmul.f32 %v521, %v713
      %v761 = vmul.f32 %v632, %v713
      %v762 = vmul.f32 %v525, %v715
      %v763 = vmul.f32 %v636, %v715
      %v764 = vmul.f32 %v531, %v717
      %v765 = vmul.f32 %v642, %v717
      %v766 = vmul.f32 %v535, %v719
      %v767 = vmul.f32 %v646, %v719
      %v768 = vmul.f32 %v541, %v721
      %v769 = vmul.f32 %v652, %v721
      %v770 = vmul.f32 %v545, %v723
      %v771 = vmul.f32 %v656, %v723
      %804 = vrot.lane.b32.xlu0 %v740, 40
      %v805 = vpop.permute.xlu0 %804
      %806 = vrot.lane.b32.xlu0 %v741, 40
      %v807 = vpop.permute.xlu0 %806
      %808 = vrot.lane.b32.xlu0 %v742, 40
      %v809 = vpop.permute.xlu0 %808
      %810 = vrot.lane.b32.xlu0 %v743, 40
      %v811 = vpop.permute.xlu0 %810
      %812 = vrot.lane.b32.xlu0 %v744, 40
      %v813 = vpop.permute.xlu0 %812
      %814 = vrot.lane.b32.xlu0 %v745, 40
      %v815 = vpop.permute.xlu0 %814
      %816 = vrot.lane.b32.xlu0 %v746, 40
      %v817 = vpop.permute.xlu0 %816
      %818 = vrot.lane.b32.xlu0 %v747, 40
      %v819 = vpop.permute.xlu0 %818
      %820 = vrot.lane.b32.xlu0 %v748, 40
      %v821 = vpop.permute.xlu0 %820
      %822 = vrot.lane.b32.xlu0 %v749, 40
      %v823 = vpop.permute.xlu0 %822
      %824 = vrot.lane.b32.xlu0 %v750, 40
      %v825 = vpop.permute.xlu0 %824
      %826 = vrot.lane.b32.xlu0 %v751, 40
      %v827 = vpop.permute.xlu0 %826
      %828 = vrot.lane.b32.xlu0 %v752, 40
      %v829 = vpop.permute.xlu0 %828
      %830 = vrot.lane.b32.xlu0 %v753, 40
      %v831 = vpop.permute.xlu0 %830
      %832 = vrot.lane.b32.xlu0 %v754, 40
      %v833 = vpop.permute.xlu0 %832
      %834 = vrot.lane.b32.xlu0 %v755, 40
      %v835 = vpop.permute.xlu0 %834
      %836 = vrot.lane.b32.xlu0 %v756, 40
      %v837 = vpop.permute.xlu0 %836
      %838 = vrot.lane.b32.xlu0 %v757, 40
      %v839 = vpop.permute.xlu0 %838
      %840 = vrot.lane.b32.xlu0 %v758, 40
      %v841 = vpop.permute.xlu0 %840
      %842 = vrot.lane.b32.xlu0 %v759, 40
      %v843 = vpop.permute.xlu0 %842
      %844 = vrot.lane.b32.xlu0 %v760, 40
      %v845 = vpop.permute.xlu0 %844
      %846 = vrot.lane.b32.xlu0 %v761, 40
      %v847 = vpop.permute.xlu0 %846
      %848 = vrot.lane.b32.xlu0 %v762, 40
      %v849 = vpop.permute.xlu0 %848
      %850 = vrot.lane.b32.xlu0 %v763, 40
      %v851 = vpop.permute.xlu0 %850
      %852 = vrot.lane.b32.xlu0 %v764, 40
      %v853 = vpop.permute.xlu0 %852
      %854 = vrot.lane.b32.xlu0 %v765, 40
      %v855 = vpop.permute.xlu0 %854
      %856 = vrot.lane.b32.xlu0 %v766, 40
      %v857 = vpop.permute.xlu0 %856
      %858 = vrot.lane.b32.xlu0 %v767, 40
      %v859 = vpop.permute.xlu0 %858
      %860 = vrot.lane.b32.xlu0 %v768, 40
      %v861 = vpop.permute.xlu0 %860
      %862 = vrot.lane.b32.xlu0 %v769, 40
      %v863 = vpop.permute.xlu0 %862
      %864 = vrot.lane.b32.xlu0 %v770, 40
      %v865 = vpop.permute.xlu0 %864
      %866 = vrot.lane.b32.xlu0 %v771, 40
      %v867 = vpop.permute.xlu0 %866
      %vm868 = vcmask 326656
      %v869 = vsel %vm868, %v805, %v807
      %v870 = vsel %vm868, %v809, %v811
      %v871 = vsel %vm868, %v813, %v815
      %v872 = vsel %vm868, %v817, %v819
      %v873 = vsel %vm868, %v821, %v823
      %v874 = vsel %vm868, %v825, %v827
      %v875 = vsel %vm868, %v829, %v831
      %v876 = vsel %vm868, %v833, %v835
      %v877 = vsel %vm868, %v837, %v839
      %v878 = vsel %vm868, %v841, %v843
      %v879 = vsel %vm868, %v845, %v847
      %v880 = vsel %vm868, %v849, %v851
      %v881 = vsel %vm868, %v853, %v855
      %v882 = vsel %vm868, %v857, %v859
      %v883 = vsel %vm868, %v861, %v863
      %v884 = vsel %vm868, %v865, %v867
      %v901 = vadd.f32 %v469, %v869
      %v902 = vadd.f32 %v473, %v870
      %v903 = vadd.f32 %v479, %v871
      %v904 = vadd.f32 %v483, %v872
      %v905 = vadd.f32 %v489, %v873
      %v906 = vadd.f32 %v493, %v874
      %v907 = vadd.f32 %v499, %v875
      %v908 = vadd.f32 %v503, %v876
      %v909 = vadd.f32 %v509, %v877
      %v910 = vadd.f32 %v513, %v878
      %v911 = vadd.f32 %v519, %v879
      %v912 = vadd.f32 %v523, %v880
      %v913 = vadd.f32 %v529, %v881
      %v914 = vadd.f32 %v533, %v882
      %v915 = vadd.f32 %v539, %v883
      %v916 = vadd.f32 %v543, %v884
      %917 = vrot.lane.b32.xlu0 %v741, 16
      %v918 = vpop.permute.xlu0 %917
      %919 = vrot.lane.b32.xlu0 %v743, 16
      %v920 = vpop.permute.xlu0 %919
      %921 = vrot.lane.b32.xlu0 %v745, 16
      %v922 = vpop.permute.xlu0 %921
      %923 = vrot.lane.b32.xlu0 %v747, 16
      %v924 = vpop.permute.xlu0 %923
      %925 = vrot.lane.b32.xlu0 %v749, 16
      %v926 = vpop.permute.xlu0 %925
      %927 = vrot.lane.b32.xlu0 %v751, 16
      %v928 = vpop.permute.xlu0 %927
      %929 = vrot.lane.b32.xlu0 %v753, 16
      %v930 = vpop.permute.xlu0 %929
      %931 = vrot.lane.b32.xlu0 %v755, 16
      %v932 = vpop.permute.xlu0 %931
      %933 = vrot.lane.b32.xlu0 %v757, 16
      %v934 = vpop.permute.xlu0 %933
      %935 = vrot.lane.b32.xlu0 %v759, 16
      %v936 = vpop.permute.xlu0 %935
      %937 = vrot.lane.b32.xlu0 %v761, 16
      %v938 = vpop.permute.xlu0 %937
      %939 = vrot.lane.b32.xlu0 %v763, 16
      %v940 = vpop.permute.xlu0 %939
      %941 = vrot.lane.b32.xlu0 %v765, 16
      %v942 = vpop.permute.xlu0 %941
      %943 = vrot.lane.b32.xlu0 %v767, 16
      %v944 = vpop.permute.xlu0 %943
      %945 = vrot.lane.b32.xlu0 %v769, 16
      %v946 = vpop.permute.xlu0 %945
      %947 = vrot.lane.b32.xlu0 %v771, 16
      %v948 = vpop.permute.xlu0 %947
      %v965 = vadd.f32 %v901, %v918
      %v966 = vadd.f32 %v902, %v920
      %v967 = vadd.f32 %v903, %v922
      %v968 = vadd.f32 %v904, %v924
      %v969 = vadd.f32 %v905, %v926
      %v970 = vadd.f32 %v906, %v928
      %v971 = vadd.f32 %v907, %v930
      %v972 = vadd.f32 %v908, %v932
      %v973 = vadd.f32 %v909, %v934
      %v974 = vadd.f32 %v910, %v936
      %v975 = vadd.f32 %v911, %v938
      %v976 = vadd.f32 %v912, %v940
      %v977 = vadd.f32 %v913, %v942
      %v978 = vadd.f32 %v914, %v944
      %v979 = vadd.f32 %v915, %v946
      %v980 = vadd.f32 %v916, %v948
      %981 = vrot.lane.b32.xlu0 %v741, 120
      %v982 = vpop.permute.xlu0 %981
      %983 = vrot.lane.b32.xlu0 %v743, 120
      %v984 = vpop.permute.xlu0 %983
      %985 = vrot.lane.b32.xlu0 %v745, 120
      %v986 = vpop.permute.xlu0 %985
      %987 = vrot.lane.b32.xlu0 %v747, 120
      %v988 = vpop.permute.xlu0 %987
      %989 = vrot.lane.b32.xlu0 %v749, 120
      %v990 = vpop.permute.xlu0 %989
      %991 = vrot.lane.b32.xlu0 %v751, 120
      %v992 = vpop.permute.xlu0 %991
      %993 = vrot.lane.b32.xlu0 %v753, 120
      %v994 = vpop.permute.xlu0 %993
      %995 = vrot.lane.b32.xlu0 %v755, 120
      %v996 = vpop.permute.xlu0 %995
      %997 = vrot.lane.b32.xlu0 %v757, 120
      %v998 = vpop.permute.xlu0 %997
      %999 = vrot.lane.b32.xlu0 %v759, 120
      %v1000 = vpop.permute.xlu0 %999
      %1001 = vrot.lane.b32.xlu0 %v761, 120
      %v1002 = vpop.permute.xlu0 %1001
      %1003 = vrot.lane.b32.xlu0 %v763, 120
      %v1004 = vpop.permute.xlu0 %1003
      %1005 = vrot.lane.b32.xlu0 %v765, 120
      %v1006 = vpop.permute.xlu0 %1005
      %1007 = vrot.lane.b32.xlu0 %v767, 120
      %v1008 = vpop.permute.xlu0 %1007
      %1009 = vrot.lane.b32.xlu0 %v769, 120
      %v1010 = vpop.permute.xlu0 %1009
      %1011 = vrot.lane.b32.xlu0 %v771, 120
      %v1012 = vpop.permute.xlu0 %1011
      %v1029 = vadd.f32 %v965, %v982
      %v1030 = vadd.f32 %v966, %v984
      %v1031 = vadd.f32 %v967, %v986
      %v1032 = vadd.f32 %v968, %v988
      %v1033 = vadd.f32 %v969, %v990
      %v1034 = vadd.f32 %v970, %v992
      %v1035 = vadd.f32 %v971, %v994
      %v1036 = vadd.f32 %v972, %v996
      %v1037 = vadd.f32 %v973, %v998
      %v1038 = vadd.f32 %v974, %v1000
      %v1039 = vadd.f32 %v975, %v1002
      %v1040 = vadd.f32 %v976, %v1004
      %v1041 = vadd.f32 %v977, %v1006
      %v1042 = vadd.f32 %v978, %v1008
      %v1043 = vadd.f32 %v979, %v1010
      %v1044 = vadd.f32 %v980, %v1012
      %1061 = vrot.lane.b32.xlu0 %v471, 64
      %v1062 = vpop.permute.xlu0 %1061
      %1063 = vrot.lane.b32.xlu0 %v475, 64
      %v1064 = vpop.permute.xlu0 %1063
      %1065 = vrot.lane.b32.xlu0 %v481, 64
      %v1066 = vpop.permute.xlu0 %1065
      %1067 = vrot.lane.b32.xlu0 %v485, 64
      %v1068 = vpop.permute.xlu0 %1067
      %1069 = vrot.lane.b32.xlu0 %v491, 64
      %v1070 = vpop.permute.xlu0 %1069
      %1071 = vrot.lane.b32.xlu0 %v495, 64
      %v1072 = vpop.permute.xlu0 %1071
      %1073 = vrot.lane.b32.xlu0 %v501, 64
      %v1074 = vpop.permute.xlu0 %1073
      %1075 = vrot.lane.b32.xlu0 %v505, 64
      %v1076 = vpop.permute.xlu0 %1075
      %1077 = vrot.lane.b32.xlu0 %v511, 64
      %v1078 = vpop.permute.xlu0 %1077
      %1079 = vrot.lane.b32.xlu0 %v515, 64
      %v1080 = vpop.permute.xlu0 %1079
      %1081 = vrot.lane.b32.xlu0 %v521, 64
      %v1082 = vpop.permute.xlu0 %1081
      %1083 = vrot.lane.b32.xlu0 %v525, 64
      %v1084 = vpop.permute.xlu0 %1083
      %1085 = vrot.lane.b32.xlu0 %v531, 64
      %v1086 = vpop.permute.xlu0 %1085
      %1087 = vrot.lane.b32.xlu0 %v535, 64
      %v1088 = vpop.permute.xlu0 %1087
      %1089 = vrot.lane.b32.xlu0 %v541, 64
      %v1090 = vpop.permute.xlu0 %1089
      %1091 = vrot.lane.b32.xlu0 %v545, 64
      %v1092 = vpop.permute.xlu0 %1091
      %vm1093 = vcmask 523264
      %v1094 = vsel %vm1093, %v693, %v1062
      %v1095 = vsel %vm1093, %v695, %v1064
      %v1096 = vsel %vm1093, %v697, %v1066
      %v1097 = vsel %vm1093, %v699, %v1068
      %v1098 = vsel %vm1093, %v701, %v1070
      %v1099 = vsel %vm1093, %v703, %v1072
      %v1100 = vsel %vm1093, %v705, %v1074
      %v1101 = vsel %vm1093, %v707, %v1076
      %v1102 = vsel %vm1093, %v709, %v1078
      %v1103 = vsel %vm1093, %v711, %v1080
      %v1104 = vsel %vm1093, %v713, %v1082
      %v1105 = vsel %vm1093, %v715, %v1084
      %v1106 = vsel %vm1093, %v717, %v1086
      %v1107 = vsel %vm1093, %v719, %v1088
      %v1108 = vsel %vm1093, %v721, %v1090
      %v1109 = vsel %vm1093, %v723, %v1092
      %v1126 = vmul.f32 %v582, %v1094
      %v1127 = vmul.f32 %v586, %v1095
      %v1128 = vmul.f32 %v592, %v1096
      %v1129 = vmul.f32 %v596, %v1097
      %v1130 = vmul.f32 %v602, %v1098
      %v1131 = vmul.f32 %v606, %v1099
      %v1132 = vmul.f32 %v612, %v1100
      %v1133 = vmul.f32 %v616, %v1101
      %v1134 = vmul.f32 %v622, %v1102
      %v1135 = vmul.f32 %v626, %v1103
      %v1136 = vmul.f32 %v632, %v1104
      %v1137 = vmul.f32 %v636, %v1105
      %v1138 = vmul.f32 %v642, %v1106
      %v1139 = vmul.f32 %v646, %v1107
      %v1140 = vmul.f32 %v652, %v1108
      %v1141 = vmul.f32 %v656, %v1109
      %1158 = vrot.lane.b32.xlu0 %v1126, 96
      %v1159 = vpop.permute.xlu0 %1158
      %1160 = vrot.lane.b32.xlu0 %v1127, 96
      %v1161 = vpop.permute.xlu0 %1160
      %1162 = vrot.lane.b32.xlu0 %v1128, 96
      %v1163 = vpop.permute.xlu0 %1162
      %1164 = vrot.lane.b32.xlu0 %v1129, 96
      %v1165 = vpop.permute.xlu0 %1164
      %1166 = vrot.lane.b32.xlu0 %v1130, 96
      %v1167 = vpop.permute.xlu0 %1166
      %1168 = vrot.lane.b32.xlu0 %v1131, 96
      %v1169 = vpop.permute.xlu0 %1168
      %1170 = vrot.lane.b32.xlu0 %v1132, 96
      %v1171 = vpop.permute.xlu0 %1170
      %1172 = vrot.lane.b32.xlu0 %v1133, 96
      %v1173 = vpop.permute.xlu0 %1172
      %1174 = vrot.lane.b32.xlu0 %v1134, 96
      %v1175 = vpop.permute.xlu0 %1174
      %1176 = vrot.lane.b32.xlu0 %v1135, 96
      %v1177 = vpop.permute.xlu0 %1176
      %1178 = vrot.lane.b32.xlu0 %v1136, 96
      %v1179 = vpop.permute.xlu0 %1178
      %1180 = vrot.lane.b32.xlu0 %v1137, 96
      %v1181 = vpop.permute.xlu0 %1180
      %1182 = vrot.lane.b32.xlu0 %v1138, 96
      %v1183 = vpop.permute.xlu0 %1182
      %1184 = vrot.lane.b32.xlu0 %v1139, 96
      %v1185 = vpop.permute.xlu0 %1184
      %1186 = vrot.lane.b32.xlu0 %v1140, 96
      %v1187 = vpop.permute.xlu0 %1186
      %1188 = vrot.lane.b32.xlu0 %v1141, 96
      %v1189 = vpop.permute.xlu0 %1188
      %v1206 = vadd.f32 %v1029, %v1159
      %v1207 = vadd.f32 %v1030, %v1161
      %v1208 = vadd.f32 %v1031, %v1163
      %v1209 = vadd.f32 %v1032, %v1165
      %v1210 = vadd.f32 %v1033, %v1167
      %v1211 = vadd.f32 %v1034, %v1169
      %v1212 = vadd.f32 %v1035, %v1171
      %v1213 = vadd.f32 %v1036, %v1173
      %v1214 = vadd.f32 %v1037, %v1175
      %v1215 = vadd.f32 %v1038, %v1177
      %v1216 = vadd.f32 %v1039, %v1179
      %v1217 = vadd.f32 %v1040, %v1181
      %v1218 = vadd.f32 %v1041, %v1183
      %v1219 = vadd.f32 %v1042, %v1185
      %v1220 = vadd.f32 %v1043, %v1187
      %v1221 = vadd.f32 %v1044, %v1189
      %v1238 = vmul.f32 %v582, %v1062
      %v1239 = vmul.f32 %v586, %v1064
      %v1240 = vmul.f32 %v592, %v1066
      %v1241 = vmul.f32 %v596, %v1068
      %v1242 = vmul.f32 %v602, %v1070
      %v1243 = vmul.f32 %v606, %v1072
      %v1244 = vmul.f32 %v612, %v1074
      %v1245 = vmul.f32 %v616, %v1076
      %v1246 = vmul.f32 %v622, %v1078
      %v1247 = vmul.f32 %v626, %v1080
      %v1248 = vmul.f32 %v632, %v1082
      %v1249 = vmul.f32 %v636, %v1084
      %v1250 = vmul.f32 %v642, %v1086
      %v1251 = vmul.f32 %v646, %v1088
      %v1252 = vmul.f32 %v652, %v1090
      %v1253 = vmul.f32 %v656, %v1092
      %1270 = vrot.lane.b32.xlu0 %v1238, 72
      %v1271 = vpop.permute.xlu0 %1270
      %1272 = vrot.lane.b32.xlu0 %v1239, 72
      %v1273 = vpop.permute.xlu0 %1272
      %1274 = vrot.lane.b32.xlu0 %v1240, 72
      %v1275 = vpop.permute.xlu0 %1274
      %1276 = vrot.lane.b32.xlu0 %v1241, 72
      %v1277 = vpop.permute.xlu0 %1276
      %1278 = vrot.lane.b32.xlu0 %v1242, 72
      %v1279 = vpop.permute.xlu0 %1278
      %1280 = vrot.lane.b32.xlu0 %v1243, 72
      %v1281 = vpop.permute.xlu0 %1280
      %1282 = vrot.lane.b32.xlu0 %v1244, 72
      %v1283 = vpop.permute.xlu0 %1282
      %1284 = vrot.lane.b32.xlu0 %v1245, 72
      %v1285 = vpop.permute.xlu0 %1284
      %1286 = vrot.lane.b32.xlu0 %v1246, 72
      %v1287 = vpop.permute.xlu0 %1286
      %1288 = vrot.lane.b32.xlu0 %v1247, 72
      %v1289 = vpop.permute.xlu0 %1288
      %1290 = vrot.lane.b32.xlu0 %v1248, 72
      %v1291 = vpop.permute.xlu0 %1290
      %1292 = vrot.lane.b32.xlu0 %v1249, 72
      %v1293 = vpop.permute.xlu0 %1292
      %1294 = vrot.lane.b32.xlu0 %v1250, 72
      %v1295 = vpop.permute.xlu0 %1294
      %1296 = vrot.lane.b32.xlu0 %v1251, 72
      %v1297 = vpop.permute.xlu0 %1296
      %1298 = vrot.lane.b32.xlu0 %v1252, 72
      %v1299 = vpop.permute.xlu0 %1298
      %1300 = vrot.lane.b32.xlu0 %v1253, 72
      %v1301 = vpop.permute.xlu0 %1300
      %v1318 = vadd.f32 %v1206, %v1271
      %v1319 = vadd.f32 %v1207, %v1273
      %v1320 = vadd.f32 %v1208, %v1275
      %v1321 = vadd.f32 %v1209, %v1277
      %v1322 = vadd.f32 %v1210, %v1279
      %v1323 = vadd.f32 %v1211, %v1281
      %v1324 = vadd.f32 %v1212, %v1283
      %v1325 = vadd.f32 %v1213, %v1285
      %v1326 = vadd.f32 %v1214, %v1287
      %v1327 = vadd.f32 %v1215, %v1289
      %v1328 = vadd.f32 %v1216, %v1291
      %v1329 = vadd.f32 %v1217, %v1293
      %v1330 = vadd.f32 %v1218, %v1295
      %v1331 = vadd.f32 %v1219, %v1297
      %v1332 = vadd.f32 %v1220, %v1299
      %v1333 = vadd.f32 %v1221, %v1301
      %1334 = vrot.lane.b32.xlu0 %v1238, 48
      %v1335 = vpop.permute.xlu0 %1334
      %1336 = vrot.lane.b32.xlu0 %v1239, 48
      %v1337 = vpop.permute.xlu0 %1336
      %1338 = vrot.lane.b32.xlu0 %v1240, 48
      %v1339 = vpop.permute.xlu0 %1338
      %1340 = vrot.lane.b32.xlu0 %v1241, 48
      %v1341 = vpop.permute.xlu0 %1340
      %1342 = vrot.lane.b32.xlu0 %v1242, 48
      %v1343 = vpop.permute.xlu0 %1342
      %1344 = vrot.lane.b32.xlu0 %v1243, 48
      %v1345 = vpop.permute.xlu0 %1344
      %1346 = vrot.lane.b32.xlu0 %v1244, 48
      %v1347 = vpop.permute.xlu0 %1346
      %1348 = vrot.lane.b32.xlu0 %v1245, 48
      %v1349 = vpop.permute.xlu0 %1348
      %1350 = vrot.lane.b32.xlu0 %v1246, 48
      %v1351 = vpop.permute.xlu0 %1350
      %1352 = vrot.lane.b32.xlu0 %v1247, 48
      %v1353 = vpop.permute.xlu0 %1352
      %1354 = vrot.lane.b32.xlu0 %v1248, 48
      %v1355 = vpop.permute.xlu0 %1354
      %1356 = vrot.lane.b32.xlu0 %v1249, 48
      %v1357 = vpop.permute.xlu0 %1356
      %1358 = vrot.lane.b32.xlu0 %v1250, 48
      %v1359 = vpop.permute.xlu0 %1358
      %1360 = vrot.lane.b32.xlu0 %v1251, 48
      %v1361 = vpop.permute.xlu0 %1360
      %1362 = vrot.lane.b32.xlu0 %v1252, 48
      %v1363 = vpop.permute.xlu0 %1362
      %1364 = vrot.lane.b32.xlu0 %v1253, 48
      %v1365 = vpop.permute.xlu0 %1364
      %v1382 = vadd.f32 %v1318, %v1335
      %v1383 = vadd.f32 %v1319, %v1337
      %v1384 = vadd.f32 %v1320, %v1339
      %v1385 = vadd.f32 %v1321, %v1341
      %v1386 = vadd.f32 %v1322, %v1343
      %v1387 = vadd.f32 %v1323, %v1345
      %v1388 = vadd.f32 %v1324, %v1347
      %v1389 = vadd.f32 %v1325, %v1349
      %v1390 = vadd.f32 %v1326, %v1351
      %v1391 = vadd.f32 %v1327, %v1353
      %v1392 = vadd.f32 %v1328, %v1355
      %v1393 = vadd.f32 %v1329, %v1357
      %v1394 = vadd.f32 %v1330, %v1359
      %v1395 = vadd.f32 %v1331, %v1361
      %v1396 = vadd.f32 %v1332, %v1363
      %v1397 = vadd.f32 %v1333, %v1365
      %v1398 = vmul.f32 %v584, %v1062
      %v1399 = vmul.f32 %v588, %v1064
      %v1400 = vmul.f32 %v594, %v1066
      %v1401 = vmul.f32 %v598, %v1068
      %v1402 = vmul.f32 %v604, %v1070
      %v1403 = vmul.f32 %v608, %v1072
      %v1404 = vmul.f32 %v614, %v1074
      %v1405 = vmul.f32 %v618, %v1076
      %v1406 = vmul.f32 %v624, %v1078
      %v1407 = vmul.f32 %v628, %v1080
      %v1408 = vmul.f32 %v634, %v1082
      %v1409 = vmul.f32 %v638, %v1084
      %v1410 = vmul.f32 %v644, %v1086
      %v1411 = vmul.f32 %v648, %v1088
      %v1412 = vmul.f32 %v654, %v1090
      %v1413 = vmul.f32 %v658, %v1092
      %1430 = vrot.lane.b32.xlu0 %v1398, 24
      %v1431 = vpop.permute.xlu0 %1430
      %1432 = vrot.lane.b32.xlu0 %v1399, 24
      %v1433 = vpop.permute.xlu0 %1432
      %1434 = vrot.lane.b32.xlu0 %v1400, 24
      %v1435 = vpop.permute.xlu0 %1434
      %1436 = vrot.lane.b32.xlu0 %v1401, 24
      %v1437 = vpop.permute.xlu0 %1436
      %1438 = vrot.lane.b32.xlu0 %v1402, 24
      %v1439 = vpop.permute.xlu0 %1438
      %1440 = vrot.lane.b32.xlu0 %v1403, 24
      %v1441 = vpop.permute.xlu0 %1440
      %1442 = vrot.lane.b32.xlu0 %v1404, 24
      %v1443 = vpop.permute.xlu0 %1442
      %1444 = vrot.lane.b32.xlu0 %v1405, 24
      %v1445 = vpop.permute.xlu0 %1444
      %1446 = vrot.lane.b32.xlu0 %v1406, 24
      %v1447 = vpop.permute.xlu0 %1446
      %1448 = vrot.lane.b32.xlu0 %v1407, 24
      %v1449 = vpop.permute.xlu0 %1448
      %1450 = vrot.lane.b32.xlu0 %v1408, 24
      %v1451 = vpop.permute.xlu0 %1450
      %1452 = vrot.lane.b32.xlu0 %v1409, 24
      %v1453 = vpop.permute.xlu0 %1452
      %1454 = vrot.lane.b32.xlu0 %v1410, 24
      %v1455 = vpop.permute.xlu0 %1454
      %1456 = vrot.lane.b32.xlu0 %v1411, 24
      %v1457 = vpop.permute.xlu0 %1456
      %1458 = vrot.lane.b32.xlu0 %v1412, 24
      %v1459 = vpop.permute.xlu0 %1458
      %1460 = vrot.lane.b32.xlu0 %v1413, 24
      %v1461 = vpop.permute.xlu0 %1460
      %v1478 = vadd.f32 %v1382, %v1431
      %v1479 = vadd.f32 %v1383, %v1433
      %v1480 = vadd.f32 %v1384, %v1435
      %v1481 = vadd.f32 %v1385, %v1437
      %v1482 = vadd.f32 %v1386, %v1439
      %v1483 = vadd.f32 %v1387, %v1441
      %v1484 = vadd.f32 %v1388, %v1443
      %v1485 = vadd.f32 %v1389, %v1445
      %v1486 = vadd.f32 %v1390, %v1447
      %v1487 = vadd.f32 %v1391, %v1449
      %v1488 = vadd.f32 %v1392, %v1451
      %v1489 = vadd.f32 %v1393, %v1453
      %v1490 = vadd.f32 %v1394, %v1455
      %v1491 = vadd.f32 %v1395, %v1457
      %v1492 = vadd.f32 %v1396, %v1459
      %v1493 = vadd.f32 %v1397, %v1461
      %v1494 = vadd.f32 %v1478, %v1398
      %v1495 = vadd.f32 %v1479, %v1399
      %v1496 = vadd.f32 %v1480, %v1400
      %v1497 = vadd.f32 %v1481, %v1401
      %v1498 = vadd.f32 %v1482, %v1402
      %v1499 = vadd.f32 %v1483, %v1403
      %v1500 = vadd.f32 %v1484, %v1404
      %v1501 = vadd.f32 %v1485, %v1405
      %v1502 = vadd.f32 %v1486, %v1406
      %v1503 = vadd.f32 %v1487, %v1407
      %v1504 = vadd.f32 %v1488, %v1408
      %v1505 = vadd.f32 %v1489, %v1409
      %v1506 = vadd.f32 %v1490, %v1410
      %v1507 = vadd.f32 %v1491, %v1411
      %v1508 = vadd.f32 %v1492, %v1412
      %v1509 = vadd.f32 %v1493, %v1413
      %v1510 = vxor.u32 %v1494, 2147483648
      %v1511 = vxor.u32 %v1495, 2147483648
      %v1512 = vxor.u32 %v1496, 2147483648
      %v1513 = vxor.u32 %v1497, 2147483648
      %v1514 = vxor.u32 %v1498, 2147483648
      %v1515 = vxor.u32 %v1499, 2147483648
      %v1516 = vxor.u32 %v1500, 2147483648
      %v1517 = vxor.u32 %v1501, 2147483648
      %v1518 = vxor.u32 %v1502, 2147483648
      %v1519 = vxor.u32 %v1503, 2147483648
      %v1520 = vxor.u32 %v1504, 2147483648
      %v1521 = vxor.u32 %v1505, 2147483648
      %v1522 = vxor.u32 %v1506, 2147483648
      %v1523 = vxor.u32 %v1507, 2147483648
      %v1524 = vxor.u32 %v1508, 2147483648
      %v1525 = vxor.u32 %v1509, 2147483648
      %v1526 = vmul.f32 %v1510, 1.442695
      %v1527 = vpow.pop %v1526
      %v1528 = vmul.f32 %v1511, 1.442695
      %v1529 = vpow.pop %v1528
      %v1530 = vmul.f32 %v1512, 1.442695
      %v1531 = vpow.pop %v1530
      %v1532 = vmul.f32 %v1513, 1.442695
      %v1533 = vpow.pop %v1532
      %v1534 = vmul.f32 %v1514, 1.442695
      %v1535 = vpow.pop %v1534
      %v1536 = vmul.f32 %v1515, 1.442695
      %v1537 = vpow.pop %v1536
      %v1538 = vmul.f32 %v1516, 1.442695
      %v1539 = vpow.pop %v1538
      %v1540 = vmul.f32 %v1517, 1.442695
      %v1541 = vpow.pop %v1540
      %v1542 = vmul.f32 %v1518, 1.442695
      %v1543 = vpow.pop %v1542
      %v1544 = vmul.f32 %v1519, 1.442695
      %v1545 = vpow.pop %v1544
      %v1546 = vmul.f32 %v1520, 1.442695
      %v1547 = vpow.pop %v1546
      %v1548 = vmul.f32 %v1521, 1.442695
      %v1549 = vpow.pop %v1548
      %v1550 = vmul.f32 %v1522, 1.442695
      %v1551 = vpow.pop %v1550
      %v1552 = vmul.f32 %v1523, 1.442695
      %v1553 = vpow.pop %v1552
      %v1554 = vmul.f32 %v1524, 1.442695
      %v1555 = vpow.pop %v1554
      %v1556 = vmul.f32 %v1525, 1.442695
      %v1557 = vpow.pop %v1556
      %v1558 = vadd.f32 %v1527, 1.0
      %v1559 = vadd.f32 %v1529, 1.0
      %v1560 = vadd.f32 %v1531, 1.0
      %v1561 = vadd.f32 %v1533, 1.0
      %v1562 = vadd.f32 %v1535, 1.0
      %v1563 = vadd.f32 %v1537, 1.0
      %v1564 = vadd.f32 %v1539, 1.0
      %v1565 = vadd.f32 %v1541, 1.0
      %v1566 = vadd.f32 %v1543, 1.0
      %v1567 = vadd.f32 %v1545, 1.0
      %v1568 = vadd.f32 %v1547, 1.0
      %v1569 = vadd.f32 %v1549, 1.0
      %v1570 = vadd.f32 %v1551, 1.0
      %v1571 = vadd.f32 %v1553, 1.0
      %v1572 = vadd.f32 %v1555, 1.0
      %v1573 = vadd.f32 %v1557, 1.0
      %v1574 = vrcp.pop %v1558
      %v1575 = vmul.f32 1.0, %v1574
      %v1576 = vrcp.pop %v1559
      %v1577 = vmul.f32 1.0, %v1576
      %v1578 = vrcp.pop %v1560
      %v1579 = vmul.f32 1.0, %v1578
      %v1580 = vrcp.pop %v1561
      %v1581 = vmul.f32 1.0, %v1580
      %v1582 = vrcp.pop %v1562
      %v1583 = vmul.f32 1.0, %v1582
      %v1584 = vrcp.pop %v1563
      %v1585 = vmul.f32 1.0, %v1584
      %v1586 = vrcp.pop %v1564
      %v1587 = vmul.f32 1.0, %v1586
      %v1588 = vrcp.pop %v1565
      %v1589 = vmul.f32 1.0, %v1588
      %v1590 = vrcp.pop %v1566
      %v1591 = vmul.f32 1.0, %v1590
      %v1592 = vrcp.pop %v1567
      %v1593 = vmul.f32 1.0, %v1592
      %v1594 = vrcp.pop %v1568
      %v1595 = vmul.f32 1.0, %v1594
      %v1596 = vrcp.pop %v1569
      %v1597 = vmul.f32 1.0, %v1596
      %v1598 = vrcp.pop %v1570
      %v1599 = vmul.f32 1.0, %v1598
      %v1600 = vrcp.pop %v1571
      %v1601 = vmul.f32 1.0, %v1600
      %v1602 = vrcp.pop %v1572
      %v1603 = vmul.f32 1.0, %v1602
      %v1604 = vrcp.pop %v1573
      %v1605 = vmul.f32 1.0, %v1604
      %1622 = vrot.lane.b32.xlu0 %v660, 24
      %v1623 = vpop.permute.xlu0 %1622
      %1624 = vrot.lane.b32.xlu0 %v661, 24
      %v1625 = vpop.permute.xlu0 %1624
      %1626 = vrot.lane.b32.xlu0 %v662, 24
      %v1627 = vpop.permute.xlu0 %1626
      %1628 = vrot.lane.b32.xlu0 %v663, 24
      %v1629 = vpop.permute.xlu0 %1628
      %1630 = vrot.lane.b32.xlu0 %v664, 24
      %v1631 = vpop.permute.xlu0 %1630
      %1632 = vrot.lane.b32.xlu0 %v665, 24
      %v1633 = vpop.permute.xlu0 %1632
      %1634 = vrot.lane.b32.xlu0 %v666, 24
      %v1635 = vpop.permute.xlu0 %1634
      %1636 = vrot.lane.b32.xlu0 %v667, 24
      %v1637 = vpop.permute.xlu0 %1636
      %1638 = vrot.lane.b32.xlu0 %v668, 24
      %v1639 = vpop.permute.xlu0 %1638
      %1640 = vrot.lane.b32.xlu0 %v669, 24
      %v1641 = vpop.permute.xlu0 %1640
      %1642 = vrot.lane.b32.xlu0 %v670, 24
      %v1643 = vpop.permute.xlu0 %1642
      %1644 = vrot.lane.b32.xlu0 %v671, 24
      %v1645 = vpop.permute.xlu0 %1644
      %1646 = vrot.lane.b32.xlu0 %v672, 24
      %v1647 = vpop.permute.xlu0 %1646
      %1648 = vrot.lane.b32.xlu0 %v673, 24
      %v1649 = vpop.permute.xlu0 %1648
      %1650 = vrot.lane.b32.xlu0 %v674, 24
      %v1651 = vpop.permute.xlu0 %1650
      %1652 = vrot.lane.b32.xlu0 %v675, 24
      %v1653 = vpop.permute.xlu0 %1652
      %v1670 = vmul.f32 %v1575, %v1623
      %v1671 = vmul.f32 %v1577, %v1625
      %v1672 = vmul.f32 %v1579, %v1627
      %v1673 = vmul.f32 %v1581, %v1629
      %v1674 = vmul.f32 %v1583, %v1631
      %v1675 = vmul.f32 %v1585, %v1633
      %v1676 = vmul.f32 %v1587, %v1635
      %v1677 = vmul.f32 %v1589, %v1637
      %v1678 = vmul.f32 %v1591, %v1639
      %v1679 = vmul.f32 %v1593, %v1641
      %v1680 = vmul.f32 %v1595, %v1643
      %v1681 = vmul.f32 %v1597, %v1645
      %v1682 = vmul.f32 %v1599, %v1647
      %v1683 = vmul.f32 %v1601, %v1649
      %v1684 = vmul.f32 %v1603, %v1651
      %v1685 = vmul.f32 %v1605, %v1653
      %v1686 = vpack.c.bf16 %v1671, %v1670
      %v1687 = vpack.c.bf16 %v1673, %v1672
      %v1688 = vpack.c.bf16 %v1675, %v1674
      %v1689 = vpack.c.bf16 %v1677, %v1676
      %v1690 = vpack.c.bf16 %v1679, %v1678
      %v1691 = vpack.c.bf16 %v1681, %v1680
      %v1692 = vpack.c.bf16 %v1683, %v1682
      %v1693 = vpack.c.bf16 %v1685, %v1684
      %v1694 = vld [vmem:[%s2] sm:$0xff]
      %v1695 = vld [vmem:[%s2 + $0x8] sm:$0xf]
      %v1696 = vld [vmem:[%s2 + $0xc] sm:$0xff]
      %v1697 = vld [vmem:[%s2 + $0x14] sm:$0xf]
      %v1698 = vld [vmem:[%s2 + $0x18] sm:$0xff]
      %v1699 = vld [vmem:[%s2 + $0x20] sm:$0xf]
      %v1700 = vld [vmem:[%s5] sm:$0x7]
      %v1702 = vlaneseq
      %v1703 = vshrl.u32 %v1702, 7
      %v1704 = vsub.s32 0, %v1703
      %v1705 = vrot.slane %v1700, %v1704
      %v1706 = vlaneseq
      %v1707 = vshrl.u32 %v1706, 7
      %v1708 = vsub.s32 1, %v1707
      %v1709 = vrot.slane %v1700, %v1708
      %v1710 = vlaneseq
      %v1711 = vshrl.u32 %v1710, 7
      %v1712 = vsub.s32 2, %v1711
      %v1713 = vrot.slane %v1700, %v1712
      %1725 = vrot.lane.b32.xlu0 %v1686, 104
      %v1726 = vpop.permute.xlu0 %1725
      %1727 = vrot.lane.b32.xlu0 %v1687, 104
      %v1728 = vpop.permute.xlu0 %1727
      %1729 = vrot.lane.b32.xlu0 %v1688, 104
      %v1730 = vpop.permute.xlu0 %1729
      %1731 = vrot.lane.b32.xlu0 %v1689, 104
      %v1732 = vpop.permute.xlu0 %1731
      %1733 = vrot.lane.b32.xlu0 %v1690, 104
      %v1734 = vpop.permute.xlu0 %1733
      %1735 = vrot.lane.b32.xlu0 %v1691, 104
      %v1736 = vpop.permute.xlu0 %1735
      %1737 = vrot.lane.b32.xlu0 %v1692, 104
      %v1738 = vpop.permute.xlu0 %1737
      %1739 = vrot.lane.b32.xlu0 %v1693, 104
      %v1740 = vpop.permute.xlu0 %1739
      %v1747 = vunpack.c.l.b16 %v1694
      %v1748 = vunpack.c.h.b16 %v1694
      %v1749 = vunpack.c.l.b16 %v1695
      %v1750 = vunpack.c.l.b16 %v1696
      %v1751 = vunpack.c.h.b16 %v1696
      %v1752 = vunpack.c.l.b16 %v1697
      %v1753 = vunpack.c.l.b16 %v1698
      %v1754 = vunpack.c.h.b16 %v1698
      %v1755 = vunpack.c.l.b16 %v1699
      %v1756 = vpack.c.b16 %v1750, %v1747
      %v1757 = vpack.c.b16 %v1751, %v1748
      %v1758 = vpack.c.b16 %v1752, %v1749
      %v1759 = vpack.c.b16 %v1753, %v1753
      %v1760 = vpack.c.b16 %v1754, %v1754
      %v1761 = vpack.c.b16 %v1755, %v1755
      %vm1765 = vcmask 195584
      %v1767 = vsel %vm1765, %v1726, 0
      %v1770 = vsel %vm1765, %v1728, 0
      %v1773 = vsel %vm1765, %v1730, 0
      %v1776 = vsel %vm1765, %v1732, 0
      %v1779 = vsel %vm1765, %v1734, 0
      %v1782 = vsel %vm1765, %v1736, 0
      %v1785 = vsel %vm1765, %v1738, 0
      %v1788 = vsel %vm1765, %v1740, 0
      %v1791 = vsel %vm421, %v1759, 0
      %v1794 = vsel %vm421, %v1760, 0
      %v1797 = vsel %vm421, %v1761, 0
      %1799 = vmatprep.subr.bf16.mxu0 %v1757
      %1800 = vmatpush1.bf16.msra.mxu0 %v1756
      %1801 = vmatprep.subr.bf16.mxu0 %v1794
      %1802 = vmatpush1.bf16.msra.mxu0 %v1791
      %1803 = vmatprep.subr.bf16.mxu0 0
      %1804 = vmatpush1.bf16.msra.mxu0 0
      %1805 = vmatprep.subr.bf16.mxu0 0
      %1806 = vmatpush1.bf16.msra.mxu0 0
      %1807 = vmatprep.subr.bf16.mxu0 0
      %1808 = vmatpush1.bf16.msra.mxu0 0
      %1809 = vmatprep.subr.bf16.mxu0 0
      %1810 = vmatpush1.bf16.msra.mxu0 0
      %1811 = vmatprep.subr.bf16.mxu0 0
      %1812 = vmatpush1.bf16.msra.mxu0 0
      %1813 = vmatprep.subr.bf16.mxu0 0
      %1814 = vmatpush1.bf16.msra.mxu0 0
      %1815 = vmatprep.subr.bf16.mxu0 0
      %1816 = vmatpush1.bf16.msra.mxu0 0
      %1817 = vmatprep.subr.bf16.mxu0 0
      %1818 = vmatpush1.bf16.msra.mxu0 0
      %1819 = vmatprep.subr.bf16.mxu0 0
      %1820 = vmatpush1.bf16.msra.mxu0 0
      %1821 = vmatprep.subr.bf16.mxu0 0
      %1822 = vmatpush1.bf16.msra.mxu0 0
      %1823 = vmatprep.subr.bf16.mxu0 0
      %1824 = vmatpush1.bf16.msra.mxu0 0
      %1825 = vmatprep.subr.bf16.mxu0 0
      %1826 = vmatpush1.bf16.msra.mxu0 0
      %1827 = vmatprep.subr.bf16.mxu0 0
      %1828 = vmatpush1.bf16.msra.mxu0 0
      %1829 = vmatprep.subr.bf16.mxu0 0
      %1830 = vmatpush1.bf16.msra.mxu0 0
      %1831 = vmatprep.mubr.bf16.mxu0 0
      %1832 = vmatmul.mubr.bf16.gmra.mrb[0].mxu0 %v1767
      %v1833 = vpop.f32.mrb[0].mxu0
      %v1834 = vadd.f32 %v1705, %v1833
      %v1835 = vpop.f32.mrb[0].mxu0
      %v1836 = vadd.f32 %v1709, %v1835
      %v1837 = vpop.f32.mrb[0].mxu0
      %v1838 = vadd.f32 %v1705, %v1837
      %v1839 = vpop.f32.mrb[0].mxu0
      %v1840 = vadd.f32 %v1709, %v1839
      %1841 = vmatprep.mubr.bf16.mxu0 0
      %1842 = vmatmul.mubr.bf16.gmra.mrb[0].mxu0 %v1770
      %v1843 = vpop.f32.mrb[0].mxu0
      %v1844 = vadd.f32 %v1705, %v1843
      %v1845 = vpop.f32.mrb[0].mxu0
      %v1846 = vadd.f32 %v1709, %v1845
      %v1847 = vpop.f32.mrb[0].mxu0
      %v1848 = vadd.f32 %v1705, %v1847
      %v1849 = vpop.f32.mrb[0].mxu0
      %v1850 = vadd.f32 %v1709, %v1849
      %1851 = vmatprep.mubr.bf16.mxu0 0
      %1852 = vmatmul.mubr.bf16.gmra.mrb[0].mxu0 %v1773
      %v1853 = vpop.f32.mrb[0].mxu0
      %v1854 = vadd.f32 %v1705, %v1853
      %v1855 = vpop.f32.mrb[0].mxu0
      %v1856 = vadd.f32 %v1709, %v1855
      %v1857 = vpop.f32.mrb[0].mxu0
      %v1858 = vadd.f32 %v1705, %v1857
      %v1859 = vpop.f32.mrb[0].mxu0
      %v1860 = vadd.f32 %v1709, %v1859
      %1861 = vmatprep.mubr.bf16.mxu0 0
      %1862 = vmatmul.mubr.bf16.gmra.mrb[0].mxu0 %v1776
      %v1863 = vpop.f32.mrb[0].mxu0
      %v1864 = vadd.f32 %v1705, %v1863
      %v1865 = vpop.f32.mrb[0].mxu0
      %v1866 = vadd.f32 %v1709, %v1865
      %v1867 = vpop.f32.mrb[0].mxu0
      %v1868 = vadd.f32 %v1705, %v1867
      %v1869 = vpop.f32.mrb[0].mxu0
      %v1870 = vadd.f32 %v1709, %v1869
      %1871 = vmatprep.mubr.bf16.mxu0 0
      %1872 = vmatmul.mubr.bf16.gmra.mrb[0].mxu0 %v1779
      %v1873 = vpop.f32.mrb[0].mxu0
      %v1874 = vadd.f32 %v1705, %v1873
      %v1875 = vpop.f32.mrb[0].mxu0
      %v1876 = vadd.f32 %v1709, %v1875
      %v1877 = vpop.f32.mrb[0].mxu0
      %v1878 = vadd.f32 %v1705, %v1877
      %v1879 = vpop.f32.mrb[0].mxu0
      %v1880 = vadd.f32 %v1709, %v1879
      %1881 = vmatprep.mubr.bf16.mxu0 0
      %1882 = vmatmul.mubr.bf16.gmra.mrb[0].mxu0 %v1782
      %v1883 = vpop.f32.mrb[0].mxu0
      %v1884 = vadd.f32 %v1705, %v1883
      %v1885 = vpop.f32.mrb[0].mxu0
      %v1886 = vadd.f32 %v1709, %v1885
      %v1887 = vpop.f32.mrb[0].mxu0
      %v1888 = vadd.f32 %v1705, %v1887
      %v1889 = vpop.f32.mrb[0].mxu0
      %v1890 = vadd.f32 %v1709, %v1889
      %1891 = vmatprep.mubr.bf16.mxu0 0
      %1892 = vmatmul.mubr.bf16.gmra.mrb[0].mxu0 %v1785
      %v1893 = vpop.f32.mrb[0].mxu0
      %v1894 = vadd.f32 %v1705, %v1893
      %v1895 = vpop.f32.mrb[0].mxu0
      %v1896 = vadd.f32 %v1709, %v1895
      %v1897 = vpop.f32.mrb[0].mxu0
      %v1898 = vadd.f32 %v1705, %v1897
      %v1899 = vpop.f32.mrb[0].mxu0
      %v1900 = vadd.f32 %v1709, %v1899
      %1901 = vmatprep.mubr.bf16.mxu0 0
      %1902 = vmatmul.mubr.bf16.gmra.mrb[0].mxu0 %v1788
      %v1903 = vpop.f32.mrb[0].mxu0
      %v1904 = vadd.f32 %v1705, %v1903
      %v1905 = vpop.f32.mrb[0].mxu0
      %v1906 = vadd.f32 %v1709, %v1905
      %v1907 = vpop.f32.mrb[0].mxu0
      %v1908 = vadd.f32 %v1705, %v1907
      %v1909 = vpop.f32.mrb[0].mxu0
      %v1910 = vadd.f32 %v1709, %v1909
      %1911 = vdwg.mxu0
      %1912 = vmatprep.subr.bf16.mxu0 0
      %1913 = vmatpush1.bf16.msra.mxu0 %v1758
      %1914 = vmatprep.subr.bf16.mxu0 0
      %1915 = vmatpush1.bf16.msra.mxu0 %v1797
      %1916 = vmatprep.subr.bf16.mxu0 0
      %1917 = vmatpush1.bf16.msra.mxu0 0
      %1918 = vmatprep.subr.bf16.mxu0 0
      %1919 = vmatpush1.bf16.msra.mxu0 0
      %1920 = vmatprep.subr.bf16.mxu0 0
      %1921 = vmatpush1.bf16.msra.mxu0 0
      %1922 = vmatprep.subr.bf16.mxu0 0
      %1923 = vmatpush1.bf16.msra.mxu0 0
      %1924 = vmatprep.subr.bf16.mxu0 0
      %1925 = vmatpush1.bf16.msra.mxu0 0
      %1926 = vmatprep.subr.bf16.mxu0 0
      %1927 = vmatpush1.bf16.msra.mxu0 0
      %1928 = vmatprep.subr.bf16.mxu0 0
      %1929 = vmatpush1.bf16.msra.mxu0 0
      %1930 = vmatprep.subr.bf16.mxu0 0
      %1931 = vmatpush1.bf16.msra.mxu0 0
      %1932 = vmatprep.subr.bf16.mxu0 0
      %1933 = vmatpush1.bf16.msra.mxu0 0
      %1934 = vmatprep.subr.bf16.mxu0 0
      %1935 = vmatpush1.bf16.msra.mxu0 0
      %1936 = vmatprep.subr.bf16.mxu0 0
      %1937 = vmatpush1.bf16.msra.mxu0 0
      %1938 = vmatprep.subr.bf16.mxu0 0
      %1939 = vmatpush1.bf16.msra.mxu0 0
      %1940 = vmatprep.subr.bf16.mxu0 0
      %1941 = vmatpush1.bf16.msra.mxu0 0
      %1942 = vmatprep.subr.bf16.mxu0 0
      %1943 = vmatpush1.bf16.msra.mxu0 0
      %1944 = vmatprep.mubr.bf16.mxu0 0
      %1945 = vmatmul.mubr.bf16.gmra.mrb[0].mxu0 %v1767
      %v1946 = vpop.f32.mrb[0].mxu0
      %v1947 = vadd.f32 %v1713, %v1946
      %v1948 = vpop.f32.mrb[0].mxu0
      %v1949 = vpop.f32.mrb[0].mxu0
      %v1950 = vadd.f32 %v1713, %v1949
      %v1951 = vpop.f32.mrb[0].mxu0
      %1952 = vmatprep.mubr.bf16.mxu0 0
      %1953 = vmatmul.mubr.bf16.gmra.mrb[0].mxu0 %v1770
      %v1954 = vpop.f32.mrb[0].mxu0
      %v1955 = vadd.f32 %v1713, %v1954
      %v1956 = vpop.f32.mrb[0].mxu0
      %v1957 = vpop.f32.mrb[0].mxu0
      %v1958 = vadd.f32 %v1713, %v1957
      %v1959 = vpop.f32.mrb[0].mxu0
      %1960 = vmatprep.mubr.bf16.mxu0 0
      %1961 = vmatmul.mubr.bf16.gmra.mrb[0].mxu0 %v1773
      %v1962 = vpop.f32.mrb[0].mxu0
      %v1963 = vadd.f32 %v1713, %v1962
      %v1964 = vpop.f32.mrb[0].mxu0
      %v1965 = vpop.f32.mrb[0].mxu0
      %v1966 = vadd.f32 %v1713, %v1965
      %v1967 = vpop.f32.mrb[0].mxu0
      %1968 = vmatprep.mubr.bf16.mxu0 0
      %1969 = vmatmul.mubr.bf16.gmra.mrb[0].mxu0 %v1776
      %v1970 = vpop.f32.mrb[0].mxu0
      %v1971 = vadd.f32 %v1713, %v1970
      %v1972 = vpop.f32.mrb[0].mxu0
      %v1973 = vpop.f32.mrb[0].mxu0
      %v1974 = vadd.f32 %v1713, %v1973
      %v1975 = vpop.f32.mrb[0].mxu0
      %1976 = vmatprep.mubr.bf16.mxu0 0
      %1977 = vmatmul.mubr.bf16.gmra.mrb[0].mxu0 %v1779
      %v1978 = vpop.f32.mrb[0].mxu0
      %v1979 = vadd.f32 %v1713, %v1978
      %v1980 = vpop.f32.mrb[0].mxu0
      %v1981 = vpop.f32.mrb[0].mxu0
      %v1982 = vadd.f32 %v1713, %v1981
      %v1983 = vpop.f32.mrb[0].mxu0
      %1984 = vmatprep.mubr.bf16.mxu0 0
      %1985 = vmatmul.mubr.bf16.gmra.mrb[0].mxu0 %v1782
      %v1986 = vpop.f32.mrb[0].mxu0
      %v1987 = vadd.f32 %v1713, %v1986
      %v1988 = vpop.f32.mrb[0].mxu0
      %v1989 = vpop.f32.mrb[0].mxu0
      %v1990 = vadd.f32 %v1713, %v1989
      %v1991 = vpop.f32.mrb[0].mxu0
      %1992 = vmatprep.mubr.bf16.mxu0 0
      %1993 = vmatmul.mubr.bf16.gmra.mrb[0].mxu0 %v1785
      %v1994 = vpop.f32.mrb[0].mxu0
      %v1995 = vadd.f32 %v1713, %v1994
      %v1996 = vpop.f32.mrb[0].mxu0
      %v1997 = vpop.f32.mrb[0].mxu0
      %v1998 = vadd.f32 %v1713, %v1997
      %v1999 = vpop.f32.mrb[0].mxu0
      %2000 = vmatprep.mubr.bf16.mxu0 0
      %2001 = vmatmul.mubr.bf16.gmra.mrb[0].mxu0 %v1788
      %v2002 = vpop.f32.mrb[0].mxu0
      %v2003 = vadd.f32 %v1713, %v2002
      %v2004 = vpop.f32.mrb[0].mxu0
      %v2005 = vpop.f32.mrb[0].mxu0
      %v2006 = vadd.f32 %v1713, %v2005
      %v2007 = vpop.f32.mrb[0].mxu0
      %2008 = vdwg.mxu0
      %v2009 = vmax.f32 %v1834, 0.0
      %v2010 = vmax.f32 %v1836, 0.0
      %v2011 = vmax.f32 %v1947, 0.0
      %v2012 = vmax.f32 %v1838, 0.0
      %v2013 = vmax.f32 %v1840, 0.0
      %v2014 = vmax.f32 %v1950, 0.0
      %v2015 = vmax.f32 %v1844, 0.0
      %v2016 = vmax.f32 %v1846, 0.0
      %v2017 = vmax.f32 %v1955, 0.0
      %v2018 = vmax.f32 %v1848, 0.0
      %v2019 = vmax.f32 %v1850, 0.0
      %v2020 = vmax.f32 %v1958, 0.0
      %v2021 = vmax.f32 %v1854, 0.0
      %v2022 = vmax.f32 %v1856, 0.0
      %v2023 = vmax.f32 %v1963, 0.0
      %v2024 = vmax.f32 %v1858, 0.0
      %v2025 = vmax.f32 %v1860, 0.0
      %v2026 = vmax.f32 %v1966, 0.0
      %v2027 = vmax.f32 %v1864, 0.0
      %v2028 = vmax.f32 %v1866, 0.0
      %v2029 = vmax.f32 %v1971, 0.0
      %v2030 = vmax.f32 %v1868, 0.0
      %v2031 = vmax.f32 %v1870, 0.0
      %v2032 = vmax.f32 %v1974, 0.0
      %v2033 = vmax.f32 %v1874, 0.0
      %v2034 = vmax.f32 %v1876, 0.0
      %v2035 = vmax.f32 %v1979, 0.0
      %v2036 = vmax.f32 %v1878, 0.0
      %v2037 = vmax.f32 %v1880, 0.0
      %v2038 = vmax.f32 %v1982, 0.0
      %v2039 = vmax.f32 %v1884, 0.0
      %v2040 = vmax.f32 %v1886, 0.0
      %v2041 = vmax.f32 %v1987, 0.0
      %v2042 = vmax.f32 %v1888, 0.0
      %v2043 = vmax.f32 %v1890, 0.0
      %v2044 = vmax.f32 %v1990, 0.0
      %v2045 = vmax.f32 %v1894, 0.0
      %v2046 = vmax.f32 %v1896, 0.0
      %v2047 = vmax.f32 %v1995, 0.0
      %v2048 = vmax.f32 %v1898, 0.0
      %v2049 = vmax.f32 %v1900, 0.0
      %v2050 = vmax.f32 %v1998, 0.0
      %v2051 = vmax.f32 %v1904, 0.0
      %v2052 = vmax.f32 %v1906, 0.0
      %v2053 = vmax.f32 %v2003, 0.0
      %v2054 = vmax.f32 %v1908, 0.0
      %v2055 = vmax.f32 %v1910, 0.0
      %v2056 = vmax.f32 %v2006, 0.0
      %v2057 = vmul.f32 %v2010, %v2011
      %v2058 = vmul.f32 %v2013, %v2014
      %v2059 = vmul.f32 %v2016, %v2017
      %v2060 = vmul.f32 %v2019, %v2020
      %v2061 = vmul.f32 %v2022, %v2023
      %v2062 = vmul.f32 %v2025, %v2026
      %v2063 = vmul.f32 %v2028, %v2029
      %v2064 = vmul.f32 %v2031, %v2032
      %v2065 = vmul.f32 %v2034, %v2035
      %v2066 = vmul.f32 %v2037, %v2038
      %v2067 = vmul.f32 %v2040, %v2041
      %v2068 = vmul.f32 %v2043, %v2044
      %v2069 = vmul.f32 %v2046, %v2047
      %v2070 = vmul.f32 %v2049, %v2050
      %v2071 = vmul.f32 %v2052, %v2053
      %v2072 = vmul.f32 %v2055, %v2056
      %v2073 = vpack.c.bf16 %v2058, %v2057
      %v2074 = vpack.c.bf16 %v2060, %v2059
      %v2075 = vpack.c.bf16 %v2062, %v2061
      %v2076 = vpack.c.bf16 %v2064, %v2063
      %v2077 = vpack.c.bf16 %v2066, %v2065
      %v2078 = vpack.c.bf16 %v2068, %v2067
      %v2079 = vpack.c.bf16 %v2070, %v2069
      %v2080 = vpack.c.bf16 %v2072, %v2071
      %v2081 = vld [vmem:[%s3] sm:$0xff]
      %v2082 = vld [vmem:[%s3 + $0x8] sm:$0xff]
      %v2083 = vld [vmem:[%s3 + $0x10] sm:$0xff]
      %v2084 = vld [vmem:[%s3 + $0x18] sm:$0xff]
      %v2085 = vld [vmem:[%s3 + $0x20] sm:$0xff]
      %v2086 = vld [vmem:[%s3 + $0x28] sm:$0xff]
      %v2087 = vld [vmem:[%s3 + $0x30] sm:$0xff]
      %v2088 = vld [vmem:[%s3 + $0x38] sm:$0xff]
      %v2089 = vld [vmem:[%s3 + $0x40] sm:$0xff]
      %v2090 = vld [vmem:[%s3 + $0x48] sm:$0xff]
      %v2091 = vld [vmem:[%s3 + $0x50] sm:$0x11]
      %v2103 = vunpack.c.l.b16 %v2081
      %v2104 = vunpack.c.h.b16 %v2081
      %v2105 = vunpack.c.l.b16 %v2082
      %v2106 = vunpack.c.h.b16 %v2082
      %v2107 = vunpack.c.l.b16 %v2083
      %v2108 = vunpack.c.h.b16 %v2083
      %v2109 = vunpack.c.l.b16 %v2084
      %v2110 = vunpack.c.h.b16 %v2084
      %v2111 = vunpack.c.l.b16 %v2085
      %v2112 = vunpack.c.h.b16 %v2085
      %v2113 = vunpack.c.l.b16 %v2086
      %v2114 = vunpack.c.h.b16 %v2086
      %v2115 = vunpack.c.l.b16 %v2087
      %v2116 = vunpack.c.h.b16 %v2087
      %v2117 = vunpack.c.l.b16 %v2088
      %v2118 = vunpack.c.h.b16 %v2088
      %v2119 = vunpack.c.l.b16 %v2089
      %v2120 = vunpack.c.h.b16 %v2089
      %v2121 = vunpack.c.l.b16 %v2090
      %v2122 = vunpack.c.h.b16 %v2090
      %v2123 = vunpack.c.l.b16 %v2091
      %v2124 = vunpack.c.h.b16 %v2091
      %v2125 = vpack.c.b16 %v2105, %v2103
      %v2126 = vpack.c.b16 %v2106, %v2104
      %v2127 = vpack.c.b16 %v2109, %v2107
      %v2128 = vpack.c.b16 %v2110, %v2108
      %v2129 = vpack.c.b16 %v2113, %v2111
      %v2130 = vpack.c.b16 %v2114, %v2112
      %v2131 = vpack.c.b16 %v2117, %v2115
      %v2132 = vpack.c.b16 %v2118, %v2116
      %v2133 = vpack.c.b16 %v2121, %v2119
      %v2134 = vpack.c.b16 %v2122, %v2120
      %v2135 = vpack.c.b16 %v2123, %v2123
      %v2136 = vpack.c.b16 %v2124, %v2124
      %vm2147 = vcmask 662528
      %v2149 = vsel %vm2147, %v2073, 0
      %v2152 = vsel %vm2147, %v2074, 0
      %v2155 = vsel %vm2147, %v2075, 0
      %v2158 = vsel %vm2147, %v2076, 0
      %v2161 = vsel %vm2147, %v2077, 0
      %v2164 = vsel %vm2147, %v2078, 0
      %v2167 = vsel %vm2147, %v2079, 0
      %v2170 = vsel %vm2147, %v2080, 0
      %vm2172 = vcmask 1040384
      %v2173 = vsel 0, 4294967295, 65535
      %v2174 = vsel %vm2172, %v2173, 0
      %v2176 = vand.u32 %v2135, %v2174
      %v2179 = vand.u32 %v2136, %v2174
      %2181 = vmatprep.subr.bf16.mxu0 %v2126
      %2182 = vmatpush1.bf16.msra.mxu0 %v2125
      %2183 = vmatprep.subr.bf16.mxu0 %v2128
      %2184 = vmatpush1.bf16.msra.mxu0 %v2127
      %2185 = vmatprep.subr.bf16.mxu0 %v2130
      %2186 = vmatpush1.bf16.msra.mxu0 %v2129
      %2187 = vmatprep.subr.bf16.mxu0 %v2132
      %2188 = vmatpush1.bf16.msra.mxu0 %v2131
      %2189 = vmatprep.subr.bf16.mxu0 %v2134
      %2190 = vmatpush1.bf16.msra.mxu0 %v2133
      %2191 = vmatprep.subr.bf16.mxu0 %v2179
      %2192 = vmatpush1.bf16.msra.mxu0 %v2176
      %2193 = vmatprep.subr.bf16.mxu0 0
      %2194 = vmatpush1.bf16.msra.mxu0 0
      %2195 = vmatprep.subr.bf16.mxu0 0
      %2196 = vmatpush1.bf16.msra.mxu0 0
      %2197 = vmatprep.subr.bf16.mxu0 0
      %2198 = vmatpush1.bf16.msra.mxu0 0
      %2199 = vmatprep.subr.bf16.mxu0 0
      %2200 = vmatpush1.bf16.msra.mxu0 0
      %2201 = vmatprep.subr.bf16.mxu0 0
      %2202 = vmatpush1.bf16.msra.mxu0 0
      %2203 = vmatprep.subr.bf16.mxu0 0
      %2204 = vmatpush1.bf16.msra.mxu0 0
      %2205 = vmatprep.subr.bf16.mxu0 0
      %2206 = vmatpush1.bf16.msra.mxu0 0
      %2207 = vmatprep.subr.bf16.mxu0 0
      %2208 = vmatpush1.bf16.msra.mxu0 0
      %2209 = vmatprep.subr.bf16.mxu0 0
      %2210 = vmatpush1.bf16.msra.mxu0 0
      %2211 = vmatprep.subr.bf16.mxu0 0
      %2212 = vmatpush1.bf16.msra.mxu0 0
      %2213 = vmatprep.mubr.bf16.mxu0 0
      %2214 = vmatmul.mubr.bf16.gmra.mrb[0].mxu0 %v2149
      %v2215 = vpop.f32.mrb[0].mxu0
      %v2216 = vadd.f32 0.0, %v2215
      %v2217 = vpop.f32.mrb[0].mxu0
      %v2218 = vadd.f32 0.0, %v2217
      %v2219 = vpop.f32.mrb[0].mxu0
      %v2220 = vadd.f32 0.0, %v2219
      %v2221 = vpop.f32.mrb[0].mxu0
      %v2222 = vadd.f32 0.0, %v2221
      %2223 = vmatprep.mubr.bf16.mxu0 0
      %2224 = vmatmul.mubr.bf16.gmra.mrb[0].mxu0 %v2152
      %v2225 = vpop.f32.mrb[0].mxu0
      %v2226 = vadd.f32 0.0, %v2225
      %v2227 = vpop.f32.mrb[0].mxu0
      %v2228 = vadd.f32 0.0, %v2227
      %v2229 = vpop.f32.mrb[0].mxu0
      %v2230 = vadd.f32 0.0, %v2229
      %v2231 = vpop.f32.mrb[0].mxu0
      %v2232 = vadd.f32 0.0, %v2231
      %2233 = vmatprep.mubr.bf16.mxu0 0
      %2234 = vmatmul.mubr.bf16.gmra.mrb[0].mxu0 %v2155
      %v2235 = vpop.f32.mrb[0].mxu0
      %v2236 = vadd.f32 0.0, %v2235
      %v2237 = vpop.f32.mrb[0].mxu0
      %v2238 = vadd.f32 0.0, %v2237
      %v2239 = vpop.f32.mrb[0].mxu0
      %v2240 = vadd.f32 0.0, %v2239
      %v2241 = vpop.f32.mrb[0].mxu0
      %v2242 = vadd.f32 0.0, %v2241
      %2243 = vmatprep.mubr.bf16.mxu0 0
      %2244 = vmatmul.mubr.bf16.gmra.mrb[0].mxu0 %v2158
      %v2245 = vpop.f32.mrb[0].mxu0
      %v2246 = vadd.f32 0.0, %v2245
      %v2247 = vpop.f32.mrb[0].mxu0
      %v2248 = vadd.f32 0.0, %v2247
      %v2249 = vpop.f32.mrb[0].mxu0
      %v2250 = vadd.f32 0.0, %v2249
      %v2251 = vpop.f32.mrb[0].mxu0
      %v2252 = vadd.f32 0.0, %v2251
      %2253 = vmatprep.mubr.bf16.mxu0 0
      %2254 = vmatmul.mubr.bf16.gmra.mrb[0].mxu0 %v2161
      %v2255 = vpop.f32.mrb[0].mxu0
      %v2256 = vadd.f32 0.0, %v2255
      %v2257 = vpop.f32.mrb[0].mxu0
      %v2258 = vadd.f32 0.0, %v2257
      %v2259 = vpop.f32.mrb[0].mxu0
      %v2260 = vadd.f32 0.0, %v2259
      %v2261 = vpop.f32.mrb[0].mxu0
      %v2262 = vadd.f32 0.0, %v2261
      %2263 = vmatprep.mubr.bf16.mxu0 0
      %2264 = vmatmul.mubr.bf16.gmra.mrb[0].mxu0 %v2164
      %v2265 = vpop.f32.mrb[0].mxu0
      %v2266 = vadd.f32 0.0, %v2265
      %v2267 = vpop.f32.mrb[0].mxu0
      %v2268 = vadd.f32 0.0, %v2267
      %v2269 = vpop.f32.mrb[0].mxu0
      %v2270 = vadd.f32 0.0, %v2269
      %v2271 = vpop.f32.mrb[0].mxu0
      %v2272 = vadd.f32 0.0, %v2271
      %2273 = vmatprep.mubr.bf16.mxu0 0
      %2274 = vmatmul.mubr.bf16.gmra.mrb[0].mxu0 %v2167
      %v2275 = vpop.f32.mrb[0].mxu0
      %v2276 = vadd.f32 0.0, %v2275
      %v2277 = vpop.f32.mrb[0].mxu0
      %v2278 = vadd.f32 0.0, %v2277
      %v2279 = vpop.f32.mrb[0].mxu0
      %v2280 = vadd.f32 0.0, %v2279
      %v2281 = vpop.f32.mrb[0].mxu0
      %v2282 = vadd.f32 0.0, %v2281
      %2283 = vmatprep.mubr.bf16.mxu0 0
      %2284 = vmatmul.mubr.bf16.gmra.mrb[0].mxu0 %v2170
      %v2285 = vpop.f32.mrb[0].mxu0
      %v2286 = vadd.f32 0.0, %v2285
      %v2287 = vpop.f32.mrb[0].mxu0
      %v2288 = vadd.f32 0.0, %v2287
      %v2289 = vpop.f32.mrb[0].mxu0
      %v2290 = vadd.f32 0.0, %v2289
      %v2291 = vpop.f32.mrb[0].mxu0
      %v2292 = vadd.f32 0.0, %v2291
      %2293 = vdwg.mxu0
      %v2294 = vld [vmem:[%s5 + $0x3] sm:$0x1]
      %v2296 = vlaneseq
      %v2297 = vshrl.u32 %v2296, 7
      %v2298 = vsub.s32 0, %v2297
      %v2299 = vrot.slane %v2294, %v2298
      %v2301 = vadd.f32 %v2218, %v2299
      %v2302 = vadd.f32 %v2222, %v2299
      %v2303 = vadd.f32 %v2228, %v2299
      %v2304 = vadd.f32 %v2232, %v2299
      %v2305 = vadd.f32 %v2238, %v2299
      %v2306 = vadd.f32 %v2242, %v2299
      %v2307 = vadd.f32 %v2248, %v2299
      %v2308 = vadd.f32 %v2252, %v2299
      %v2309 = vadd.f32 %v2258, %v2299
      %v2310 = vadd.f32 %v2262, %v2299
      %v2311 = vadd.f32 %v2268, %v2299
      %v2312 = vadd.f32 %v2272, %v2299
      %v2313 = vadd.f32 %v2278, %v2299
      %v2314 = vadd.f32 %v2282, %v2299
      %v2315 = vadd.f32 %v2288, %v2299
      %v2316 = vadd.f32 %v2292, %v2299
      %2318 = vset.pattern.permute.xlu0 0
      %2319 = vperm.xlu0 %2318, %v2009
      %v2320 = vpop.permute.xlu0 %2319
      %2323 = vset.pattern.permute.xlu0 0
      %2324 = vperm.xlu0 %2323, %v2012
      %v2325 = vpop.permute.xlu0 %2324
      %2328 = vset.pattern.permute.xlu0 0
      %2329 = vperm.xlu0 %2328, %v2015
      %v2330 = vpop.permute.xlu0 %2329
      %2333 = vset.pattern.permute.xlu0 0
      %2334 = vperm.xlu0 %2333, %v2018
      %v2335 = vpop.permute.xlu0 %2334
      %2338 = vset.pattern.permute.xlu0 0
      %2339 = vperm.xlu0 %2338, %v2021
      %v2340 = vpop.permute.xlu0 %2339
      %2343 = vset.pattern.permute.xlu0 0
      %2344 = vperm.xlu0 %2343, %v2024
      %v2345 = vpop.permute.xlu0 %2344
      %2348 = vset.pattern.permute.xlu0 0
      %2349 = vperm.xlu0 %2348, %v2027
      %v2350 = vpop.permute.xlu0 %2349
      %2353 = vset.pattern.permute.xlu0 0
      %2354 = vperm.xlu0 %2353, %v2030
      %v2355 = vpop.permute.xlu0 %2354
      %2358 = vset.pattern.permute.xlu0 0
      %2359 = vperm.xlu0 %2358, %v2033
      %v2360 = vpop.permute.xlu0 %2359
      %2363 = vset.pattern.permute.xlu0 0
      %2364 = vperm.xlu0 %2363, %v2036
      %v2365 = vpop.permute.xlu0 %2364
      %2368 = vset.pattern.permute.xlu0 0
      %2369 = vperm.xlu0 %2368, %v2039
      %v2370 = vpop.permute.xlu0 %2369
      %2373 = vset.pattern.permute.xlu0 0
      %2374 = vperm.xlu0 %2373, %v2042
      %v2375 = vpop.permute.xlu0 %2374
      %2378 = vset.pattern.permute.xlu0 0
      %2379 = vperm.xlu0 %2378, %v2045
      %v2380 = vpop.permute.xlu0 %2379
      %2383 = vset.pattern.permute.xlu0 0
      %2384 = vperm.xlu0 %2383, %v2048
      %v2385 = vpop.permute.xlu0 %2384
      %2388 = vset.pattern.permute.xlu0 0
      %2389 = vperm.xlu0 %2388, %v2051
      %v2390 = vpop.permute.xlu0 %2389
      %2393 = vset.pattern.permute.xlu0 0
      %2394 = vperm.xlu0 %2393, %v2054
      %v2395 = vpop.permute.xlu0 %2394
      %v2397 = vmul.f32 %v2320, %v2216
      %v2398 = vmul.f32 %v2325, %v2220
      %v2399 = vmul.f32 %v2330, %v2226
      %v2400 = vmul.f32 %v2335, %v2230
      %v2401 = vmul.f32 %v2340, %v2236
      %v2402 = vmul.f32 %v2345, %v2240
      %v2403 = vmul.f32 %v2350, %v2246
      %v2404 = vmul.f32 %v2355, %v2250
      %v2405 = vmul.f32 %v2360, %v2256
      %v2406 = vmul.f32 %v2365, %v2260
      %v2407 = vmul.f32 %v2370, %v2266
      %v2408 = vmul.f32 %v2375, %v2270
      %v2409 = vmul.f32 %v2380, %v2276
      %v2410 = vmul.f32 %v2385, %v2280
      %v2411 = vmul.f32 %v2390, %v2286
      %v2412 = vmul.f32 %v2395, %v2290
      %v2413 = vadd.f32 %v2301, %v2397
      %v2414 = vadd.f32 %v2302, %v2398
      %v2415 = vadd.f32 %v2303, %v2399
      %v2416 = vadd.f32 %v2304, %v2400
      %v2417 = vadd.f32 %v2305, %v2401
      %v2418 = vadd.f32 %v2306, %v2402
      %v2419 = vadd.f32 %v2307, %v2403
      %v2420 = vadd.f32 %v2308, %v2404
      %v2421 = vadd.f32 %v2309, %v2405
      %v2422 = vadd.f32 %v2310, %v2406
      %v2423 = vadd.f32 %v2311, %v2407
      %v2424 = vadd.f32 %v2312, %v2408
      %v2425 = vadd.f32 %v2313, %v2409
      %v2426 = vadd.f32 %v2314, %v2410
      %v2427 = vadd.f32 %v2315, %v2411
      %v2428 = vadd.f32 %v2316, %v2412
      %2429 = vset.pattern.permute.xlu0 1
      %2430 = vperm.xlu0 %2429, %v2009
      %v2431 = vpop.permute.xlu0 %2430
      %2433 = vset.pattern.permute.xlu0 1
      %2434 = vperm.xlu0 %2433, %v2012
      %v2435 = vpop.permute.xlu0 %2434
      %2437 = vset.pattern.permute.xlu0 1
      %2438 = vperm.xlu0 %2437, %v2015
      %v2439 = vpop.permute.xlu0 %2438
      %2441 = vset.pattern.permute.xlu0 1
      %2442 = vperm.xlu0 %2441, %v2018
      %v2443 = vpop.permute.xlu0 %2442
      %2445 = vset.pattern.permute.xlu0 1
      %2446 = vperm.xlu0 %2445, %v2021
      %v2447 = vpop.permute.xlu0 %2446
      %2449 = vset.pattern.permute.xlu0 1
      %2450 = vperm.xlu0 %2449, %v2024
      %v2451 = vpop.permute.xlu0 %2450
      %2453 = vset.pattern.permute.xlu0 1
      %2454 = vperm.xlu0 %2453, %v2027
      %v2455 = vpop.permute.xlu0 %2454
      %2457 = vset.pattern.permute.xlu0 1
      %2458 = vperm.xlu0 %2457, %v2030
      %v2459 = vpop.permute.xlu0 %2458
      %2461 = vset.pattern.permute.xlu0 1
      %2462 = vperm.xlu0 %2461, %v2033
      %v2463 = vpop.permute.xlu0 %2462
      %2465 = vset.pattern.permute.xlu0 1
      %2466 = vperm.xlu0 %2465, %v2036
      %v2467 = vpop.permute.xlu0 %2466
      %2469 = vset.pattern.permute.xlu0 1
      %2470 = vperm.xlu0 %2469, %v2039
      %v2471 = vpop.permute.xlu0 %2470
      %2473 = vset.pattern.permute.xlu0 1
      %2474 = vperm.xlu0 %2473, %v2042
      %v2475 = vpop.permute.xlu0 %2474
      %2477 = vset.pattern.permute.xlu0 1
      %2478 = vperm.xlu0 %2477, %v2045
      %v2479 = vpop.permute.xlu0 %2478
      %2481 = vset.pattern.permute.xlu0 1
      %2482 = vperm.xlu0 %2481, %v2048
      %v2483 = vpop.permute.xlu0 %2482
      %2485 = vset.pattern.permute.xlu0 1
      %2486 = vperm.xlu0 %2485, %v2051
      %v2487 = vpop.permute.xlu0 %2486
      %2489 = vset.pattern.permute.xlu0 1
      %2490 = vperm.xlu0 %2489, %v2054
      %v2491 = vpop.permute.xlu0 %2490
      %v2493 = vmul.f32 %v2431, %v2216
      %v2494 = vmul.f32 %v2435, %v2220
      %v2495 = vmul.f32 %v2439, %v2226
      %v2496 = vmul.f32 %v2443, %v2230
      %v2497 = vmul.f32 %v2447, %v2236
      %v2498 = vmul.f32 %v2451, %v2240
      %v2499 = vmul.f32 %v2455, %v2246
      %v2500 = vmul.f32 %v2459, %v2250
      %v2501 = vmul.f32 %v2463, %v2256
      %v2502 = vmul.f32 %v2467, %v2260
      %v2503 = vmul.f32 %v2471, %v2266
      %v2504 = vmul.f32 %v2475, %v2270
      %v2505 = vmul.f32 %v2479, %v2276
      %v2506 = vmul.f32 %v2483, %v2280
      %v2507 = vmul.f32 %v2487, %v2286
      %v2508 = vmul.f32 %v2491, %v2290
      %2525 = vrot.lane.b32.xlu0 %v2493, 112
      %v2526 = vpop.permute.xlu0 %2525
      %2527 = vrot.lane.b32.xlu0 %v2494, 112
      %v2528 = vpop.permute.xlu0 %2527
      %2529 = vrot.lane.b32.xlu0 %v2495, 112
      %v2530 = vpop.permute.xlu0 %2529
      %2531 = vrot.lane.b32.xlu0 %v2496, 112
      %v2532 = vpop.permute.xlu0 %2531
      %2533 = vrot.lane.b32.xlu0 %v2497, 112
      %v2534 = vpop.permute.xlu0 %2533
      %2535 = vrot.lane.b32.xlu0 %v2498, 112
      %v2536 = vpop.permute.xlu0 %2535
      %2537 = vrot.lane.b32.xlu0 %v2499, 112
      %v2538 = vpop.permute.xlu0 %2537
      %2539 = vrot.lane.b32.xlu0 %v2500, 112
      %v2540 = vpop.permute.xlu0 %2539
      %2541 = vrot.lane.b32.xlu0 %v2501, 112
      %v2542 = vpop.permute.xlu0 %2541
      %2543 = vrot.lane.b32.xlu0 %v2502, 112
      %v2544 = vpop.permute.xlu0 %2543
      %2545 = vrot.lane.b32.xlu0 %v2503, 112
      %v2546 = vpop.permute.xlu0 %2545
      %2547 = vrot.lane.b32.xlu0 %v2504, 112
      %v2548 = vpop.permute.xlu0 %2547
      %2549 = vrot.lane.b32.xlu0 %v2505, 112
      %v2550 = vpop.permute.xlu0 %2549
      %2551 = vrot.lane.b32.xlu0 %v2506, 112
      %v2552 = vpop.permute.xlu0 %2551
      %2553 = vrot.lane.b32.xlu0 %v2507, 112
      %v2554 = vpop.permute.xlu0 %2553
      %2555 = vrot.lane.b32.xlu0 %v2508, 112
      %v2556 = vpop.permute.xlu0 %2555
      %v2573 = vadd.f32 %v2413, %v2526
      %v2574 = vadd.f32 %v2414, %v2528
      %v2575 = vadd.f32 %v2415, %v2530
      %v2576 = vadd.f32 %v2416, %v2532
      %v2577 = vadd.f32 %v2417, %v2534
      %v2578 = vadd.f32 %v2418, %v2536
      %v2579 = vadd.f32 %v2419, %v2538
      %v2580 = vadd.f32 %v2420, %v2540
      %v2581 = vadd.f32 %v2421, %v2542
      %v2582 = vadd.f32 %v2422, %v2544
      %v2583 = vadd.f32 %v2423, %v2546
      %v2584 = vadd.f32 %v2424, %v2548
      %v2585 = vadd.f32 %v2425, %v2550
      %v2586 = vadd.f32 %v2426, %v2552
      %v2587 = vadd.f32 %v2427, %v2554
      %v2588 = vadd.f32 %v2428, %v2556
      %2589 = vset.pattern.permute.xlu0 2
      %2590 = vperm.xlu0 %2589, %v2009
      %v2591 = vpop.permute.xlu0 %2590
      %2593 = vset.pattern.permute.xlu0 2
      %2594 = vperm.xlu0 %2593, %v2012
      %v2595 = vpop.permute.xlu0 %2594
      %2597 = vset.pattern.permute.xlu0 2
      %2598 = vperm.xlu0 %2597, %v2015
      %v2599 = vpop.permute.xlu0 %2598
      %2601 = vset.pattern.permute.xlu0 2
      %2602 = vperm.xlu0 %2601, %v2018
      %v2603 = vpop.permute.xlu0 %2602
      %2605 = vset.pattern.permute.xlu0 2
      %2606 = vperm.xlu0 %2605, %v2021
      %v2607 = vpop.permute.xlu0 %2606
      %2609 = vset.pattern.permute.xlu0 2
      %2610 = vperm.xlu0 %2609, %v2024
      %v2611 = vpop.permute.xlu0 %2610
      %2613 = vset.pattern.permute.xlu0 2
      %2614 = vperm.xlu0 %2613, %v2027
      %v2615 = vpop.permute.xlu0 %2614
      %2617 = vset.pattern.permute.xlu0 2
      %2618 = vperm.xlu0 %2617, %v2030
      %v2619 = vpop.permute.xlu0 %2618
      %2621 = vset.pattern.permute.xlu0 2
      %2622 = vperm.xlu0 %2621, %v2033
      %v2623 = vpop.permute.xlu0 %2622
      %2625 = vset.pattern.permute.xlu0 2
      %2626 = vperm.xlu0 %2625, %v2036
      %v2627 = vpop.permute.xlu0 %2626
      %2629 = vset.pattern.permute.xlu0 2
      %2630 = vperm.xlu0 %2629, %v2039
      %v2631 = vpop.permute.xlu0 %2630
      %2633 = vset.pattern.permute.xlu0 2
      %2634 = vperm.xlu0 %2633, %v2042
      %v2635 = vpop.permute.xlu0 %2634
      %2637 = vset.pattern.permute.xlu0 2
      %2638 = vperm.xlu0 %2637, %v2045
      %v2639 = vpop.permute.xlu0 %2638
      %2641 = vset.pattern.permute.xlu0 2
      %2642 = vperm.xlu0 %2641, %v2048
      %v2643 = vpop.permute.xlu0 %2642
      %2645 = vset.pattern.permute.xlu0 2
      %2646 = vperm.xlu0 %2645, %v2051
      %v2647 = vpop.permute.xlu0 %2646
      %2649 = vset.pattern.permute.xlu0 2
      %2650 = vperm.xlu0 %2649, %v2054
      %v2651 = vpop.permute.xlu0 %2650
      %v2653 = vmul.f32 %v2591, %v2216
      %v2654 = vmul.f32 %v2595, %v2220
      %v2655 = vmul.f32 %v2599, %v2226
      %v2656 = vmul.f32 %v2603, %v2230
      %v2657 = vmul.f32 %v2607, %v2236
      %v2658 = vmul.f32 %v2611, %v2240
      %v2659 = vmul.f32 %v2615, %v2246
      %v2660 = vmul.f32 %v2619, %v2250
      %v2661 = vmul.f32 %v2623, %v2256
      %v2662 = vmul.f32 %v2627, %v2260
      %v2663 = vmul.f32 %v2631, %v2266
      %v2664 = vmul.f32 %v2635, %v2270
      %v2665 = vmul.f32 %v2639, %v2276
      %v2666 = vmul.f32 %v2643, %v2280
      %v2667 = vmul.f32 %v2647, %v2286
      %v2668 = vmul.f32 %v2651, %v2290
      %2685 = vrot.lane.b32.xlu0 %v2653, 96
      %v2686 = vpop.permute.xlu0 %2685
      %2687 = vrot.lane.b32.xlu0 %v2654, 96
      %v2688 = vpop.permute.xlu0 %2687
      %2689 = vrot.lane.b32.xlu0 %v2655, 96
      %v2690 = vpop.permute.xlu0 %2689
      %2691 = vrot.lane.b32.xlu0 %v2656, 96
      %v2692 = vpop.permute.xlu0 %2691
      %2693 = vrot.lane.b32.xlu0 %v2657, 96
      %v2694 = vpop.permute.xlu0 %2693
      %2695 = vrot.lane.b32.xlu0 %v2658, 96
      %v2696 = vpop.permute.xlu0 %2695
      %2697 = vrot.lane.b32.xlu0 %v2659, 96
      %v2698 = vpop.permute.xlu0 %2697
      %2699 = vrot.lane.b32.xlu0 %v2660, 96
      %v2700 = vpop.permute.xlu0 %2699
      %2701 = vrot.lane.b32.xlu0 %v2661, 96
      %v2702 = vpop.permute.xlu0 %2701
      %2703 = vrot.lane.b32.xlu0 %v2662, 96
      %v2704 = vpop.permute.xlu0 %2703
      %2705 = vrot.lane.b32.xlu0 %v2663, 96
      %v2706 = vpop.permute.xlu0 %2705
      %2707 = vrot.lane.b32.xlu0 %v2664, 96
      %v2708 = vpop.permute.xlu0 %2707
      %2709 = vrot.lane.b32.xlu0 %v2665, 96
      %v2710 = vpop.permute.xlu0 %2709
      %2711 = vrot.lane.b32.xlu0 %v2666, 96
      %v2712 = vpop.permute.xlu0 %2711
      %2713 = vrot.lane.b32.xlu0 %v2667, 96
      %v2714 = vpop.permute.xlu0 %2713
      %2715 = vrot.lane.b32.xlu0 %v2668, 96
      %v2716 = vpop.permute.xlu0 %2715
      %v2733 = vadd.f32 %v2573, %v2686
      %v2734 = vadd.f32 %v2574, %v2688
      %v2735 = vadd.f32 %v2575, %v2690
      %v2736 = vadd.f32 %v2576, %v2692
      %v2737 = vadd.f32 %v2577, %v2694
      %v2738 = vadd.f32 %v2578, %v2696
      %v2739 = vadd.f32 %v2579, %v2698
      %v2740 = vadd.f32 %v2580, %v2700
      %v2741 = vadd.f32 %v2581, %v2702
      %v2742 = vadd.f32 %v2582, %v2704
      %v2743 = vadd.f32 %v2583, %v2706
      %v2744 = vadd.f32 %v2584, %v2708
      %v2745 = vadd.f32 %v2585, %v2710
      %v2746 = vadd.f32 %v2586, %v2712
      %v2747 = vadd.f32 %v2587, %v2714
      %v2748 = vadd.f32 %v2588, %v2716
      %2749 = vset.pattern.permute.xlu0 3
      %2750 = vperm.xlu0 %2749, %v2009
      %v2751 = vpop.permute.xlu0 %2750
      %2753 = vset.pattern.permute.xlu0 3
      %2754 = vperm.xlu0 %2753, %v2012
      %v2755 = vpop.permute.xlu0 %2754
      %2757 = vset.pattern.permute.xlu0 3
      %2758 = vperm.xlu0 %2757, %v2015
      %v2759 = vpop.permute.xlu0 %2758
      %2761 = vset.pattern.permute.xlu0 3
      %2762 = vperm.xlu0 %2761, %v2018
      %v2763 = vpop.permute.xlu0 %2762
      %2765 = vset.pattern.permute.xlu0 3
      %2766 = vperm.xlu0 %2765, %v2021
      %v2767 = vpop.permute.xlu0 %2766
      %2769 = vset.pattern.permute.xlu0 3
      %2770 = vperm.xlu0 %2769, %v2024
      %v2771 = vpop.permute.xlu0 %2770
      %2773 = vset.pattern.permute.xlu0 3
      %2774 = vperm.xlu0 %2773, %v2027
      %v2775 = vpop.permute.xlu0 %2774
      %2777 = vset.pattern.permute.xlu0 3
      %2778 = vperm.xlu0 %2777, %v2030
      %v2779 = vpop.permute.xlu0 %2778
      %2781 = vset.pattern.permute.xlu0 3
      %2782 = vperm.xlu0 %2781, %v2033
      %v2783 = vpop.permute.xlu0 %2782
      %2785 = vset.pattern.permute.xlu0 3
      %2786 = vperm.xlu0 %2785, %v2036
      %v2787 = vpop.permute.xlu0 %2786
      %2789 = vset.pattern.permute.xlu0 3
      %2790 = vperm.xlu0 %2789, %v2039
      %v2791 = vpop.permute.xlu0 %2790
      %2793 = vset.pattern.permute.xlu0 3
      %2794 = vperm.xlu0 %2793, %v2042
      %v2795 = vpop.permute.xlu0 %2794
      %2797 = vset.pattern.permute.xlu0 3
      %2798 = vperm.xlu0 %2797, %v2045
      %v2799 = vpop.permute.xlu0 %2798
      %2801 = vset.pattern.permute.xlu0 3
      %2802 = vperm.xlu0 %2801, %v2048
      %v2803 = vpop.permute.xlu0 %2802
      %2805 = vset.pattern.permute.xlu0 3
      %2806 = vperm.xlu0 %2805, %v2051
      %v2807 = vpop.permute.xlu0 %2806
      %2809 = vset.pattern.permute.xlu0 3
      %2810 = vperm.xlu0 %2809, %v2054
      %v2811 = vpop.permute.xlu0 %2810
      %v2813 = vmul.f32 %v2751, %v2216
      %v2814 = vmul.f32 %v2755, %v2220
      %v2815 = vmul.f32 %v2759, %v2226
      %v2816 = vmul.f32 %v2763, %v2230
      %v2817 = vmul.f32 %v2767, %v2236
      %v2818 = vmul.f32 %v2771, %v2240
      %v2819 = vmul.f32 %v2775, %v2246
      %v2820 = vmul.f32 %v2779, %v2250
      %v2821 = vmul.f32 %v2783, %v2256
      %v2822 = vmul.f32 %v2787, %v2260
      %v2823 = vmul.f32 %v2791, %v2266
      %v2824 = vmul.f32 %v2795, %v2270
      %v2825 = vmul.f32 %v2799, %v2276
      %v2826 = vmul.f32 %v2803, %v2280
      %v2827 = vmul.f32 %v2807, %v2286
      %v2828 = vmul.f32 %v2811, %v2290
      %2845 = vrot.lane.b32.xlu0 %v2813, 80
      %v2846 = vpop.permute.xlu0 %2845
      %2847 = vrot.lane.b32.xlu0 %v2814, 80
      %v2848 = vpop.permute.xlu0 %2847
      %2849 = vrot.lane.b32.xlu0 %v2815, 80
      %v2850 = vpop.permute.xlu0 %2849
      %2851 = vrot.lane.b32.xlu0 %v2816, 80
      %v2852 = vpop.permute.xlu0 %2851
      %2853 = vrot.lane.b32.xlu0 %v2817, 80
      %v2854 = vpop.permute.xlu0 %2853
      %2855 = vrot.lane.b32.xlu0 %v2818, 80
      %v2856 = vpop.permute.xlu0 %2855
      %2857 = vrot.lane.b32.xlu0 %v2819, 80
      %v2858 = vpop.permute.xlu0 %2857
      %2859 = vrot.lane.b32.xlu0 %v2820, 80
      %v2860 = vpop.permute.xlu0 %2859
      %2861 = vrot.lane.b32.xlu0 %v2821, 80
      %v2862 = vpop.permute.xlu0 %2861
      %2863 = vrot.lane.b32.xlu0 %v2822, 80
      %v2864 = vpop.permute.xlu0 %2863
      %2865 = vrot.lane.b32.xlu0 %v2823, 80
      %v2866 = vpop.permute.xlu0 %2865
      %2867 = vrot.lane.b32.xlu0 %v2824, 80
      %v2868 = vpop.permute.xlu0 %2867
      %2869 = vrot.lane.b32.xlu0 %v2825, 80
      %v2870 = vpop.permute.xlu0 %2869
      %2871 = vrot.lane.b32.xlu0 %v2826, 80
      %v2872 = vpop.permute.xlu0 %2871
      %2873 = vrot.lane.b32.xlu0 %v2827, 80
      %v2874 = vpop.permute.xlu0 %2873
      %2875 = vrot.lane.b32.xlu0 %v2828, 80
      %v2876 = vpop.permute.xlu0 %2875
      %v2893 = vadd.f32 %v2733, %v2846
      %v2894 = vadd.f32 %v2734, %v2848
      %v2895 = vadd.f32 %v2735, %v2850
      %v2896 = vadd.f32 %v2736, %v2852
      %v2897 = vadd.f32 %v2737, %v2854
      %v2898 = vadd.f32 %v2738, %v2856
      %v2899 = vadd.f32 %v2739, %v2858
      %v2900 = vadd.f32 %v2740, %v2860
      %v2901 = vadd.f32 %v2741, %v2862
      %v2902 = vadd.f32 %v2742, %v2864
      %v2903 = vadd.f32 %v2743, %v2866
      %v2904 = vadd.f32 %v2744, %v2868
      %v2905 = vadd.f32 %v2745, %v2870
      %v2906 = vadd.f32 %v2746, %v2872
      %v2907 = vadd.f32 %v2747, %v2874
      %v2908 = vadd.f32 %v2748, %v2876
      %2909 = vset.pattern.permute.xlu0 4
      %2910 = vperm.xlu0 %2909, %v2009
      %v2911 = vpop.permute.xlu0 %2910
      %2913 = vset.pattern.permute.xlu0 4
      %2914 = vperm.xlu0 %2913, %v2012
      %v2915 = vpop.permute.xlu0 %2914
      %2917 = vset.pattern.permute.xlu0 4
      %2918 = vperm.xlu0 %2917, %v2015
      %v2919 = vpop.permute.xlu0 %2918
      %2921 = vset.pattern.permute.xlu0 4
      %2922 = vperm.xlu0 %2921, %v2018
      %v2923 = vpop.permute.xlu0 %2922
      %2925 = vset.pattern.permute.xlu0 4
      %2926 = vperm.xlu0 %2925, %v2021
      %v2927 = vpop.permute.xlu0 %2926
      %2929 = vset.pattern.permute.xlu0 4
      %2930 = vperm.xlu0 %2929, %v2024
      %v2931 = vpop.permute.xlu0 %2930
      %2933 = vset.pattern.permute.xlu0 4
      %2934 = vperm.xlu0 %2933, %v2027
      %v2935 = vpop.permute.xlu0 %2934
      %2937 = vset.pattern.permute.xlu0 4
      %2938 = vperm.xlu0 %2937, %v2030
      %v2939 = vpop.permute.xlu0 %2938
      %2941 = vset.pattern.permute.xlu0 4
      %2942 = vperm.xlu0 %2941, %v2033
      %v2943 = vpop.permute.xlu0 %2942
      %2945 = vset.pattern.permute.xlu0 4
      %2946 = vperm.xlu0 %2945, %v2036
      %v2947 = vpop.permute.xlu0 %2946
      %2949 = vset.pattern.permute.xlu0 4
      %2950 = vperm.xlu0 %2949, %v2039
      %v2951 = vpop.permute.xlu0 %2950
      %2953 = vset.pattern.permute.xlu0 4
      %2954 = vperm.xlu0 %2953, %v2042
      %v2955 = vpop.permute.xlu0 %2954
      %2957 = vset.pattern.permute.xlu0 4
      %2958 = vperm.xlu0 %2957, %v2045
      %v2959 = vpop.permute.xlu0 %2958
      %2961 = vset.pattern.permute.xlu0 4
      %2962 = vperm.xlu0 %2961, %v2048
      %v2963 = vpop.permute.xlu0 %2962
      %2965 = vset.pattern.permute.xlu0 4
      %2966 = vperm.xlu0 %2965, %v2051
      %v2967 = vpop.permute.xlu0 %2966
      %2969 = vset.pattern.permute.xlu0 4
      %2970 = vperm.xlu0 %2969, %v2054
      %v2971 = vpop.permute.xlu0 %2970
      %v2973 = vmul.f32 %v2911, %v2216
      %v2974 = vmul.f32 %v2915, %v2220
      %v2975 = vmul.f32 %v2919, %v2226
      %v2976 = vmul.f32 %v2923, %v2230
      %v2977 = vmul.f32 %v2927, %v2236
      %v2978 = vmul.f32 %v2931, %v2240
      %v2979 = vmul.f32 %v2935, %v2246
      %v2980 = vmul.f32 %v2939, %v2250
      %v2981 = vmul.f32 %v2943, %v2256
      %v2982 = vmul.f32 %v2947, %v2260
      %v2983 = vmul.f32 %v2951, %v2266
      %v2984 = vmul.f32 %v2955, %v2270
      %v2985 = vmul.f32 %v2959, %v2276
      %v2986 = vmul.f32 %v2963, %v2280
      %v2987 = vmul.f32 %v2967, %v2286
      %v2988 = vmul.f32 %v2971, %v2290
      %3005 = vrot.lane.b32.xlu0 %v2973, 64
      %v3006 = vpop.permute.xlu0 %3005
      %3007 = vrot.lane.b32.xlu0 %v2974, 64
      %v3008 = vpop.permute.xlu0 %3007
      %3009 = vrot.lane.b32.xlu0 %v2975, 64
      %v3010 = vpop.permute.xlu0 %3009
      %3011 = vrot.lane.b32.xlu0 %v2976, 64
      %v3012 = vpop.permute.xlu0 %3011
      %3013 = vrot.lane.b32.xlu0 %v2977, 64
      %v3014 = vpop.permute.xlu0 %3013
      %3015 = vrot.lane.b32.xlu0 %v2978, 64
      %v3016 = vpop.permute.xlu0 %3015
      %3017 = vrot.lane.b32.xlu0 %v2979, 64
      %v3018 = vpop.permute.xlu0 %3017
      %3019 = vrot.lane.b32.xlu0 %v2980, 64
      %v3020 = vpop.permute.xlu0 %3019
      %3021 = vrot.lane.b32.xlu0 %v2981, 64
      %v3022 = vpop.permute.xlu0 %3021
      %3023 = vrot.lane.b32.xlu0 %v2982, 64
      %v3024 = vpop.permute.xlu0 %3023
      %3025 = vrot.lane.b32.xlu0 %v2983, 64
      %v3026 = vpop.permute.xlu0 %3025
      %3027 = vrot.lane.b32.xlu0 %v2984, 64
      %v3028 = vpop.permute.xlu0 %3027
      %3029 = vrot.lane.b32.xlu0 %v2985, 64
      %v3030 = vpop.permute.xlu0 %3029
      %3031 = vrot.lane.b32.xlu0 %v2986, 64
      %v3032 = vpop.permute.xlu0 %3031
      %3033 = vrot.lane.b32.xlu0 %v2987, 64
      %v3034 = vpop.permute.xlu0 %3033
      %3035 = vrot.lane.b32.xlu0 %v2988, 64
      %v3036 = vpop.permute.xlu0 %3035
      %v3053 = vadd.f32 %v2893, %v3006
      %v3054 = vadd.f32 %v2894, %v3008
      %v3055 = vadd.f32 %v2895, %v3010
      %v3056 = vadd.f32 %v2896, %v3012
      %v3057 = vadd.f32 %v2897, %v3014
      %v3058 = vadd.f32 %v2898, %v3016
      %v3059 = vadd.f32 %v2899, %v3018
      %v3060 = vadd.f32 %v2900, %v3020
      %v3061 = vadd.f32 %v2901, %v3022
      %v3062 = vadd.f32 %v2902, %v3024
      %v3063 = vadd.f32 %v2903, %v3026
      %v3064 = vadd.f32 %v2904, %v3028
      %v3065 = vadd.f32 %v2905, %v3030
      %v3066 = vadd.f32 %v2906, %v3032
      %v3067 = vadd.f32 %v2907, %v3034
      %v3068 = vadd.f32 %v2908, %v3036
      %3069 = vset.pattern.permute.xlu0 5
      %3070 = vperm.xlu0 %3069, %v2009
      %v3071 = vpop.permute.xlu0 %3070
      %3073 = vset.pattern.permute.xlu0 5
      %3074 = vperm.xlu0 %3073, %v2012
      %v3075 = vpop.permute.xlu0 %3074
      %3077 = vset.pattern.permute.xlu0 5
      %3078 = vperm.xlu0 %3077, %v2015
      %v3079 = vpop.permute.xlu0 %3078
      %3081 = vset.pattern.permute.xlu0 5
      %3082 = vperm.xlu0 %3081, %v2018
      %v3083 = vpop.permute.xlu0 %3082
      %3085 = vset.pattern.permute.xlu0 5
      %3086 = vperm.xlu0 %3085, %v2021
      %v3087 = vpop.permute.xlu0 %3086
      %3089 = vset.pattern.permute.xlu0 5
      %3090 = vperm.xlu0 %3089, %v2024
      %v3091 = vpop.permute.xlu0 %3090
      %3093 = vset.pattern.permute.xlu0 5
      %3094 = vperm.xlu0 %3093, %v2027
      %v3095 = vpop.permute.xlu0 %3094
      %3097 = vset.pattern.permute.xlu0 5
      %3098 = vperm.xlu0 %3097, %v2030
      %v3099 = vpop.permute.xlu0 %3098
      %3101 = vset.pattern.permute.xlu0 5
      %3102 = vperm.xlu0 %3101, %v2033
      %v3103 = vpop.permute.xlu0 %3102
      %3105 = vset.pattern.permute.xlu0 5
      %3106 = vperm.xlu0 %3105, %v2036
      %v3107 = vpop.permute.xlu0 %3106
      %3109 = vset.pattern.permute.xlu0 5
      %3110 = vperm.xlu0 %3109, %v2039
      %v3111 = vpop.permute.xlu0 %3110
      %3113 = vset.pattern.permute.xlu0 5
      %3114 = vperm.xlu0 %3113, %v2042
      %v3115 = vpop.permute.xlu0 %3114
      %3117 = vset.pattern.permute.xlu0 5
      %3118 = vperm.xlu0 %3117, %v2045
      %v3119 = vpop.permute.xlu0 %3118
      %3121 = vset.pattern.permute.xlu0 5
      %3122 = vperm.xlu0 %3121, %v2048
      %v3123 = vpop.permute.xlu0 %3122
      %3125 = vset.pattern.permute.xlu0 5
      %3126 = vperm.xlu0 %3125, %v2051
      %v3127 = vpop.permute.xlu0 %3126
      %3129 = vset.pattern.permute.xlu0 5
      %3130 = vperm.xlu0 %3129, %v2054
      %v3131 = vpop.permute.xlu0 %3130
      %v3133 = vmul.f32 %v3071, %v2216
      %v3134 = vmul.f32 %v3075, %v2220
      %v3135 = vmul.f32 %v3079, %v2226
      %v3136 = vmul.f32 %v3083, %v2230
      %v3137 = vmul.f32 %v3087, %v2236
      %v3138 = vmul.f32 %v3091, %v2240
      %v3139 = vmul.f32 %v3095, %v2246
      %v3140 = vmul.f32 %v3099, %v2250
      %v3141 = vmul.f32 %v3103, %v2256
      %v3142 = vmul.f32 %v3107, %v2260
      %v3143 = vmul.f32 %v3111, %v2266
      %v3144 = vmul.f32 %v3115, %v2270
      %v3145 = vmul.f32 %v3119, %v2276
      %v3146 = vmul.f32 %v3123, %v2280
      %v3147 = vmul.f32 %v3127, %v2286
      %v3148 = vmul.f32 %v3131, %v2290
      %3165 = vrot.lane.b32.xlu0 %v3133, 48
      %v3166 = vpop.permute.xlu0 %3165
      %3167 = vrot.lane.b32.xlu0 %v3134, 48
      %v3168 = vpop.permute.xlu0 %3167
      %3169 = vrot.lane.b32.xlu0 %v3135, 48
      %v3170 = vpop.permute.xlu0 %3169
      %3171 = vrot.lane.b32.xlu0 %v3136, 48
      %v3172 = vpop.permute.xlu0 %3171
      %3173 = vrot.lane.b32.xlu0 %v3137, 48
      %v3174 = vpop.permute.xlu0 %3173
      %3175 = vrot.lane.b32.xlu0 %v3138, 48
      %v3176 = vpop.permute.xlu0 %3175
      %3177 = vrot.lane.b32.xlu0 %v3139, 48
      %v3178 = vpop.permute.xlu0 %3177
      %3179 = vrot.lane.b32.xlu0 %v3140, 48
      %v3180 = vpop.permute.xlu0 %3179
      %3181 = vrot.lane.b32.xlu0 %v3141, 48
      %v3182 = vpop.permute.xlu0 %3181
      %3183 = vrot.lane.b32.xlu0 %v3142, 48
      %v3184 = vpop.permute.xlu0 %3183
      %3185 = vrot.lane.b32.xlu0 %v3143, 48
      %v3186 = vpop.permute.xlu0 %3185
      %3187 = vrot.lane.b32.xlu0 %v3144, 48
      %v3188 = vpop.permute.xlu0 %3187
      %3189 = vrot.lane.b32.xlu0 %v3145, 48
      %v3190 = vpop.permute.xlu0 %3189
      %3191 = vrot.lane.b32.xlu0 %v3146, 48
      %v3192 = vpop.permute.xlu0 %3191
      %3193 = vrot.lane.b32.xlu0 %v3147, 48
      %v3194 = vpop.permute.xlu0 %3193
      %3195 = vrot.lane.b32.xlu0 %v3148, 48
      %v3196 = vpop.permute.xlu0 %3195
      %v3213 = vadd.f32 %v3053, %v3166
      %v3214 = vadd.f32 %v3054, %v3168
      %v3215 = vadd.f32 %v3055, %v3170
      %v3216 = vadd.f32 %v3056, %v3172
      %v3217 = vadd.f32 %v3057, %v3174
      %v3218 = vadd.f32 %v3058, %v3176
      %v3219 = vadd.f32 %v3059, %v3178
      %v3220 = vadd.f32 %v3060, %v3180
      %v3221 = vadd.f32 %v3061, %v3182
      %v3222 = vadd.f32 %v3062, %v3184
      %v3223 = vadd.f32 %v3063, %v3186
      %v3224 = vadd.f32 %v3064, %v3188
      %v3225 = vadd.f32 %v3065, %v3190
      %v3226 = vadd.f32 %v3066, %v3192
      %v3227 = vadd.f32 %v3067, %v3194
      %v3228 = vadd.f32 %v3068, %v3196
      %3229 = vset.pattern.permute.xlu0 6
      %3230 = vperm.xlu0 %3229, %v2009
      %v3231 = vpop.permute.xlu0 %3230
      %3233 = vset.pattern.permute.xlu0 6
      %3234 = vperm.xlu0 %3233, %v2012
      %v3235 = vpop.permute.xlu0 %3234
      %3237 = vset.pattern.permute.xlu0 6
      %3238 = vperm.xlu0 %3237, %v2015
      %v3239 = vpop.permute.xlu0 %3238
      %3241 = vset.pattern.permute.xlu0 6
      %3242 = vperm.xlu0 %3241, %v2018
      %v3243 = vpop.permute.xlu0 %3242
      %3245 = vset.pattern.permute.xlu0 6
      %3246 = vperm.xlu0 %3245, %v2021
      %v3247 = vpop.permute.xlu0 %3246
      %3249 = vset.pattern.permute.xlu0 6
      %3250 = vperm.xlu0 %3249, %v2024
      %v3251 = vpop.permute.xlu0 %3250
      %3253 = vset.pattern.permute.xlu0 6
      %3254 = vperm.xlu0 %3253, %v2027
      %v3255 = vpop.permute.xlu0 %3254
      %3257 = vset.pattern.permute.xlu0 6
      %3258 = vperm.xlu0 %3257, %v2030
      %v3259 = vpop.permute.xlu0 %3258
      %3261 = vset.pattern.permute.xlu0 6
      %3262 = vperm.xlu0 %3261, %v2033
      %v3263 = vpop.permute.xlu0 %3262
      %3265 = vset.pattern.permute.xlu0 6
      %3266 = vperm.xlu0 %3265, %v2036
      %v3267 = vpop.permute.xlu0 %3266
      %3269 = vset.pattern.permute.xlu0 6
      %3270 = vperm.xlu0 %3269, %v2039
      %v3271 = vpop.permute.xlu0 %3270
      %3273 = vset.pattern.permute.xlu0 6
      %3274 = vperm.xlu0 %3273, %v2042
      %v3275 = vpop.permute.xlu0 %3274
      %3277 = vset.pattern.permute.xlu0 6
      %3278 = vperm.xlu0 %3277, %v2045
      %v3279 = vpop.permute.xlu0 %3278
      %3281 = vset.pattern.permute.xlu0 6
      %3282 = vperm.xlu0 %3281, %v2048
      %v3283 = vpop.permute.xlu0 %3282
      %3285 = vset.pattern.permute.xlu0 6
      %3286 = vperm.xlu0 %3285, %v2051
      %v3287 = vpop.permute.xlu0 %3286
      %3289 = vset.pattern.permute.xlu0 6
      %3290 = vperm.xlu0 %3289, %v2054
      %v3291 = vpop.permute.xlu0 %3290
      %v3293 = vmul.f32 %v3231, %v2216
      %v3294 = vmul.f32 %v3235, %v2220
      %v3295 = vmul.f32 %v3239, %v2226
      %v3296 = vmul.f32 %v3243, %v2230
      %v3297 = vmul.f32 %v3247, %v2236
      %v3298 = vmul.f32 %v3251, %v2240
      %v3299 = vmul.f32 %v3255, %v2246
      %v3300 = vmul.f32 %v3259, %v2250
      %v3301 = vmul.f32 %v3263, %v2256
      %v3302 = vmul.f32 %v3267, %v2260
      %v3303 = vmul.f32 %v3271, %v2266
      %v3304 = vmul.f32 %v3275, %v2270
      %v3305 = vmul.f32 %v3279, %v2276
      %v3306 = vmul.f32 %v3283, %v2280
      %v3307 = vmul.f32 %v3287, %v2286
      %v3308 = vmul.f32 %v3291, %v2290
      %3325 = vrot.lane.b32.xlu0 %v3293, 32
      %v3326 = vpop.permute.xlu0 %3325
      %3327 = vrot.lane.b32.xlu0 %v3294, 32
      %v3328 = vpop.permute.xlu0 %3327
      %3329 = vrot.lane.b32.xlu0 %v3295, 32
      %v3330 = vpop.permute.xlu0 %3329
      %3331 = vrot.lane.b32.xlu0 %v3296, 32
      %v3332 = vpop.permute.xlu0 %3331
      %3333 = vrot.lane.b32.xlu0 %v3297, 32
      %v3334 = vpop.permute.xlu0 %3333
      %3335 = vrot.lane.b32.xlu0 %v3298, 32
      %v3336 = vpop.permute.xlu0 %3335
      %3337 = vrot.lane.b32.xlu0 %v3299, 32
      %v3338 = vpop.permute.xlu0 %3337
      %3339 = vrot.lane.b32.xlu0 %v3300, 32
      %v3340 = vpop.permute.xlu0 %3339
      %3341 = vrot.lane.b32.xlu0 %v3301, 32
      %v3342 = vpop.permute.xlu0 %3341
      %3343 = vrot.lane.b32.xlu0 %v3302, 32
      %v3344 = vpop.permute.xlu0 %3343
      %3345 = vrot.lane.b32.xlu0 %v3303, 32
      %v3346 = vpop.permute.xlu0 %3345
      %3347 = vrot.lane.b32.xlu0 %v3304, 32
      %v3348 = vpop.permute.xlu0 %3347
      %3349 = vrot.lane.b32.xlu0 %v3305, 32
      %v3350 = vpop.permute.xlu0 %3349
      %3351 = vrot.lane.b32.xlu0 %v3306, 32
      %v3352 = vpop.permute.xlu0 %3351
      %3353 = vrot.lane.b32.xlu0 %v3307, 32
      %v3354 = vpop.permute.xlu0 %3353
      %3355 = vrot.lane.b32.xlu0 %v3308, 32
      %v3356 = vpop.permute.xlu0 %3355
      %v3373 = vadd.f32 %v3213, %v3326
      %v3374 = vadd.f32 %v3214, %v3328
      %v3375 = vadd.f32 %v3215, %v3330
      %v3376 = vadd.f32 %v3216, %v3332
      %v3377 = vadd.f32 %v3217, %v3334
      %v3378 = vadd.f32 %v3218, %v3336
      %v3379 = vadd.f32 %v3219, %v3338
      %v3380 = vadd.f32 %v3220, %v3340
      %v3381 = vadd.f32 %v3221, %v3342
      %v3382 = vadd.f32 %v3222, %v3344
      %v3383 = vadd.f32 %v3223, %v3346
      %v3384 = vadd.f32 %v3224, %v3348
      %v3385 = vadd.f32 %v3225, %v3350
      %v3386 = vadd.f32 %v3226, %v3352
      %v3387 = vadd.f32 %v3227, %v3354
      %v3388 = vadd.f32 %v3228, %v3356
      %3389 = vset.pattern.permute.xlu0 7
      %3390 = vperm.xlu0 %3389, %v2009
      %v3391 = vpop.permute.xlu0 %3390
      %3393 = vset.pattern.permute.xlu0 7
      %3394 = vperm.xlu0 %3393, %v2012
      %v3395 = vpop.permute.xlu0 %3394
      %3397 = vset.pattern.permute.xlu0 7
      %3398 = vperm.xlu0 %3397, %v2015
      %v3399 = vpop.permute.xlu0 %3398
      %3401 = vset.pattern.permute.xlu0 7
      %3402 = vperm.xlu0 %3401, %v2018
      %v3403 = vpop.permute.xlu0 %3402
      %3405 = vset.pattern.permute.xlu0 7
      %3406 = vperm.xlu0 %3405, %v2021
      %v3407 = vpop.permute.xlu0 %3406
      %3409 = vset.pattern.permute.xlu0 7
      %3410 = vperm.xlu0 %3409, %v2024
      %v3411 = vpop.permute.xlu0 %3410
      %3413 = vset.pattern.permute.xlu0 7
      %3414 = vperm.xlu0 %3413, %v2027
      %v3415 = vpop.permute.xlu0 %3414
      %3417 = vset.pattern.permute.xlu0 7
      %3418 = vperm.xlu0 %3417, %v2030
      %v3419 = vpop.permute.xlu0 %3418
      %3421 = vset.pattern.permute.xlu0 7
      %3422 = vperm.xlu0 %3421, %v2033
      %v3423 = vpop.permute.xlu0 %3422
      %3425 = vset.pattern.permute.xlu0 7
      %3426 = vperm.xlu0 %3425, %v2036
      %v3427 = vpop.permute.xlu0 %3426
      %3429 = vset.pattern.permute.xlu0 7
      %3430 = vperm.xlu0 %3429, %v2039
      %v3431 = vpop.permute.xlu0 %3430
      %3433 = vset.pattern.permute.xlu0 7
      %3434 = vperm.xlu0 %3433, %v2042
      %v3435 = vpop.permute.xlu0 %3434
      %3437 = vset.pattern.permute.xlu0 7
      %3438 = vperm.xlu0 %3437, %v2045
      %v3439 = vpop.permute.xlu0 %3438
      %3441 = vset.pattern.permute.xlu0 7
      %3442 = vperm.xlu0 %3441, %v2048
      %v3443 = vpop.permute.xlu0 %3442
      %3445 = vset.pattern.permute.xlu0 7
      %3446 = vperm.xlu0 %3445, %v2051
      %v3447 = vpop.permute.xlu0 %3446
      %3449 = vset.pattern.permute.xlu0 7
      %3450 = vperm.xlu0 %3449, %v2054
      %v3451 = vpop.permute.xlu0 %3450
      %v3453 = vmul.f32 %v3391, %v2216
      %v3454 = vmul.f32 %v3395, %v2220
      %v3455 = vmul.f32 %v3399, %v2226
      %v3456 = vmul.f32 %v3403, %v2230
      %v3457 = vmul.f32 %v3407, %v2236
      %v3458 = vmul.f32 %v3411, %v2240
      %v3459 = vmul.f32 %v3415, %v2246
      %v3460 = vmul.f32 %v3419, %v2250
      %v3461 = vmul.f32 %v3423, %v2256
      %v3462 = vmul.f32 %v3427, %v2260
      %v3463 = vmul.f32 %v3431, %v2266
      %v3464 = vmul.f32 %v3435, %v2270
      %v3465 = vmul.f32 %v3439, %v2276
      %v3466 = vmul.f32 %v3443, %v2280
      %v3467 = vmul.f32 %v3447, %v2286
      %v3468 = vmul.f32 %v3451, %v2290
      %3485 = vrot.lane.b32.xlu0 %v3453, 16
      %v3486 = vpop.permute.xlu0 %3485
      %3487 = vrot.lane.b32.xlu0 %v3454, 16
      %v3488 = vpop.permute.xlu0 %3487
      %3489 = vrot.lane.b32.xlu0 %v3455, 16
      %v3490 = vpop.permute.xlu0 %3489
      %3491 = vrot.lane.b32.xlu0 %v3456, 16
      %v3492 = vpop.permute.xlu0 %3491
      %3493 = vrot.lane.b32.xlu0 %v3457, 16
      %v3494 = vpop.permute.xlu0 %3493
      %3495 = vrot.lane.b32.xlu0 %v3458, 16
      %v3496 = vpop.permute.xlu0 %3495
      %3497 = vrot.lane.b32.xlu0 %v3459, 16
      %v3498 = vpop.permute.xlu0 %3497
      %3499 = vrot.lane.b32.xlu0 %v3460, 16
      %v3500 = vpop.permute.xlu0 %3499
      %3501 = vrot.lane.b32.xlu0 %v3461, 16
      %v3502 = vpop.permute.xlu0 %3501
      %3503 = vrot.lane.b32.xlu0 %v3462, 16
      %v3504 = vpop.permute.xlu0 %3503
      %3505 = vrot.lane.b32.xlu0 %v3463, 16
      %v3506 = vpop.permute.xlu0 %3505
      %3507 = vrot.lane.b32.xlu0 %v3464, 16
      %v3508 = vpop.permute.xlu0 %3507
      %3509 = vrot.lane.b32.xlu0 %v3465, 16
      %v3510 = vpop.permute.xlu0 %3509
      %3511 = vrot.lane.b32.xlu0 %v3466, 16
      %v3512 = vpop.permute.xlu0 %3511
      %3513 = vrot.lane.b32.xlu0 %v3467, 16
      %v3514 = vpop.permute.xlu0 %3513
      %3515 = vrot.lane.b32.xlu0 %v3468, 16
      %v3516 = vpop.permute.xlu0 %3515
      %v3533 = vadd.f32 %v3373, %v3486
      %v3534 = vadd.f32 %v3374, %v3488
      %v3535 = vadd.f32 %v3375, %v3490
      %v3536 = vadd.f32 %v3376, %v3492
      %v3537 = vadd.f32 %v3377, %v3494
      %v3538 = vadd.f32 %v3378, %v3496
      %v3539 = vadd.f32 %v3379, %v3498
      %v3540 = vadd.f32 %v3380, %v3500
      %v3541 = vadd.f32 %v3381, %v3502
      %v3542 = vadd.f32 %v3382, %v3504
      %v3543 = vadd.f32 %v3383, %v3506
      %v3544 = vadd.f32 %v3384, %v3508
      %v3545 = vadd.f32 %v3385, %v3510
      %v3546 = vadd.f32 %v3386, %v3512
      %v3547 = vadd.f32 %v3387, %v3514
      %v3548 = vadd.f32 %v3388, %v3516
      %v3549 = vmax.f32 %v3533, 0.0
      %v3550 = vmax.f32 %v3534, 0.0
      %v3551 = vmax.f32 %v3535, 0.0
      %v3552 = vmax.f32 %v3536, 0.0
      %v3553 = vmax.f32 %v3537, 0.0
      %v3554 = vmax.f32 %v3538, 0.0
      %v3555 = vmax.f32 %v3539, 0.0
      %v3556 = vmax.f32 %v3540, 0.0
      %v3557 = vmax.f32 %v3541, 0.0
      %v3558 = vmax.f32 %v3542, 0.0
      %v3559 = vmax.f32 %v3543, 0.0
      %v3560 = vmax.f32 %v3544, 0.0
      %v3561 = vmax.f32 %v3545, 0.0
      %v3562 = vmax.f32 %v3546, 0.0
      %v3563 = vmax.f32 %v3547, 0.0
      %v3564 = vmax.f32 %v3548, 0.0
      %3565 = vrot.lane.b32.xlu0 %v2009, 16
      %v3566 = vpop.permute.xlu0 %3565
      %3567 = vrot.lane.b32.xlu0 %v2012, 16
      %v3568 = vpop.permute.xlu0 %3567
      %3569 = vrot.lane.b32.xlu0 %v2015, 16
      %v3570 = vpop.permute.xlu0 %3569
      %3571 = vrot.lane.b32.xlu0 %v2018, 16
      %v3572 = vpop.permute.xlu0 %3571
      %3573 = vrot.lane.b32.xlu0 %v2021, 16
      %v3574 = vpop.permute.xlu0 %3573
      %3575 = vrot.lane.b32.xlu0 %v2024, 16
      %v3576 = vpop.permute.xlu0 %3575
      %3577 = vrot.lane.b32.xlu0 %v2027, 16
      %v3578 = vpop.permute.xlu0 %3577
      %3579 = vrot.lane.b32.xlu0 %v2030, 16
      %v3580 = vpop.permute.xlu0 %3579
      %3581 = vrot.lane.b32.xlu0 %v2033, 16
      %v3582 = vpop.permute.xlu0 %3581
      %3583 = vrot.lane.b32.xlu0 %v2036, 16
      %v3584 = vpop.permute.xlu0 %3583
      %3585 = vrot.lane.b32.xlu0 %v2039, 16
      %v3586 = vpop.permute.xlu0 %3585
      %3587 = vrot.lane.b32.xlu0 %v2042, 16
      %v3588 = vpop.permute.xlu0 %3587
      %3589 = vrot.lane.b32.xlu0 %v2045, 16
      %v3590 = vpop.permute.xlu0 %3589
      %3591 = vrot.lane.b32.xlu0 %v2048, 16
      %v3592 = vpop.permute.xlu0 %3591
      %3593 = vrot.lane.b32.xlu0 %v2051, 16
      %v3594 = vpop.permute.xlu0 %3593
      %3595 = vrot.lane.b32.xlu0 %v2054, 16
      %v3596 = vpop.permute.xlu0 %3595
      %vm3613 = vcmask 130048
      %v3614 = vsel %vm3613, %v3549, %v3566
      %v3615 = vsel %vm3613, %v3550, %v3568
      %v3616 = vsel %vm3613, %v3551, %v3570
      %v3617 = vsel %vm3613, %v3552, %v3572
      %v3618 = vsel %vm3613, %v3553, %v3574
      %v3619 = vsel %vm3613, %v3554, %v3576
      %v3620 = vsel %vm3613, %v3555, %v3578
      %v3621 = vsel %vm3613, %v3556, %v3580
      %v3622 = vsel %vm3613, %v3557, %v3582
      %v3623 = vsel %vm3613, %v3558, %v3584
      %v3624 = vsel %vm3613, %v3559, %v3586
      %v3625 = vsel %vm3613, %v3560, %v3588
      %v3626 = vsel %vm3613, %v3561, %v3590
      %v3627 = vsel %vm3613, %v3562, %v3592
      %v3628 = vsel %vm3613, %v3563, %v3594
      %v3629 = vsel %vm3613, %v3564, %v3596
      %v3630 = vpack.c.bf16 %v3615, %v3614
      %v3631 = vpack.c.bf16 %v3617, %v3616
      %v3632 = vpack.c.bf16 %v3619, %v3618
      %v3633 = vpack.c.bf16 %v3621, %v3620
      %v3634 = vpack.c.bf16 %v3623, %v3622
      %v3635 = vpack.c.bf16 %v3625, %v3624
      %v3636 = vpack.c.bf16 %v3627, %v3626
      %v3637 = vpack.c.bf16 %v3629, %v3628
      %v3638 = vld [vmem:[%s4] sm:$0xf]
      %v3639 = vld [vmem:[%s4 + $0x4] sm:$0xf]
      %v3640 = vld [vmem:[%s4 + $0x8] sm:$0xf]
      %v3641 = vld [vmem:[%s4 + $0xc] sm:$0xf]
      %v3642 = vld [vmem:[%s4 + $0x10] sm:$0xf]
      %v3643 = vld [vmem:[%s5 + $0x4] sm:$0x1]
      %v3645 = vlaneseq
      %v3646 = vshrl.u32 %v3645, 7
      %v3647 = vsub.s32 0, %v3646
      %v3648 = vrot.slane %v3643, %v3647
      %v3655 = vunpack.c.l.b16 %v3638
      %v3656 = vunpack.c.l.b16 %v3639
      %v3657 = vunpack.c.l.b16 %v3640
      %v3658 = vunpack.c.l.b16 %v3641
      %v3659 = vunpack.c.l.b16 %v3642
      %v3660 = vpack.c.b16 %v3656, %v3655
      %v3661 = vpack.c.b16 %v3658, %v3657
      %v3662 = vpack.c.b16 %v3659, %v3659
      %v3666 = vsel %vm868, %v3630, 0
      %v3669 = vsel %vm868, %v3631, 0
      %v3672 = vsel %vm868, %v3632, 0
      %v3675 = vsel %vm868, %v3633, 0
      %v3678 = vsel %vm868, %v3634, 0
      %v3681 = vsel %vm868, %v3635, 0
      %v3684 = vsel %vm868, %v3636, 0
      %v3687 = vsel %vm868, %v3637, 0
      %v3690 = vsel %vm421, %v3662, 0
      %3692 = vmatprep.subr.bf16.mxu0 0
      %3693 = vmatpush1.bf16.msra.mxu0 %v3660
      %3694 = vmatprep.subr.bf16.mxu0 0
      %3695 = vmatpush1.bf16.msra.mxu0 %v3661
      %3696 = vmatprep.subr.bf16.mxu0 0
      %3697 = vmatpush1.bf16.msra.mxu0 %v3690
      %3698 = vmatprep.subr.bf16.mxu0 0
      %3699 = vmatpush1.bf16.msra.mxu0 0
      %3700 = vmatprep.subr.bf16.mxu0 0
      %3701 = vmatpush1.bf16.msra.mxu0 0
      %3702 = vmatprep.subr.bf16.mxu0 0
      %3703 = vmatpush1.bf16.msra.mxu0 0
      %3704 = vmatprep.subr.bf16.mxu0 0
      %3705 = vmatpush1.bf16.msra.mxu0 0
      %3706 = vmatprep.subr.bf16.mxu0 0
      %3707 = vmatpush1.bf16.msra.mxu0 0
      %3708 = vmatprep.subr.bf16.mxu0 0
      %3709 = vmatpush1.bf16.msra.mxu0 0
      %3710 = vmatprep.subr.bf16.mxu0 0
      %3711 = vmatpush1.bf16.msra.mxu0 0
      %3712 = vmatprep.subr.bf16.mxu0 0
      %3713 = vmatpush1.bf16.msra.mxu0 0
      %3714 = vmatprep.subr.bf16.mxu0 0
      %3715 = vmatpush1.bf16.msra.mxu0 0
      %3716 = vmatprep.subr.bf16.mxu0 0
      %3717 = vmatpush1.bf16.msra.mxu0 0
      %3718 = vmatprep.subr.bf16.mxu0 0
      %3719 = vmatpush1.bf16.msra.mxu0 0
      %3720 = vmatprep.subr.bf16.mxu0 0
      %3721 = vmatpush1.bf16.msra.mxu0 0
      %3722 = vmatprep.subr.bf16.mxu0 0
      %3723 = vmatpush1.bf16.msra.mxu0 0
      %3724 = vmatprep.mubr.bf16.mxu0 0
      %3725 = vmatmul.mubr.bf16.gmra.mrb[0].mxu0 %v3666
      %v3726 = vpop.f32.mrb[0].mxu0
      %v3727 = vadd.f32 %v3648, %v3726
      %v3728 = vpop.f32.mrb[0].mxu0
      %v3729 = vpop.f32.mrb[0].mxu0
      %v3730 = vadd.f32 %v3648, %v3729
      %v3731 = vpop.f32.mrb[0].mxu0
      %3732 = vmatprep.mubr.bf16.mxu0 0
      %3733 = vmatmul.mubr.bf16.gmra.mrb[0].mxu0 %v3669
      %v3734 = vpop.f32.mrb[0].mxu0
      %v3735 = vadd.f32 %v3648, %v3734
      %v3736 = vpop.f32.mrb[0].mxu0
      %v3737 = vpop.f32.mrb[0].mxu0
      %v3738 = vadd.f32 %v3648, %v3737
      %v3739 = vpop.f32.mrb[0].mxu0
      %3740 = vmatprep.mubr.bf16.mxu0 0
      %3741 = vmatmul.mubr.bf16.gmra.mrb[0].mxu0 %v3672
      %v3742 = vpop.f32.mrb[0].mxu0
      %v3743 = vadd.f32 %v3648, %v3742
      %v3744 = vpop.f32.mrb[0].mxu0
      %v3745 = vpop.f32.mrb[0].mxu0
      %v3746 = vadd.f32 %v3648, %v3745
      %v3747 = vpop.f32.mrb[0].mxu0
      %3748 = vmatprep.mubr.bf16.mxu0 0
      %3749 = vmatmul.mubr.bf16.gmra.mrb[0].mxu0 %v3675
      %v3750 = vpop.f32.mrb[0].mxu0
      %v3751 = vadd.f32 %v3648, %v3750
      %v3752 = vpop.f32.mrb[0].mxu0
      %v3753 = vpop.f32.mrb[0].mxu0
      %v3754 = vadd.f32 %v3648, %v3753
      %v3755 = vpop.f32.mrb[0].mxu0
      %3756 = vmatprep.mubr.bf16.mxu0 0
      %3757 = vmatmul.mubr.bf16.gmra.mrb[0].mxu0 %v3678
      %v3758 = vpop.f32.mrb[0].mxu0
      %v3759 = vadd.f32 %v3648, %v3758
      %v3760 = vpop.f32.mrb[0].mxu0
      %v3761 = vpop.f32.mrb[0].mxu0
      %v3762 = vadd.f32 %v3648, %v3761
      %v3763 = vpop.f32.mrb[0].mxu0
      %3764 = vmatprep.mubr.bf16.mxu0 0
      %3765 = vmatmul.mubr.bf16.gmra.mrb[0].mxu0 %v3681
      %v3766 = vpop.f32.mrb[0].mxu0
      %v3767 = vadd.f32 %v3648, %v3766
      %v3768 = vpop.f32.mrb[0].mxu0
      %v3769 = vpop.f32.mrb[0].mxu0
      %v3770 = vadd.f32 %v3648, %v3769
      %v3771 = vpop.f32.mrb[0].mxu0
      %3772 = vmatprep.mubr.bf16.mxu0 0
      %3773 = vmatmul.mubr.bf16.gmra.mrb[0].mxu0 %v3684
      %v3774 = vpop.f32.mrb[0].mxu0
      %v3775 = vadd.f32 %v3648, %v3774
      %v3776 = vpop.f32.mrb[0].mxu0
      %v3777 = vpop.f32.mrb[0].mxu0
      %v3778 = vadd.f32 %v3648, %v3777
      %v3779 = vpop.f32.mrb[0].mxu0
      %3780 = vmatprep.mubr.bf16.mxu0 0
      %3781 = vmatmul.mubr.bf16.gmra.mrb[0].mxu0 %v3687
      %v3782 = vpop.f32.mrb[0].mxu0
      %v3783 = vadd.f32 %v3648, %v3782
      %v3784 = vpop.f32.mrb[0].mxu0
      %v3785 = vpop.f32.mrb[0].mxu0
      %v3786 = vadd.f32 %v3648, %v3785
      %v3787 = vpop.f32.mrb[0].mxu0
      %3788 = vdwg.mxu0
      %v3789 = vmax.f32 %v3727, 0.0
      %v3790 = vmax.f32 %v3730, 0.0
      %v3791 = vmax.f32 %v3735, 0.0
      %v3792 = vmax.f32 %v3738, 0.0
      %v3793 = vmax.f32 %v3743, 0.0
      %v3794 = vmax.f32 %v3746, 0.0
      %v3795 = vmax.f32 %v3751, 0.0
      %v3796 = vmax.f32 %v3754, 0.0
      %v3797 = vmax.f32 %v3759, 0.0
      %v3798 = vmax.f32 %v3762, 0.0
      %v3799 = vmax.f32 %v3767, 0.0
      %v3800 = vmax.f32 %v3770, 0.0
      %v3801 = vmax.f32 %v3775, 0.0
      %v3802 = vmax.f32 %v3778, 0.0
      %v3803 = vmax.f32 %v3783, 0.0
      %v3804 = vmax.f32 %v3786, 0.0
      %3805 = vst [vmem:[%s253] sm:$0xff] %v3789
      %3806 = vst [vmem:[%s253 + $0x8] sm:$0xff] %v3790
      %3807 = vst [vmem:[%s253 + $0x10] sm:$0xff] %v3791
      %3808 = vst [vmem:[%s253 + $0x18] sm:$0xff] %v3792
      %3809 = vst [vmem:[%s253 + $0x20] sm:$0xff] %v3793
      %3810 = vst [vmem:[%s253 + $0x28] sm:$0xff] %v3794
      %3811 = vst [vmem:[%s253 + $0x30] sm:$0xff] %v3795
      %3812 = vst [vmem:[%s253 + $0x38] sm:$0xff] %v3796
      %3813 = vst [vmem:[%s253 + $0x40] sm:$0xff] %v3797
      %3814 = vst [vmem:[%s253 + $0x48] sm:$0xff] %v3798
      %3815 = vst [vmem:[%s253 + $0x50] sm:$0xff] %v3799
      %3816 = vst [vmem:[%s253 + $0x58] sm:$0xff] %v3800
      %3817 = vst [vmem:[%s253 + $0x60] sm:$0xff] %v3801
      %3818 = vst [vmem:[%s253 + $0x68] sm:$0xff] %v3802
      %3819 = vst [vmem:[%s253 + $0x70] sm:$0xff] %v3803
      %3820 = vst [vmem:[%s253 + $0x78] sm:$0xff] %v3804
      %s3821 = smul.u32 16, %s17
      %p3822 = scmp.lt.s32.totalorder %s3821, 31
      %s3823 = scalar_select %p3822, %s3821, 31
      %s3824 = smul.addr %s3823, 8
      %s3825 = scalar_lea.vmem %s6, %s3824
      // Predicated region
      $region45: #{_lambda_.1} parent=43 // pred_check
        %p3826 = pneg %p166
      $region46: #{_lambda_.1} parent=43 // pred_check_branch
        %3828 = sbr.rel (%p3826) target = $region48
      $region47: #{_lambda_.1} parent=43 // pred_region
        %s3829 = smul.u32 16, %s17
      $region48: #{_lambda_.1} parent=43 // pred_fallthru
        _
    $region44: #{_lambda_.1} parent=5 // pred_fallthru
      _
    %p3830 = scmp.le.s32.totalorder 2, %s12
    // Predicated region
    $region49: #{_lambda_.1} parent=5 // pred_check
      %p3831 = pneg %p3830
    $region50: #{_lambda_.1} parent=5 // pred_check_branch
      %3833 = sbr.rel (%p3831) target = $region52
    $region51: #{_lambda_.1} parent=5 // pred_region
      %s3834 = ssub.s32 %s12, 2
      // Predicated region
      $region53: #{_lambda_.1} parent=51 // pred_check
        %p3835 = pneg %p172
      $region54: #{_lambda_.1} parent=51 // pred_check_branch
        %3837 = sbr.rel (%p3835) target = $region56
      $region55: #{_lambda_.1} parent=51 // pred_region
        %s3838 = smul.u32 16, %s18
        %p3839 = scmp.lt.s32.totalorder %s3838, 31
        %s3840 = scalar_select %p3839, %s3838, 31
        %s3841 = smul.addr %s3840, 8
        %s3842 = scalar_lea.vmem %s6, %s3841
      $region56: #{_lambda_.1} parent=51 // pred_fallthru
        _
    $region52: #{_lambda_.1} parent=5 // pred_fallthru
      _
  $region6: #{_lambda_.1} parent=0 // loop_footer
    %s16 = sadd.s32 1, %s12
  $region7: #{_lambda_.1} parent=0 // loop_footer_branch
    %11 = sbr.rel target = $region3
  $region8: #{_lambda_.1} parent=0 // loop_exit
    _

</llo_original>
